<compile_context>
chip_gen: v7x
topology: tpu7x:2x2x1
jax: 0.10.0
libtpu: 0.0.40
codegen_flags: <defaults>
</compile_context>

<pallas_src>
import functools

import jax
import jax.numpy as jnp
from jax import lax
from jax.experimental import pallas as pl
from jax.experimental.pallas import tpu as pltpu


# ----------------------------------------------------------------------------
# helpers
# ----------------------------------------------------------------------------
def _round_up(x, m):
    return (x + m - 1) // m * m


def _divisor_at_most(n, cap):
    for t in range(min(n, cap), 0, -1):
        if n % t == 0:
            return t
    return 1


def _build_banded_rhs(wt, W, Lp):
    """Fold the kw taps (and W zero-padding) into one banded GEMM rhs.

    wt: (3, 3, 3, Cin, Cout), taps ordered (kd, kh, kw).
    Returns (9*Lp, W*Cout):  rows are (kd*3+kh)*Lp + wp*Cin + ci  (wp = input
    width, lane index of the activation tile), cols are w*Cout + co.
    """
    _, _, _, Cin, Cout = wt.shape
    # band[kw, wp, w] == 1 iff input width wp feeds output width w via tap kw.
    band = (jnp.arange(W)[None, :, None] - jnp.arange(W)[None, None, :] + 1
            == jnp.arange(3)[:, None, None]).astype(wt.dtype)        # (3, W, W)
    rhs = jnp.einsum("kpw,dhkio->dhpiwo", band, wt)          # (3,3,W,Cin,W,Cout)
    rhs = rhs.reshape(9, W * Cin, W * Cout)
    rhs = jnp.pad(rhs, ((0, 0), (0, Lp - W * Cin), (0, 0)))
    return rhs.reshape(9 * Lp, W * Cout)


# ----------------------------------------------------------------------------
# Pallas kernel 1: 3x3x3 "same" conv (no bias) + fused BatchNorm statistics.
# One (batch, depth-tile) per grid step; lane axis = W*C (dense).
# ----------------------------------------------------------------------------
def _conv3d_bn_stats_kernel(x_mid_ref, x_lo_ref, x_hi_ref, rhs_ref,
                            o_ref, stats_ref, xpad_ref,
                            *, Td, H, W, Cin, Cout, Lp, D):
    WCin = W * Cin
    WCo = W * Cout
    d0 = pl.program_id(1) * Td

    # In-kernel zero padding: halo rows / planes live only in VMEM scratch.
    xpad_ref[...] = jnp.zeros((Td + 2, H + 2, Lp), jnp.float32)
    xpad_ref[1:Td + 1, 1:H + 1, 0:WCin] = x_mid_ref[0]

    @pl.when(d0 > 0)
    def _():
        xpad_ref[0, 1:H + 1, 0:WCin] = x_lo_ref[0, 0]

    @pl.when(d0 + Td < D)
    def _():
        xpad_ref[Td + 1, 1:H + 1, 0:WCin] = x_hi_ref[0, 0]

    # 9 fused MXU matmuls (one per (kd, kh)); the kw taps and the W-boundary
    # zeroing are folded into the banded rhs.  Accumulator is (Td*H, W*Cout):
    # lane-dense and only a handful of vregs.
    res = jnp.zeros((Td * H, WCo), jnp.float32)
    for kd in range(3):
        for kh in range(3):
            t = kd * 3 + kh
            patch = xpad_ref[kd:kd + Td, kh:kh + H, :].reshape(Td * H, Lp)
            res = res + jnp.dot(patch, rhs_ref[t * Lp:(t + 1) * Lp, :],
                                preferred_element_type=jnp.float32)

    o_ref[0] = res.reshape(Td, H, WCo)

    # Fused BatchNorm statistics: per-block centered mean / M2 for every
    # (w, cout) lane; combined across blocks in the wrapper (Chan's formula).
    mean_b = jnp.mean(res, axis=0, keepdims=True)                  # (1, W*Cout)
    m2_b = jnp.sum(jnp.square(res - mean_b), axis=0, keepdims=True)
    stats_ref[0, 0] = jnp.concatenate(
        [mean_b, m2_b, jnp.zeros((6, WCo), jnp.float32)], axis=0)


# ----------------------------------------------------------------------------
# Pallas kernel 2: tiled, lane-dense scale*x + shift followed by ReLU
# (the BatchNorm normalize step with the stats already folded into scale/shift)
# ----------------------------------------------------------------------------
def _scale_shift_relu_kernel(x_ref, scale_ref, shift_ref, o_ref):
    o_ref[...] = jnp.maximum(x_ref[...] * scale_ref[...] + shift_ref[...], 0.0)


# ----------------------------------------------------------------------------
# Conv3d(3x3x3, pad=1, no bias) + BatchNorm3d (batch stats) + ReLU
# x layout: (B, D, H, W*Cin) channels-minor, lane-flattened.
# ----------------------------------------------------------------------------
def conv_bn_relu(x, wt, gamma, beta, *, W, eps=1e-5, d_tile=None):
    B, D, H, WCin = x.shape
    Cin, Cout = wt.shape[3], wt.shape[4]
    assert WCin == W * Cin
    WCo = W * Cout
    Lp = _round_up(WCin, 128)
    Td = d_tile if d_tile is not None else _divisor_at_most(D, 2)
    n_dt = D // Td

    rhs = _build_banded_rhs(wt, W, Lp)            # (9*Lp, W*Cout), lane-dense

    kernel = functools.partial(_conv3d_bn_stats_kernel, Td=Td, H=H, W=W,
                               Cin=Cin, Cout=Cout, Lp=Lp, D=D)
    y, stats = pl.pallas_call(
        kernel,
        out_shape=(jax.ShapeDtypeStruct((B, D, H, WCo), jnp.float32),
                   jax.ShapeDtypeStruct((B, n_dt, 8, WCo), jnp.float32)),
        grid_spec=pltpu.PrefetchScalarGridSpec(
            num_scalar_prefetch=0,
            grid=(B, n_dt),
            in_specs=[
                # depth tile + 1-plane halos via clamped index_maps
                pl.BlockSpec((1, Td, H, WCin), lambda b, i: (b, i, 0, 0)),
                pl.BlockSpec((1, 1, H, WCin),
                             lambda b, i: (b, jnp.maximum(i * Td - 1, 0), 0, 0)),
                pl.BlockSpec((1, 1, H, WCin),
                             lambda b, i: (b, jnp.minimum(i * Td + Td, D - 1),
                                           0, 0)),
                pl.BlockSpec((9 * Lp, WCo), lambda b, i: (0, 0)),
            ],
            out_specs=[
                pl.BlockSpec((1, Td, H, WCo), lambda b, i: (b, i, 0, 0)),
                pl.BlockSpec((1, 1, 8, WCo), lambda b, i: (b, i, 0, 0)),
            ],
            scratch_shapes=[pltpu.VMEM((Td + 2, H + 2, Lp), jnp.float32)],
        ),
        compiler_params=pltpu.CompilerParams(
            dimension_semantics=("parallel", "parallel"),
            vmem_limit_bytes=48 * 1024 * 1024),
    )(x, x, x, rhs)

    # Combine per-block centered stats -> global batch mean / biased variance.
    n_g = float(Td * H)                     # samples per (b, d-tile, w) group
    N = float(B * D * H * W)
    mean_g = stats[:, :, 0, :].reshape(B, n_dt, W, Cout)
    m2_g = stats[:, :, 1, :].reshape(B, n_dt, W, Cout)
    mean = jnp.sum(mean_g, axis=(0, 1, 2)) * (n_g / N)                # (Cout,)
    m2 = (jnp.sum(m2_g, axis=(0, 1, 2))
          + n_g * jnp.sum(jnp.square(mean_g - mean), axis=(0, 1, 2)))
    var = m2 / N                                                      # biased
    scale = gamma * lax.rsqrt(var + eps)
    shift = beta - mean * scale
    scale_l = jnp.tile(scale, W).reshape(1, 1, 1, WCo)
    shift_l = jnp.tile(shift, W).reshape(1, 1, 1, WCo)

    return pl.pallas_call(
        _scale_shift_relu_kernel,
        out_shape=jax.ShapeDtypeStruct((B, D, H, WCo), jnp.float32),
        grid_spec=pltpu.PrefetchScalarGridSpec(
            num_scalar_prefetch=0,
            grid=(B, n_dt),
            in_specs=[
                pl.BlockSpec((1, Td, H, WCo), lambda b, i: (b, i, 0, 0)),
                pl.BlockSpec((1, 1, 1, WCo), lambda b, i: (0, 0, 0, 0)),
                pl.BlockSpec((1, 1, 1, WCo), lambda b, i: (0, 0, 0, 0)),
            ],
            out_specs=pl.BlockSpec((1, Td, H, WCo), lambda b, i: (b, i, 0, 0)),
        ),
        compiler_params=pltpu.CompilerParams(
            dimension_semantics=("parallel", "parallel"),
            vmem_limit_bytes=48 * 1024 * 1024),
    )(y, scale_l, shift_l)


# ----------------------------------------------------------------------------
# Glue: nearest interpolation (PyTorch 'nearest': src = floor(dst*in/out)).
# ----------------------------------------------------------------------------
def _upsample_nearest_int(x, sd, sh, sw):
    B, C, D, H, W = x.shape
    x = jnp.broadcast_to(x[:, :, :, None, :, None, :, None],
                         (B, C, D, sd, H, sh, W, sw))
    return x.reshape(B, C, D * sd, H * sh, W * sw)


def _nearest_resize(x, size):
    B, C, D, H, W = x.shape
    Do, Ho, Wo = size
    if (D, H, W) == (Do, Ho, Wo):
        return x
    if Do % D == 0 and Ho % H == 0 and Wo % W == 0:
        return _upsample_nearest_int(x, Do // D, Ho // H, Wo // W)
    x = jnp.take(x, (jnp.arange(Do) * D) // Do, axis=2)
    x = jnp.take(x, (jnp.arange(Ho) * H) // Ho, axis=3)
    return jnp.take(x, (jnp.arange(Wo) * W) // Wo, axis=4)


# ----------------------------------------------------------------------------
# Block3d forward
# ----------------------------------------------------------------------------
def block3d_forward(params, x, skip=None, depth_scaling=1, spatial_scaling=2):
    # x, skip: NCDHW float32 (PyTorch convention).
    # TODO(synk): fold the nearest-upsample / skip-resize / concat indexing into
    # the conv kernel's input index_map (scalar prefetch) so the upsampled
    # activation never has to be materialized in HBM.
    x = _upsample_nearest_int(x, depth_scaling, spatial_scaling, spatial_scaling)
    if skip is not None:
        skip = _nearest_resize(skip, x.shape[2:])
        x = jnp.concatenate([x, skip], axis=1)        # attention1 = Identity
    B, C, D, H, W = x.shape
    # NCDHW -> channels-minor, lane-flattened (B, D, H, W*C)
    x = jnp.transpose(x, (0, 2, 3, 4, 1)).reshape(B, D, H, W * C)
    x = conv_bn_relu(x, params["w1"], params["gamma1"], params["beta1"], W=W)
    x = conv_bn_relu(x, params["w2"], params["gamma2"], params["beta2"], W=W)
    Cout = params["w2"].shape[-1]
    x = x.reshape(B, D, H, W, Cout)
    return jnp.transpose(x, (0, 4, 1, 2, 3))          # attention2 = Identity


def init_params(key, in_channel, skip_channel, out_channel):
    k1, k2, k3, k4 = jax.random.split(key, 4)
    c1_in = in_channel + skip_channel
    # Conv weights stored as (kd, kh, kw, Cin, Cout).
    w1 = jax.random.normal(k1, (3, 3, 3, c1_in, out_channel), jnp.float32) * 0.1
    w2 = jax.random.normal(k2, (3, 3, 3, out_channel, out_channel),
                           jnp.float32) * 0.1
    return dict(
        w1=w1, w2=w2,
        gamma1=1.0 + 0.1 * jax.random.normal(k3, (out_channel,), jnp.float32),
        beta1=jnp.zeros((out_channel,), jnp.float32),
        gamma2=1.0 + 0.1 * jax.random.normal(k4, (out_channel,), jnp.float32),
        beta2=jnp.zeros((out_channel,), jnp.float32),
    )


# ----------------------------------------------------------------------------
# Pure-XLA reference (conv_general_dilated + batch-stats BN + ReLU)
# ----------------------------------------------------------------------------
def _reference_forward(params, x, skip, depth_scaling, spatial_scaling):
    out_size = (x.shape[2] * depth_scaling,
                x.shape[3] * spatial_scaling,
                x.shape[4] * spatial_scaling)
    x = _nearest_resize(x, out_size)
    if skip is not None:
        skip = _nearest_resize(skip, out_size)
        x = jnp.concatenate([x, skip], axis=1)

    def conv_bn_relu_ref(x, wt, gamma, beta):
        w = jnp.transpose(wt, (4, 3, 0, 1, 2))         # (Cout, Cin, kd, kh, kw)
        y = lax.conv_general_dilated(
            x, w, window_strides=(1, 1, 1),
            padding=((1, 1), (1, 1), (1, 1)),
            dimension_numbers=("NCDHW", "OIDHW", "NCDHW"))
        mean = jnp.mean(y, axis=(0, 2, 3, 4), keepdims=True)
        var = jnp.mean(jnp.square(y - mean), axis=(0, 2, 3, 4), keepdims=True)
        y = (y - mean) * lax.rsqrt(var + 1e-5)
        y = y * gamma.reshape(1, -1, 1, 1, 1) + beta.reshape(1, -1, 1, 1, 1)
        return jnp.maximum(y, 0.0)

    x = conv_bn_relu_ref(x, params["w1"], params["gamma1"], params["beta1"])
    x = conv_bn_relu_ref(x, params["w2"], params["gamma2"], params["beta2"])
    return x


if __name__ == "__main__":
    key = jax.random.PRNGKey(0)
    kx, ks, kp = jax.random.split(key, 3)

    in_channel, skip_channel, out_channel = 8, 8, 16
    B, D, H, W = 2, 4, 8, 8                       # x spatial (pre-upsample)
    depth_scaling, spatial_scaling = 1, 2

    x = jax.random.normal(kx, (B, in_channel, D, H, W), jnp.float32)
    # skip comes from a higher-resolution encoder level
    skip = jax.random.normal(ks, (B, skip_channel, D, 2 * H, 2 * W), jnp.float32)
    params = init_params(kp, in_channel, skip_channel, out_channel)

    fwd = jax.jit(block3d_forward,
                  static_argnames=("depth_scaling", "spatial_scaling"))
    out = fwd(params, x, skip, depth_scaling=depth_scaling,
              spatial_scaling=spatial_scaling)
    out = jax.block_until_ready(out)

    assert out.shape == (B, out_channel, D * depth_scaling,
                         H * spatial_scaling, W * spatial_scaling), out.shape
    assert bool(jnp.all(jnp.isfinite(out)))

    ref = _reference_forward(params, x, skip, depth_scaling, spatial_scaling)
    assert bool(jnp.allclose(out, ref, atol=2e-3, rtol=2e-3)), float(
        jnp.max(jnp.abs(out - ref)))

    print("KERNEL_OK")
</pallas_src>

<mosaic_0001>
module attributes {stable_mosaic.version = 11 : i64} {
  func.func @_conv3d_bn_stats_kernel(%arg0: i32, %arg1: i32, %arg2: memref<1x2x16x256xf32, #tpu.memory_space<vmem>>, %arg3: memref<1x1x16x256xf32, #tpu.memory_space<vmem>>, %arg4: memref<1x1x16x256xf32, #tpu.memory_space<vmem>>, %arg5: memref<2304x256xf32, #tpu.memory_space<vmem>>, %arg6: memref<1x2x16x256xf32, #tpu.memory_space<vmem>>, %arg7: memref<1x1x8x256xf32, #tpu.memory_space<vmem>>, %arg8: memref<4x18x256xf32, #tpu.memory_space<vmem>>) attributes {dimension_semantics = [#tpu.dimension_semantics<parallel>, #tpu.dimension_semantics<parallel>], iteration_bounds = array<i64: 2, 2>, scalar_prefetch = 0 : i64, scratch_operands = 1 : i64, tpu.core_type = #tpu.core_type<tc>, window_params = [{transform_indices = @transform_0, window_bounds = array<i64: 1, 2, 16, 256>}, {transform_indices = @transform_1, window_bounds = array<i64: 1, 1, 16, 256>}, {transform_indices = @transform_2, window_bounds = array<i64: 1, 1, 16, 256>}, {pipeline_mode = #tpu.pipeline_mode<synchronous>, transform_indices = @transform_3, window_bounds = array<i64: 2304, 256>}, {transform_indices = @transform_4, window_bounds = array<i64: 1, 2, 16, 256>}, {transform_indices = @transform_5, window_bounds = array<i64: 1, 1, 8, 256>}]} {
    %c2_i32 = arith.constant 2 : i32
    %0 = arith.muli %arg1, %c2_i32 : i32
    %cst = arith.constant 0.000000e+00 : f32
    %1 = vector.broadcast %cst : f32 to vector<4x18x256xf32>
    %c0 = arith.constant 0 : index
    %c0_0 = arith.constant 0 : index
    %c0_1 = arith.constant 0 : index
    %2 = vector.load %arg8[%c0, %c0_0, %c0_1] : memref<4x18x256xf32, #tpu.memory_space<vmem>>, vector<4x18x256xf32>
    tpu.vector_store %arg8[%c0, %c0_0, %c0_1], %1 {strides = array<i32>} : memref<4x18x256xf32, #tpu.memory_space<vmem>>, vector<4x18x256xf32>,
    %c0_2 = arith.constant 0 : index
    %c0_3 = arith.constant 0 : index
    %c0_4 = arith.constant 0 : index
    %c0_5 = arith.constant 0 : index
    %3 = vector.load %arg2[%c0_2, %c0_3, %c0_4, %c0_5] : memref<1x2x16x256xf32, #tpu.memory_space<vmem>>, vector<1x2x16x256xf32>
    %4 = vector.shape_cast %3 : vector<1x2x16x256xf32> to vector<2x16x256xf32>
    %c1 = arith.constant 1 : index
    %c1_6 = arith.constant 1 : index
    %c0_7 = arith.constant 0 : index
    %5 = vector.load %arg8[%c1, %c1_6, %c0_7] : memref<4x18x256xf32, #tpu.memory_space<vmem>>, vector<2x16x256xf32>
    tpu.vector_store %arg8[%c1, %c1_6, %c0_7], %4 {strides = array<i32>} : memref<4x18x256xf32, #tpu.memory_space<vmem>>, vector<2x16x256xf32>,
    %c0_i32 = arith.constant 0 : i32
    %6 = arith.cmpi sgt, %0, %c0_i32 : i32
    %7 = arith.extui %6 : i1 to i32
    %c0_i32_8 = arith.constant 0 : i32
    %8 = arith.cmpi ne, %7, %c0_i32_8 : i32
    scf.if %8 {
      %c0_69 = arith.constant 0 : index
      %c0_70 = arith.constant 0 : index
      %c0_71 = arith.constant 0 : index
      %c0_72 = arith.constant 0 : index
      %77 = vector.load %arg3[%c0_69, %c0_70, %c0_71, %c0_72] : memref<1x1x16x256xf32, #tpu.memory_space<vmem>>, vector<1x1x16x256xf32>
      %78 = vector.shape_cast %77 : vector<1x1x16x256xf32> to vector<16x256xf32>
      %c0_73 = arith.constant 0 : index
      %c1_74 = arith.constant 1 : index
      %c0_75 = arith.constant 0 : index
      %79 = vector.load %arg8[%c0_73, %c1_74, %c0_75] : memref<4x18x256xf32, #tpu.memory_space<vmem>>, vector<1x16x256xf32>
      %80 = vector.shape_cast %79 : vector<1x16x256xf32> to vector<16x256xf32>
      %81 = vector.shape_cast %78 : vector<16x256xf32> to vector<1x16x256xf32>
      tpu.vector_store %arg8[%c0_73, %c1_74, %c0_75], %81 {strides = array<i32>} : memref<4x18x256xf32, #tpu.memory_space<vmem>>, vector<1x16x256xf32>,
    } else {
    }
    %c2_i32_9 = arith.constant 2 : i32
    %9 = arith.addi %0, %c2_i32_9 : i32
    %c4_i32 = arith.constant 4 : i32
    %10 = arith.cmpi slt, %9, %c4_i32 : i32
    %11 = arith.extui %10 : i1 to i32
    %c0_i32_10 = arith.constant 0 : i32
    %12 = arith.cmpi ne, %11, %c0_i32_10 : i32
    scf.if %12 {
      %c0_69 = arith.constant 0 : index
      %c0_70 = arith.constant 0 : index
      %c0_71 = arith.constant 0 : index
      %c0_72 = arith.constant 0 : index
      %77 = vector.load %arg4[%c0_69, %c0_70, %c0_71, %c0_72] : memref<1x1x16x256xf32, #tpu.memory_space<vmem>>, vector<1x1x16x256xf32>
      %78 = vector.shape_cast %77 : vector<1x1x16x256xf32> to vector<16x256xf32>
      %c3 = arith.constant 3 : index
      %c1_73 = arith.constant 1 : index
      %c0_74 = arith.constant 0 : index
      %79 = vector.load %arg8[%c3, %c1_73, %c0_74] : memref<4x18x256xf32, #tpu.memory_space<vmem>>, vector<1x16x256xf32>
      %80 = vector.shape_cast %79 : vector<1x16x256xf32> to vector<16x256xf32>
      %81 = vector.shape_cast %78 : vector<16x256xf32> to vector<1x16x256xf32>
      tpu.vector_store %arg8[%c3, %c1_73, %c0_74], %81 {strides = array<i32>} : memref<4x18x256xf32, #tpu.memory_space<vmem>>, vector<1x16x256xf32>,
    } else {
    }
    %cst_11 = arith.constant 0.000000e+00 : f32
    %13 = vector.broadcast %cst_11 : f32 to vector<32x256xf32>
    %c0_12 = arith.constant 0 : index
    %c0_13 = arith.constant 0 : index
    %c0_14 = arith.constant 0 : index
    %14 = vector.load %arg8[%c0_12, %c0_13, %c0_14] : memref<4x18x256xf32, #tpu.memory_space<vmem>>, vector<2x16x256xf32>
    %15 = vector.shape_cast %14 : vector<2x16x256xf32> to vector<32x256xf32>
    %c0_15 = arith.constant 0 : index
    %c0_16 = arith.constant 0 : index
    %16 = vector.load %arg5[%c0_15, %c0_16] : memref<2304x256xf32, #tpu.memory_space<vmem>>, vector<256x256xf32>
    %cst_17 = arith.constant dense<0.000000e+00> : vector<32x256xf32>
    %17 = tpu.matmul %15, %16, %cst_17 {dimension_numbers = #tpu.dot_dimension_numbers<[1], [0], [0], [1], [0, 0, 1, 1], [], []>} : vector<32x256xf32>, vector<256x256xf32>, vector<32x256xf32> -> vector<32x256xf32>
    %18 = arith.addf %13, %17 : vector<32x256xf32>
    %c0_18 = arith.constant 0 : index
    %c1_19 = arith.constant 1 : index
    %c0_20 = arith.constant 0 : index
    %19 = vector.load %arg8[%c0_18, %c1_19, %c0_20] : memref<4x18x256xf32, #tpu.memory_space<vmem>>, vector<2x16x256xf32>
    %20 = vector.shape_cast %19 : vector<2x16x256xf32> to vector<32x256xf32>
    %c256 = arith.constant 256 : index
    %c0_21 = arith.constant 0 : index
    %21 = vector.load %arg5[%c256, %c0_21] : memref<2304x256xf32, #tpu.memory_space<vmem>>, vector<256x256xf32>
    %cst_22 = arith.constant dense<0.000000e+00> : vector<32x256xf32>
    %22 = tpu.matmul %20, %21, %cst_22 {dimension_numbers = #tpu.dot_dimension_numbers<[1], [0], [0], [1], [0, 0, 1, 1], [], []>} : vector<32x256xf32>, vector<256x256xf32>, vector<32x256xf32> -> vector<32x256xf32>
    %23 = arith.addf %18, %22 : vector<32x256xf32>
    %c0_23 = arith.constant 0 : index
    %c2 = arith.constant 2 : index
    %c0_24 = arith.constant 0 : index
    %24 = vector.load %arg8[%c0_23, %c2, %c0_24] : memref<4x18x256xf32, #tpu.memory_space<vmem>>, vector<2x16x256xf32>
    %25 = vector.shape_cast %24 : vector<2x16x256xf32> to vector<32x256xf32>
    %c512 = arith.constant 512 : index
    %c0_25 = arith.constant 0 : index
    %26 = vector.load %arg5[%c512, %c0_25] : memref<2304x256xf32, #tpu.memory_space<vmem>>, vector<256x256xf32>
    %cst_26 = arith.constant dense<0.000000e+00> : vector<32x256xf32>
    %27 = tpu.matmul %25, %26, %cst_26 {dimension_numbers = #tpu.dot_dimension_numbers<[1], [0], [0], [1], [0, 0, 1, 1], [], []>} : vector<32x256xf32>, vector<256x256xf32>, vector<32x256xf32> -> vector<32x256xf32>
    %28 = arith.addf %23, %27 : vector<32x256xf32>
    %c1_27 = arith.constant 1 : index
    %c0_28 = arith.constant 0 : index
    %c0_29 = arith.constant 0 : index
    %29 = vector.load %arg8[%c1_27, %c0_28, %c0_29] : memref<4x18x256xf32, #tpu.memory_space<vmem>>, vector<2x16x256xf32>
    %30 = vector.shape_cast %29 : vector<2x16x256xf32> to vector<32x256xf32>
    %c768 = arith.constant 768 : index
    %c0_30 = arith.constant 0 : index
    %31 = vector.load %arg5[%c768, %c0_30] : memref<2304x256xf32, #tpu.memory_space<vmem>>, vector<256x256xf32>
    %cst_31 = arith.constant dense<0.000000e+00> : vector<32x256xf32>
    %32 = tpu.matmul %30, %31, %cst_31 {dimension_numbers = #tpu.dot_dimension_numbers<[1], [0], [0], [1], [0, 0, 1, 1], [], []>} : vector<32x256xf32>, vector<256x256xf32>, vector<32x256xf32> -> vector<32x256xf32>
    %33 = arith.addf %28, %32 : vector<32x256xf32>
    %c1_32 = arith.constant 1 : index
    %c1_33 = arith.constant 1 : index
    %c0_34 = arith.constant 0 : index
    %34 = vector.load %arg8[%c1_32, %c1_33, %c0_34] : memref<4x18x256xf32, #tpu.memory_space<vmem>>, vector<2x16x256xf32>
    %35 = vector.shape_cast %34 : vector<2x16x256xf32> to vector<32x256xf32>
    %c1024 = arith.constant 1024 : index
    %c0_35 = arith.constant 0 : index
    %36 = vector.load %arg5[%c1024, %c0_35] : memref<2304x256xf32, #tpu.memory_space<vmem>>, vector<256x256xf32>
    %cst_36 = arith.constant dense<0.000000e+00> : vector<32x256xf32>
    %37 = tpu.matmul %35, %36, %cst_36 {dimension_numbers = #tpu.dot_dimension_numbers<[1], [0], [0], [1], [0, 0, 1, 1], [], []>} : vector<32x256xf32>, vector<256x256xf32>, vector<32x256xf32> -> vector<32x256xf32>
    %38 = arith.addf %33, %37 : vector<32x256xf32>
    %c1_37 = arith.constant 1 : index
    %c2_38 = arith.constant 2 : index
    %c0_39 = arith.constant 0 : index
    %39 = vector.load %arg8[%c1_37, %c2_38, %c0_39] : memref<4x18x256xf32, #tpu.memory_space<vmem>>, vector<2x16x256xf32>
    %40 = vector.shape_cast %39 : vector<2x16x256xf32> to vector<32x256xf32>
    %c1280 = arith.constant 1280 : index
    %c0_40 = arith.constant 0 : index
    %41 = vector.load %arg5[%c1280, %c0_40] : memref<2304x256xf32, #tpu.memory_space<vmem>>, vector<256x256xf32>
    %cst_41 = arith.constant dense<0.000000e+00> : vector<32x256xf32>
    %42 = tpu.matmul %40, %41, %cst_41 {dimension_numbers = #tpu.dot_dimension_numbers<[1], [0], [0], [1], [0, 0, 1, 1], [], []>} : vector<32x256xf32>, vector<256x256xf32>, vector<32x256xf32> -> vector<32x256xf32>
    %43 = arith.addf %38, %42 : vector<32x256xf32>
    %c2_42 = arith.constant 2 : index
    %c0_43 = arith.constant 0 : index
    %c0_44 = arith.constant 0 : index
    %44 = vector.load %arg8[%c2_42, %c0_43, %c0_44] : memref<4x18x256xf32, #tpu.memory_space<vmem>>, vector<2x16x256xf32>
    %45 = vector.shape_cast %44 : vector<2x16x256xf32> to vector<32x256xf32>
    %c1536 = arith.constant 1536 : index
    %c0_45 = arith.constant 0 : index
    %46 = vector.load %arg5[%c1536, %c0_45] : memref<2304x256xf32, #tpu.memory_space<vmem>>, vector<256x256xf32>
    %cst_46 = arith.constant dense<0.000000e+00> : vector<32x256xf32>
    %47 = tpu.matmul %45, %46, %cst_46 {dimension_numbers = #tpu.dot_dimension_numbers<[1], [0], [0], [1], [0, 0, 1, 1], [], []>} : vector<32x256xf32>, vector<256x256xf32>, vector<32x256xf32> -> vector<32x256xf32>
    %48 = arith.addf %43, %47 : vector<32x256xf32>
    %c2_47 = arith.constant 2 : index
    %c1_48 = arith.constant 1 : index
    %c0_49 = arith.constant 0 : index
    %49 = vector.load %arg8[%c2_47, %c1_48, %c0_49] : memref<4x18x256xf32, #tpu.memory_space<vmem>>, vector<2x16x256xf32>
    %50 = vector.shape_cast %49 : vector<2x16x256xf32> to vector<32x256xf32>
    %c1792 = arith.constant 1792 : index
    %c0_50 = arith.constant 0 : index
    %51 = vector.load %arg5[%c1792, %c0_50] : memref<2304x256xf32, #tpu.memory_space<vmem>>, vector<256x256xf32>
    %cst_51 = arith.constant dense<0.000000e+00> : vector<32x256xf32>
    %52 = tpu.matmul %50, %51, %cst_51 {dimension_numbers = #tpu.dot_dimension_numbers<[1], [0], [0], [1], [0, 0, 1, 1], [], []>} : vector<32x256xf32>, vector<256x256xf32>, vector<32x256xf32> -> vector<32x256xf32>
    %53 = arith.addf %48, %52 : vector<32x256xf32>
    %c2_52 = arith.constant 2 : index
    %c2_53 = arith.constant 2 : index
    %c0_54 = arith.constant 0 : index
    %54 = vector.load %arg8[%c2_52, %c2_53, %c0_54] : memref<4x18x256xf32, #tpu.memory_space<vmem>>, vector<2x16x256xf32>
    %55 = vector.shape_cast %54 : vector<2x16x256xf32> to vector<32x256xf32>
    %c2048 = arith.constant 2048 : index
    %c0_55 = arith.constant 0 : index
    %56 = vector.load %arg5[%c2048, %c0_55] : memref<2304x256xf32, #tpu.memory_space<vmem>>, vector<256x256xf32>
    %cst_56 = arith.constant dense<0.000000e+00> : vector<32x256xf32>
    %57 = tpu.matmul %55, %56, %cst_56 {dimension_numbers = #tpu.dot_dimension_numbers<[1], [0], [0], [1], [0, 0, 1, 1], [], []>} : vector<32x256xf32>, vector<256x256xf32>, vector<32x256xf32> -> vector<32x256xf32>
    %58 = arith.addf %53, %57 : vector<32x256xf32>
    %59 = vector.shape_cast %58 : vector<32x256xf32> to vector<2x16x256xf32>
    %c0_57 = arith.constant 0 : index
    %c0_58 = arith.constant 0 : index
    %c0_59 = arith.constant 0 : index
    %c0_60 = arith.constant 0 : index
    %60 = vector.load %arg6[%c0_57, %c0_58, %c0_59, %c0_60] : memref<1x2x16x256xf32, #tpu.memory_space<vmem>>, vector<1x2x16x256xf32>
    %61 = vector.shape_cast %60 : vector<1x2x16x256xf32> to vector<2x16x256xf32>
    %62 = vector.shape_cast %59 : vector<2x16x256xf32> to vector<1x2x16x256xf32>
    tpu.vector_store %arg6[%c0_57, %c0_58, %c0_59, %c0_60], %62 {strides = array<i32>} : memref<1x2x16x256xf32, #tpu.memory_space<vmem>>, vector<1x2x16x256xf32>,
    %cst_61 = arith.constant dense<0.000000e+00> : vector<256xf32>
    %63 = vector.multi_reduction <add>, %58, %cst_61 [0] : vector<32x256xf32> to vector<256xf32>
    %64 = vector.shape_cast %63 : vector<256xf32> to vector<1x256xf32>
    %cst_62 = arith.constant 3.200000e+01 : f32
    %65 = vector.broadcast %cst_62 : f32 to vector<1x256xf32>
    %66 = arith.divf %64, %65 : vector<1x256xf32>
    %67 = vector.broadcast %66 : vector<1x256xf32> to vector<32x256xf32>
    %68 = arith.subf %58, %67 : vector<32x256xf32>
    %69 = arith.mulf %68, %68 : vector<32x256xf32>
    %cst_63 = arith.constant dense<0.000000e+00> : vector<256xf32>
    %70 = vector.multi_reduction <add>, %69, %cst_63 [0] : vector<32x256xf32> to vector<256xf32>
    %71 = vector.shape_cast %70 : vector<256xf32> to vector<1x256xf32>
    %cst_64 = arith.constant 0.000000e+00 : f32
    %72 = vector.broadcast %cst_64 : f32 to vector<6x256xf32>
    %73 = tpu.concatenate %66, %71, %72 in 0 : vector<1x256xf32>, vector<1x256xf32>, vector<6x256xf32> -> vector<8x256xf32>
    %c0_65 = arith.constant 0 : index
    %c0_66 = arith.constant 0 : index
    %c0_67 = arith.constant 0 : index
    %c0_68 = arith.constant 0 : index
    %74 = vector.load %arg7[%c0_65, %c0_66, %c0_67, %c0_68] : memref<1x1x8x256xf32, #tpu.memory_space<vmem>>, vector<1x1x8x256xf32>
    %75 = vector.shape_cast %74 : vector<1x1x8x256xf32> to vector<8x256xf32>
    %76 = vector.shape_cast %73 : vector<8x256xf32> to vector<1x1x8x256xf32>
    tpu.vector_store %arg7[%c0_65, %c0_66, %c0_67, %c0_68], %76 {strides = array<i32>} : memref<1x1x8x256xf32, #tpu.memory_space<vmem>>, vector<1x1x8x256xf32>,
    return
  }
  func.func @transform_0(%arg0: i32, %arg1: i32) -> (i32, i32, i32, i32) {
    %c0_i32 = arith.constant 0 : i32
    %c0_i32_0 = arith.constant 0 : i32
    %c0_i32_1 = arith.constant 0 : i32
    return %arg0, %arg1, %c0_i32, %c0_i32_0 : i32, i32, i32, i32
  }
  func.func @transform_1(%arg0: i32, %arg1: i32) -> (i32, i32, i32, i32) {
    %c2_i32 = arith.constant 2 : i32
    %0 = arith.muli %arg1, %c2_i32 : i32
    %c1_i32 = arith.constant 1 : i32
    %1 = arith.subi %0, %c1_i32 : i32
    %c0_i32 = arith.constant 0 : i32
    %2 = arith.maxsi %1, %c0_i32 : i32
    %c0_i32_0 = arith.constant 0 : i32
    %c0_i32_1 = arith.constant 0 : i32
    %c0_i32_2 = arith.constant 0 : i32
    return %arg0, %2, %c0_i32_0, %c0_i32_1 : i32, i32, i32, i32
  }
  func.func @transform_2(%arg0: i32, %arg1: i32) -> (i32, i32, i32, i32) {
    %c2_i32 = arith.constant 2 : i32
    %0 = arith.muli %arg1, %c2_i32 : i32
    %c2_i32_0 = arith.constant 2 : i32
    %1 = arith.addi %0, %c2_i32_0 : i32
    %c3_i32 = arith.constant 3 : i32
    %2 = arith.minsi %1, %c3_i32 : i32
    %c0_i32 = arith.constant 0 : i32
    %c0_i32_1 = arith.constant 0 : i32
    %c0_i32_2 = arith.constant 0 : i32
    return %arg0, %2, %c0_i32, %c0_i32_1 : i32, i32, i32, i32
  }
  func.func @transform_3(%arg0: i32, %arg1: i32) -> (i32, i32) {
    %c0_i32 = arith.constant 0 : i32
    %c0_i32_0 = arith.constant 0 : i32
    %c0_i32_1 = arith.constant 0 : i32
    return %c0_i32, %c0_i32_0 : i32, i32
  }
  func.func @transform_4(%arg0: i32, %arg1: i32) -> (i32, i32, i32, i32) {
    %c0_i32 = arith.constant 0 : i32
    %c0_i32_0 = arith.constant 0 : i32
    %c0_i32_1 = arith.constant 0 : i32
    return %arg0, %arg1, %c0_i32, %c0_i32_0 : i32, i32, i32, i32
  }
  func.func @transform_5(%arg0: i32, %arg1: i32) -> (i32, i32, i32, i32) {
    %c0_i32 = arith.constant 0 : i32
    %c0_i32_0 = arith.constant 0 : i32
    %c0_i32_1 = arith.constant 0 : i32
    return %arg0, %arg1, %c0_i32, %c0_i32_0 : i32, i32, i32, i32
  }
}

module attributes {stable_mosaic.version = 11 : i64} {
  func.func @_scale_shift_relu_kernel(%arg0: i32, %arg1: i32, %arg2: memref<1x2x16x256xf32, #tpu.memory_space<vmem>>, %arg3: memref<1x1x1x256xf32, #tpu.memory_space<vmem>>, %arg4: memref<1x1x1x256xf32, #tpu.memory_space<vmem>>, %arg5: memref<1x2x16x256xf32, #tpu.memory_space<vmem>>) attributes {dimension_semantics = [#tpu.dimension_semantics<parallel>, #tpu.dimension_semantics<parallel>], iteration_bounds = array<i64: 2, 2>, scalar_prefetch = 0 : i64, scratch_operands = 0 : i64, tpu.core_type = #tpu.core_type<tc>, window_params = [{transform_indices = @transform_0, window_bounds = array<i64: 1, 2, 16, 256>}, {pipeline_mode = #tpu.pipeline_mode<synchronous>, transform_indices = @transform_1, window_bounds = array<i64: 1, 1, 1, 256>}, {pipeline_mode = #tpu.pipeline_mode<synchronous>, transform_indices = @transform_2, window_bounds = array<i64: 1, 1, 1, 256>}, {transform_indices = @transform_3, window_bounds = array<i64: 1, 2, 16, 256>}]} {
    %c0 = arith.constant 0 : index
    %c0_0 = arith.constant 0 : index
    %c0_1 = arith.constant 0 : index
    %c0_2 = arith.constant 0 : index
    %0 = vector.load %arg2[%c0, %c0_0, %c0_1, %c0_2] : memref<1x2x16x256xf32, #tpu.memory_space<vmem>>, vector<1x2x16x256xf32>
    %c0_3 = arith.constant 0 : index
    %c0_4 = arith.constant 0 : index
    %c0_5 = arith.constant 0 : index
    %c0_6 = arith.constant 0 : index
    %1 = vector.load %arg3[%c0_3, %c0_4, %c0_5, %c0_6] : memref<1x1x1x256xf32, #tpu.memory_space<vmem>>, vector<1x1x1x256xf32>
    %2 = vector.broadcast %1 : vector<1x1x1x256xf32> to vector<1x2x16x256xf32>
    %3 = arith.mulf %0, %2 : vector<1x2x16x256xf32>
    %c0_7 = arith.constant 0 : index
    %c0_8 = arith.constant 0 : index
    %c0_9 = arith.constant 0 : index
    %c0_10 = arith.constant 0 : index
    %4 = vector.load %arg4[%c0_7, %c0_8, %c0_9, %c0_10] : memref<1x1x1x256xf32, #tpu.memory_space<vmem>>, vector<1x1x1x256xf32>
    %5 = vector.broadcast %4 : vector<1x1x1x256xf32> to vector<1x2x16x256xf32>
    %6 = arith.addf %3, %5 : vector<1x2x16x256xf32>
    %cst = arith.constant 0.000000e+00 : f32
    %7 = vector.broadcast %cst : f32 to vector<1x2x16x256xf32>
    %8 = arith.maximumf %6, %7 : vector<1x2x16x256xf32>
    %c0_11 = arith.constant 0 : index
    %c0_12 = arith.constant 0 : index
    %c0_13 = arith.constant 0 : index
    %c0_14 = arith.constant 0 : index
    %9 = vector.load %arg5[%c0_11, %c0_12, %c0_13, %c0_14] : memref<1x2x16x256xf32, #tpu.memory_space<vmem>>, vector<1x2x16x256xf32>
    tpu.vector_store %arg5[%c0_11, %c0_12, %c0_13, %c0_14], %8 {strides = array<i32>} : memref<1x2x16x256xf32, #tpu.memory_space<vmem>>, vector<1x2x16x256xf32>,
    return
  }
  func.func @transform_0(%arg0: i32, %arg1: i32) -> (i32, i32, i32, i32) {
    %c0_i32 = arith.constant 0 : i32
    %c0_i32_0 = arith.constant 0 : i32
    %c0_i32_1 = arith.constant 0 : i32
    return %arg0, %arg1, %c0_i32, %c0_i32_0 : i32, i32, i32, i32
  }
  func.func @transform_1(%arg0: i32, %arg1: i32) -> (i32, i32, i32, i32) {
    %c0_i32 = arith.constant 0 : i32
    %c0_i32_0 = arith.constant 0 : i32
    %c0_i32_1 = arith.constant 0 : i32
    %c0_i32_2 = arith.constant 0 : i32
    %c0_i32_3 = arith.constant 0 : i32
    return %c0_i32, %c0_i32_0, %c0_i32_1, %c0_i32_2 : i32, i32, i32, i32
  }
  func.func @transform_2(%arg0: i32, %arg1: i32) -> (i32, i32, i32, i32) {
    %c0_i32 = arith.constant 0 : i32
    %c0_i32_0 = arith.constant 0 : i32
    %c0_i32_1 = arith.constant 0 : i32
    %c0_i32_2 = arith.constant 0 : i32
    %c0_i32_3 = arith.constant 0 : i32
    return %c0_i32, %c0_i32_0, %c0_i32_1, %c0_i32_2 : i32, i32, i32, i32
  }
  func.func @transform_3(%arg0: i32, %arg1: i32) -> (i32, i32, i32, i32) {
    %c0_i32 = arith.constant 0 : i32
    %c0_i32_0 = arith.constant 0 : i32
    %c0_i32_1 = arith.constant 0 : i32
    return %arg0, %arg1, %c0_i32, %c0_i32_0 : i32, i32, i32, i32
  }
}

</mosaic_0001>

<llo_original>
// kernel: tile.24
$region0: #{tile.24}
  %s0 = inlined_call_operand.vmem [shape: f32[16,16], index: 0, kind: input, shape index: {}]
  %s1 = inlined_call_operand.vmem [shape: f32[1,1,1,256], index: 1, kind: output, shape index: {}]
  $region1: #{tile.24} parent=0
    #allocation0 [shape = 'u8[8192]{0}', space=vmem, size = 0x2000, scoped, tag = 'scoped mem for output reshape']
    %s2 = smov 3
    %v3 = vld [vmem:[%s0] ss:$8 sm:%s2]
    %vm4 = vcmask 130048
    %5 = vst.msk [vmem:[#allocation0] ss:$8 sm:$0x3] %vm4, %v3
    %s6 = scalar_lea.vmem %s0, 7
    %s7 = smov 3
    %v8 = vld [vmem:[%s6] ss:$8 sm:%s7]
    %9 = vrot.lane.b32.xlu0 %v8, 112
    %v10 = vpop.permute.xlu0 %9
    %vm11 = vcmask 1048448
    %12 = vst.msk [vmem:[#allocation0] ss:$8 sm:$0x3] %vm11, %v10
    %s13 = scalar_lea.vmem %s0, 6
    %s14 = smov 3
    %v15 = vld [vmem:[%s13] ss:$8 sm:%s14]
    %16 = vrot.lane.b32.xlu0 %v15, 96
    %v17 = vpop.permute.xlu0 %16
    %vm18 = vcmask 917248
    %19 = vst.msk [vmem:[#allocation0] ss:$8 sm:$0x3] %vm18, %v17
    %s20 = scalar_lea.vmem %s0, 5
    %s21 = smov 3
    %v22 = vld [vmem:[%s20] ss:$8 sm:%s21]
    %23 = vrot.lane.b32.xlu0 %v22, 80
    %v24 = vpop.permute.xlu0 %23
    %vm25 = vcmask 786048
    %26 = vst.msk [vmem:[#allocation0] ss:$8 sm:$0x3] %vm25, %v24
    %s27 = scalar_lea.vmem %s0, 4
    %s28 = smov 3
    %v29 = vld [vmem:[%s27] ss:$8 sm:%s28]
    %30 = vrot.lane.b32.xlu0 %v29, 64
    %v31 = vpop.permute.xlu0 %30
    %vm32 = vcmask 654848
    %33 = vst.msk [vmem:[#allocation0] ss:$8 sm:$0x3] %vm32, %v31
    %s34 = scalar_lea.vmem %s0, 3
    %s35 = smov 3
    %v36 = vld [vmem:[%s34] ss:$8 sm:%s35]
    %37 = vrot.lane.b32.xlu0 %v36, 48
    %v38 = vpop.permute.xlu0 %37
    %vm39 = vcmask 523648
    %40 = vst.msk [vmem:[#allocation0] ss:$8 sm:$0x3] %vm39, %v38
    %s41 = scalar_lea.vmem %s0, 2
    %s42 = smov 3
    %v43 = vld [vmem:[%s41] ss:$8 sm:%s42]
    %44 = vrot.lane.b32.xlu0 %v43, 32
    %v45 = vpop.permute.xlu0 %44
    %vm46 = vcmask 392448
    %47 = vst.msk [vmem:[#allocation0] ss:$8 sm:$0x3] %vm46, %v45
    %s48 = scalar_lea.vmem %s0, 1
    %s49 = smov 3
    %v50 = vld [vmem:[%s48] ss:$8 sm:%s49]
    %51 = vrot.lane.b32.xlu0 %v50, 16
    %v52 = vpop.permute.xlu0 %51
    %vm53 = vcmask 261248
    %54 = vst.msk [vmem:[#allocation0] ss:$8 sm:$0x3] %vm53, %v52
    %s56 = sshllo.u32 0, 1
    %v58 = vld [vmem:[#allocation0] sm:%s56]
    %s59 = sshllo.u32 0, 1
    %60 = vst [vmem:[%s1] sm:%s59] %v58
    %s61 = scalar_lea.vmem [#allocation0], 8
    %v62 = vld [vmem:[%s61] sm:%s56]
    %s63 = sshllo.u32 0, 1
    %s64 = scalar_lea.vmem %s1, 1
    %65 = vst [vmem:[%s64] sm:%s63] %v62

// kernel: block3d_forward.5
$region0: #{block3d_forward.5}
  #allocation0 [shape = 'u32[]', space=smem, size = 0x4, offset = 0x4, fixed_abs, tag = 'smem constant byte address 0x4 - core index']
  #allocation1 [shape = 'u32[144,128]{1,0:T(1,128)}', space=vmem, size = 0x12000, scoped, tag = 'internal scratch']
  %s0 = inlined_call_operand.vmem [shape: f32[2,4,16,256], index: 0, kind: input, shape index: {}]
  %s1 = inlined_call_operand.vmem [shape: f32[1,1,1,256], index: 1, kind: input, shape index: {}]
  %s2 = inlined_call_operand.vmem [shape: f32[1,1,1,256], index: 2, kind: input, shape index: {}]
  %s3 = inlined_call_operand.vmem [shape: f32[2,4,16,256], index: 3, kind: output, shape index: {}]
  %s4 = sld [smem:[#allocation0]]
  $region45: #{block3d_forward.5} parent=0
    _
  %s6 = ssub.s32 1, %s4
  %s7 = scalar_select 0, %s6, %s4
  loop: start=0, step=1, limit=6
  $region2: #{block3d_forward.5} parent=0 // loop_pre_header
    _
  $region3: #{block3d_forward.5} parent=0 // loop_header
    %s9 = sphi 0, %s13
    %p10 = scmp.ge.s32.totalorder %s9, 6
    %s16 = sphi 0, %s28
    %s17 = sphi 0, %s24
    %s18 = sphi 0, %s16
    %s19 = sphi 0, %s17
    %s20 = sphi 0, %s18
    %s21 = sphi 0, %s19
    %s33 = sphi 0, %s35
    %s36 = sphi 0, %s33
    %s37 = sphi 0, %s36
    %s53 = sphi 0, %s37
    %s57 = sphi 0, %s57
    %s59 = sphi 0, %s57
    %s60 = sphi 0, %s59
    %s74 = sphi 0, %s60
    %s78 = sphi 0, %s78
    %s80 = sphi 0, %s78
    %s81 = sphi 0, %s80
    %s95 = sphi 0, %s81
    %s103 = sphi 0, %s105
    %s106 = sphi 0, %s103
    %s107 = sphi 0, %s106
    %s123 = sphi 0, %s107
  $region4: #{block3d_forward.5} parent=0 // loop_header_branch
    %12 = sbr.rel (%p10) target = $region8
  $region5: #{block3d_forward.5} parent=0 // loop_body
    %s14 = ssub.s32 %s9, 1
    %s15 = ssub.s32 %s9, 2
    %s22 = sadd.s32 1, %s17
    %p23 = scmp.ge.s32.totalorder %s22, 2
    %s24 = scalar_select %p23, 0, %s22
    %s25 = sadd.s32 1, %s16
    %s26 = scalar_select %p23, %s25, %s16
    %p27 = scmp.ge.s32.totalorder %s26, 2
    %s28 = scalar_select %p27, 0, %s26
    %s29 = ssub.s32 %s16, %s28
    %s30 = ssub.s32 %s17, %s24
    %s31 = sor.u32 %s29, %s30
    %p32 = scmp.eq.s32.totalorder %s31, 0
    %s34 = sadd.s32 %s33, 1
    %s35 = scalar_select %p32, %s33, %s34
    %p38 = pneg %p32
    %p39 = scmp.eq.s32.totalorder %s9, 3
    %p40 = por %p38, %p39
    %p41 = scmp.ne.s32.totalorder %s33, %s36
    %p42 = scmp.eq.s32.totalorder %s9, 0
    %p43 = por %p41, %p42
    %p44 = scmp.ne.s32.totalorder %s33, %s36
    %p45 = scmp.eq.s32.totalorder %s14, 3
    %p46 = por %p44, %p45
    %p47 = scmp.ne.s32.totalorder %s36, %s37
    %p48 = scmp.eq.s32.totalorder %s14, 0
    %p49 = por %p47, %p48
    %p50 = scmp.ne.s32.totalorder %s36, %s37
    %p51 = scmp.eq.s32.totalorder %s15, 3
    %p52 = por %p50, %p51
    %p54 = scmp.ne.s32.totalorder %s37, %s53
    %p55 = scmp.eq.s32.totalorder %s15, 0
    %p56 = por %p54, %p55
    %s58 = sadd.s32 %s57, 1
    %p61 = scmp.eq.s32.totalorder %s9, 3
    %p62 = scmp.ne.s32.totalorder %s57, %s59
    %p63 = scmp.eq.s32.totalorder %s9, 0
    %p64 = por %p62, %p63
    %p65 = scmp.ne.s32.totalorder %s57, %s59
    %p66 = scmp.eq.s32.totalorder %s14, 3
    %p67 = por %p65, %p66
    %p68 = scmp.ne.s32.totalorder %s59, %s60
    %p69 = scmp.eq.s32.totalorder %s14, 0
    %p70 = por %p68, %p69
    %p71 = scmp.ne.s32.totalorder %s59, %s60
    %p72 = scmp.eq.s32.totalorder %s15, 3
    %p73 = por %p71, %p72
    %p75 = scmp.ne.s32.totalorder %s60, %s74
    %p76 = scmp.eq.s32.totalorder %s15, 0
    %p77 = por %p75, %p76
    %s79 = sadd.s32 %s78, 1
    %p82 = scmp.eq.s32.totalorder %s9, 3
    %p83 = scmp.ne.s32.totalorder %s78, %s80
    %p84 = scmp.eq.s32.totalorder %s9, 0
    %p85 = por %p83, %p84
    %p86 = scmp.ne.s32.totalorder %s78, %s80
    %p87 = scmp.eq.s32.totalorder %s14, 3
    %p88 = por %p86, %p87
    %p89 = scmp.ne.s32.totalorder %s80, %s81
    %p90 = scmp.eq.s32.totalorder %s14, 0
    %p91 = por %p89, %p90
    %p92 = scmp.ne.s32.totalorder %s80, %s81
    %p93 = scmp.eq.s32.totalorder %s15, 3
    %p94 = por %p92, %p93
    %p96 = scmp.ne.s32.totalorder %s81, %s95
    %p97 = scmp.eq.s32.totalorder %s15, 0
    %p98 = por %p96, %p97
    %s99 = ssub.s32 %s16, %s28
    %s100 = ssub.s32 %s17, %s24
    %s101 = sor.u32 %s99, %s100
    %p102 = scmp.eq.s32.totalorder %s101, 0
    %s104 = sadd.s32 %s103, 1
    %s105 = scalar_select %p102, %s103, %s104
    %p108 = pneg %p102
    %p109 = scmp.eq.s32.totalorder %s9, 3
    %p110 = por %p108, %p109
    %p111 = scmp.ne.s32.totalorder %s103, %s106
    %p112 = scmp.eq.s32.totalorder %s9, 0
    %p113 = por %p111, %p112
    %p114 = scmp.ne.s32.totalorder %s103, %s106
    %p115 = scmp.eq.s32.totalorder %s14, 3
    %p116 = por %p114, %p115
    %p117 = scmp.ne.s32.totalorder %s106, %s107
    %p118 = scmp.eq.s32.totalorder %s14, 0
    %p119 = por %p117, %p118
    %p120 = scmp.ne.s32.totalorder %s106, %s107
    %p121 = scmp.eq.s32.totalorder %s15, 3
    %p122 = por %p120, %p121
    %p124 = scmp.ne.s32.totalorder %s107, %s123
    %p125 = scmp.eq.s32.totalorder %s15, 0
    %p126 = por %p124, %p125
    %p127 = scmp.le.s32.totalorder 1, %s9
    %p128 = scmp.lt.s32.totalorder %s9, 5
    %p129 = pnand %p127, %p128
    %p130 = pneg %p129
    // Predicated region
    $region9: #{block3d_forward.5} parent=5 // pred_check
      _
    $region10: #{block3d_forward.5} parent=5 // pred_check_branch
      %132 = sbr.rel (%p129) target = $region12
    $region11: #{block3d_forward.5} parent=5 // pred_region
      %s133 = ssub.s32 %s9, 1
      // Predicated region
      $region13: #{block3d_forward.5} parent=11 // pred_check
        %p134 = pneg %p70
      $region14: #{block3d_forward.5} parent=11 // pred_check_branch
        %136 = sbr.rel (%p134) target = $region16
      $region15: #{block3d_forward.5} parent=11 // pred_region
        _
      $region16: #{block3d_forward.5} parent=11 // pred_fallthru
        _
      // Predicated region
      $region17: #{block3d_forward.5} parent=11 // pred_check
        %p137 = pneg %p91
      $region18: #{block3d_forward.5} parent=11 // pred_check_branch
        %139 = sbr.rel (%p137) target = $region20
      $region19: #{block3d_forward.5} parent=11 // pred_region
        _
      $region20: #{block3d_forward.5} parent=11 // pred_fallthru
        _
    $region12: #{block3d_forward.5} parent=5 // pred_fallthru
      _
    %p140 = scmp.lt.s32.totalorder %s9, 4
    // Predicated region
    $region21: #{block3d_forward.5} parent=5 // pred_check
      %p141 = pneg %p140
    $region22: #{block3d_forward.5} parent=5 // pred_check_branch
      %143 = sbr.rel (%p141) target = $region24
    $region23: #{block3d_forward.5} parent=5 // pred_region
      // Predicated region
      $region25: #{block3d_forward.5} parent=23 // pred_check
        %p144 = pneg %p43
      $region26: #{block3d_forward.5} parent=23 // pred_check_branch
        %146 = sbr.rel (%p144) target = $region28
      $region27: #{block3d_forward.5} parent=23 // pred_region
        %s147 = smul.u32 2, %s17
        %p148 = scmp.lt.s32.totalorder %s16, 1
        %s149 = scalar_select %p148, %s16, 1
        %p150 = scmp.lt.s32.totalorder %s147, 3
        %s151 = scalar_select %p150, %s147, 3
        %s152 = smul.addr %s151, 4
        %s153 = smul.addr %s149, 16
        %s154 = sadd.s32 %s152, %s153
        %s155 = smul.addr %s154, 8
        %s156 = scalar_lea.vmem %s0, %s155
        %s157 = smul.u32 2, %s17
      $region28: #{block3d_forward.5} parent=23 // pred_fallthru
        _
    $region24: #{block3d_forward.5} parent=5 // pred_fallthru
      _
    %p158 = scmp.le.s32.totalorder 1, %s9
    %p159 = scmp.lt.s32.totalorder %s9, 5
    %p160 = pnand %p158, %p159
    %p161 = pneg %p160
    // Predicated region
    $region29: #{block3d_forward.5} parent=5 // pred_check
      _
    $region30: #{block3d_forward.5} parent=5 // pred_check_branch
      %163 = sbr.rel (%p160) target = $region32
    $region31: #{block3d_forward.5} parent=5 // pred_region
      %s164 = ssub.s32 %s9, 1
      %s165 = smul.u32 2, %s19
      %p166 = scmp.lt.s32.totalorder %s18, 1
      %s167 = scalar_select %p166, %s18, 1
      %p168 = scmp.lt.s32.totalorder %s165, 3
      %s169 = scalar_select %p168, %s165, 3
      %s170 = smul.addr %s169, 4
      %s171 = smul.addr %s167, 16
      %s172 = sadd.s32 %s170, %s171
      %s173 = smul.addr %s172, 8
      %s174 = scalar_lea.vmem %s0, %s173
      %p175 = pneg %p49
      %p176 = pneg %p46
      %p177 = pneg %p70
      %p178 = pneg %p67
      %p179 = pneg %p91
      %p180 = pneg %p88
      %p181 = pneg %p119
      %p182 = pneg %p116
      %s183 = smul.u32 2, %s19
      %p184 = scmp.lt.s32.totalorder %s18, 1
      %s185 = scalar_select %p184, %s18, 1
      %p186 = scmp.lt.s32.totalorder %s183, 3
      %s187 = scalar_select %p186, %s183, 3
      %s188 = smul.addr %s187, 4
      %s189 = smul.addr %s185, 16
      %s190 = sadd.s32 %s188, %s189
      %s191 = smul.addr %s190, 8
      %s192 = scalar_lea.vmem %s3, %s191
      %s193 = smul.u32 2, %s19
      %p194 = scmp.lt.s32.totalorder %s18, 1
      %s195 = scalar_select %p194, %s18, 1
      %p196 = scmp.lt.s32.totalorder %s193, 3
      %s197 = scalar_select %p196, %s193, 3
      %s198 = smul.addr %s197, 4
      %s199 = smul.addr %s195, 16
      %s200 = sadd.s32 %s198, %s199
      %s201 = smul.addr %s200, 8
      %s202 = scalar_lea.vmem %s0, %s201
      %s203 = smul.u32 2, %s19
      %s204 = smul.u32 2, %s19
      %p205 = scmp.lt.s32.totalorder %s18, 1
      %s206 = scalar_select %p205, %s18, 1
      %p207 = scmp.lt.s32.totalorder %s204, 3
      %s208 = scalar_select %p207, %s204, 3
      %s209 = smul.addr %s208, 4
      %s210 = smul.addr %s206, 16
      %s211 = sadd.s32 %s209, %s210
      %s212 = smul.addr %s211, 8
      %s213 = scalar_lea.vmem %s3, %s212
      %s214 = smul.u32 2, %s19
      %v215 = vld [vmem:[%s202] sm:$0xff]
      %v216 = vld [vmem:[%s202 + $0x8] sm:$0xff]
      %v217 = vld [vmem:[%s202 + $0x10] sm:$0xff]
      %v218 = vld [vmem:[%s202 + $0x18] sm:$0xff]
      %v219 = vld [vmem:[%s202 + $0x20] sm:$0xff]
      %v220 = vld [vmem:[%s202 + $0x28] sm:$0xff]
      %v221 = vld [vmem:[%s202 + $0x30] sm:$0xff]
      %v222 = vld [vmem:[%s202 + $0x38] sm:$0xff]
      %v223 = vld [vmem:[%s1] sm:$0x3]
      %v225 = vlaneseq
      %v226 = vshrl.u32 %v225, 7
      %v227 = vsub.s32 0, %v226
      %v228 = vrot.slane %v223, %v227
      %v229 = vlaneseq
      %v230 = vshrl.u32 %v229, 7
      %v231 = vsub.s32 1, %v230
      %v232 = vrot.slane %v223, %v231
      %v235 = vmul.f32 %v215, %v228
      %v236 = vmul.f32 %v216, %v232
      %v237 = vmul.f32 %v217, %v228
      %v238 = vmul.f32 %v218, %v232
      %v239 = vmul.f32 %v219, %v228
      %v240 = vmul.f32 %v220, %v232
      %v241 = vmul.f32 %v221, %v228
      %v242 = vmul.f32 %v222, %v232
      %v243 = vld [vmem:[%s2] sm:$0x3]
      %v245 = vlaneseq
      %v246 = vshrl.u32 %v245, 7
      %v247 = vsub.s32 0, %v246
      %v248 = vrot.slane %v243, %v247
      %v249 = vlaneseq
      %v250 = vshrl.u32 %v249, 7
      %v251 = vsub.s32 1, %v250
      %v252 = vrot.slane %v243, %v251
      %v255 = vadd.f32 %v235, %v248
      %v256 = vadd.f32 %v236, %v252
      %v257 = vadd.f32 %v237, %v248
      %v258 = vadd.f32 %v238, %v252
      %v259 = vadd.f32 %v239, %v248
      %v260 = vadd.f32 %v240, %v252
      %v261 = vadd.f32 %v241, %v248
      %v262 = vadd.f32 %v242, %v252
      %v263 = vmax.f32 %v255, 0.0
      %v264 = vmax.f32 %v256, 0.0
      %v265 = vmax.f32 %v257, 0.0
      %v266 = vmax.f32 %v258, 0.0
      %v267 = vmax.f32 %v259, 0.0
      %v268 = vmax.f32 %v260, 0.0
      %v269 = vmax.f32 %v261, 0.0
      %v270 = vmax.f32 %v262, 0.0
      %271 = vst [vmem:[%s213] sm:$0xff] %v263
      %272 = vst [vmem:[%s213 + $0x8] sm:$0xff] %v264
      %273 = vst [vmem:[%s213 + $0x10] sm:$0xff] %v265
      %274 = vst [vmem:[%s213 + $0x18] sm:$0xff] %v266
      %275 = vst [vmem:[%s213 + $0x20] sm:$0xff] %v267
      %276 = vst [vmem:[%s213 + $0x28] sm:$0xff] %v268
      %277 = vst [vmem:[%s213 + $0x30] sm:$0xff] %v269
      %278 = vst [vmem:[%s213 + $0x38] sm:$0xff] %v270
      %s279 = smul.u32 2, %s19
      %p280 = scmp.lt.s32.totalorder %s18, 1
      %s281 = scalar_select %p280, %s18, 1
      %p282 = scmp.lt.s32.totalorder %s279, 3
      %s283 = scalar_select %p282, %s279, 3
      %s284 = smul.addr %s283, 4
      %s285 = smul.addr %s281, 16
      %s286 = sadd.s32 %s284, %s285
      %s287 = smul.addr %s286, 8
      %s288 = scalar_lea.vmem %s3, %s287
      // Predicated region
      $region33: #{block3d_forward.5} parent=31 // pred_check
        %p289 = pneg %p116
      $region34: #{block3d_forward.5} parent=31 // pred_check_branch
        %291 = sbr.rel (%p289) target = $region36
      $region35: #{block3d_forward.5} parent=31 // pred_region
        %s292 = smul.u32 2, %s19
      $region36: #{block3d_forward.5} parent=31 // pred_fallthru
        _
    $region32: #{block3d_forward.5} parent=5 // pred_fallthru
      _
    %p293 = scmp.le.s32.totalorder 2, %s9
    // Predicated region
    $region37: #{block3d_forward.5} parent=5 // pred_check
      %p294 = pneg %p293
    $region38: #{block3d_forward.5} parent=5 // pred_check_branch
      %296 = sbr.rel (%p294) target = $region40
    $region39: #{block3d_forward.5} parent=5 // pred_region
      %s297 = ssub.s32 %s9, 2
      // Predicated region
      $region41: #{block3d_forward.5} parent=39 // pred_check
        %p298 = pneg %p122
      $region42: #{block3d_forward.5} parent=39 // pred_check_branch
        %300 = sbr.rel (%p298) target = $region44
      $region43: #{block3d_forward.5} parent=39 // pred_region
        %s301 = smul.u32 2, %s21
        %p302 = scmp.lt.s32.totalorder %s20, 1
        %s303 = scalar_select %p302, %s20, 1
        %p304 = scmp.lt.s32.totalorder %s301, 3
        %s305 = scalar_select %p304, %s301, 3
        %s306 = smul.addr %s305, 4
        %s307 = smul.addr %s303, 16
        %s308 = sadd.s32 %s306, %s307
        %s309 = smul.addr %s308, 8
        %s310 = scalar_lea.vmem %s3, %s309
      $region44: #{block3d_forward.5} parent=39 // pred_fallthru
        _
    $region40: #{block3d_forward.5} parent=5 // pred_fallthru
      _
  $region6: #{block3d_forward.5} parent=0 // loop_footer
    %s13 = sadd.s32 1, %s9
  $region7: #{block3d_forward.5} parent=0 // loop_footer_branch
    %8 = sbr.rel target = $region3
  $region8: #{block3d_forward.5} parent=0 // loop_exit
    _

// kernel: block3d_forward.4
$region0: #{block3d_forward.4}
  #allocation0 [shape = 'u32[]', space=smem, size = 0x4, offset = 0x4, fixed_abs, tag = 'smem constant byte address 0x4 - core index']
  #allocation1 [shape = 'u32[144,128]{1,0:T(1,128)}', space=vmem, size = 0x12000, scoped, tag = 'internal scratch']
  #allocation2 [shape = 'f32[4,18,256]{2,1,0:T(8,128)}', space=vmem, size = 0x18000, scoped, tag = 'scratch operand']
  %s0 = inlined_call_operand.vmem [shape: f32[2,4,16,256], index: 0, kind: input, shape index: {}, may-alias: {0,1,2}]
  %s1 = inlined_call_operand.vmem [shape: f32[2,4,16,256], index: 1, kind: input, shape index: {}, may-alias: {0,1,2}]
  %s2 = inlined_call_operand.vmem [shape: f32[2,4,16,256], index: 2, kind: input, shape index: {}, may-alias: {0,1,2}]
  %s3 = inlined_call_operand.vmem [shape: f32[2304,256], index: 3, kind: input, shape index: {}]
  %s4 = inlined_call_operand.vmem [shape: f32[2,4,16,256], index: 4, kind: output, shape index: {0}]
  %s5 = inlined_call_operand.vmem [shape: f32[2,2,8,256], index: 5, kind: output, shape index: {1}]
  %6 = xla_tuple %s4, %s5
  %s7 = sld [smem:[#allocation0]]
  $region65: #{block3d_forward.4} parent=0
    _
  %s9 = ssub.s32 1, %s7
  %s10 = scalar_select 0, %s9, %s7
  loop: start=0, step=1, limit=6
  $region2: #{block3d_forward.4} parent=0 // loop_pre_header
    _
  $region3: #{block3d_forward.4} parent=0 // loop_header
    %s12 = sphi 0, %s16
    %p13 = scmp.ge.s32.totalorder %s12, 6
    %s19 = sphi 0, %s31
    %s20 = sphi 0, %s27
    %s21 = sphi 0, %s19
    %s22 = sphi 0, %s20
    %s23 = sphi 0, %s21
    %s24 = sphi 0, %s22
    %s36 = sphi 0, %s38
    %s39 = sphi 0, %s36
    %s40 = sphi 0, %s39
    %s56 = sphi 0, %s40
    %s72 = sphi 0, %s74
    %s75 = sphi 0, %s72
    %s76 = sphi 0, %s75
    %s92 = sphi 0, %s76
    %s108 = sphi 0, %s110
    %s111 = sphi 0, %s108
    %s112 = sphi 0, %s111
    %s128 = sphi 0, %s112
    %s132 = sphi 0, %s132
    %s134 = sphi 0, %s132
    %s135 = sphi 0, %s134
    %s149 = sphi 0, %s135
    %s157 = sphi 0, %s159
    %s160 = sphi 0, %s157
    %s161 = sphi 0, %s160
    %s177 = sphi 0, %s161
    %s185 = sphi 0, %s187
    %s188 = sphi 0, %s185
    %s189 = sphi 0, %s188
    %s205 = sphi 0, %s189
  $region4: #{block3d_forward.4} parent=0 // loop_header_branch
    %15 = sbr.rel (%p13) target = $region8
  $region5: #{block3d_forward.4} parent=0 // loop_body
    %s17 = ssub.s32 %s12, 1
    %s18 = ssub.s32 %s12, 2
    %s25 = sadd.s32 1, %s20
    %p26 = scmp.ge.s32.totalorder %s25, 2
    %s27 = scalar_select %p26, 0, %s25
    %s28 = sadd.s32 1, %s19
    %s29 = scalar_select %p26, %s28, %s19
    %p30 = scmp.ge.s32.totalorder %s29, 2
    %s31 = scalar_select %p30, 0, %s29
    %s32 = ssub.s32 %s19, %s31
    %s33 = ssub.s32 %s20, %s27
    %s34 = sor.u32 %s32, %s33
    %p35 = scmp.eq.s32.totalorder %s34, 0
    %s37 = sadd.s32 %s36, 1
    %s38 = scalar_select %p35, %s36, %s37
    %p41 = pneg %p35
    %p42 = scmp.eq.s32.totalorder %s12, 3
    %p43 = por %p41, %p42
    %p44 = scmp.ne.s32.totalorder %s36, %s39
    %p45 = scmp.eq.s32.totalorder %s12, 0
    %p46 = por %p44, %p45
    %p47 = scmp.ne.s32.totalorder %s36, %s39
    %p48 = scmp.eq.s32.totalorder %s17, 3
    %p49 = por %p47, %p48
    %p50 = scmp.ne.s32.totalorder %s39, %s40
    %p51 = scmp.eq.s32.totalorder %s17, 0
    %p52 = por %p50, %p51
    %p53 = scmp.ne.s32.totalorder %s39, %s40
    %p54 = scmp.eq.s32.totalorder %s18, 3
    %p55 = por %p53, %p54
    %p57 = scmp.ne.s32.totalorder %s40, %s56
    %p58 = scmp.eq.s32.totalorder %s18, 0
    %p59 = por %p57, %p58
    %s60 = smul.u32 %s20, 2
    %s61 = ssub.s32 %s60, 1
    %p62 = scmp.gt.s32.totalorder %s61, 0
    %s63 = scalar_select %p62, %s61, 0
    %s64 = smul.u32 %s27, 2
    %s65 = ssub.s32 %s64, 1
    %p66 = scmp.gt.s32.totalorder %s65, 0
    %s67 = scalar_select %p66, %s65, 0
    %s68 = ssub.s32 %s19, %s31
    %s69 = ssub.s32 %s63, %s67
    %s70 = sor.u32 %s68, %s69
    %p71 = scmp.eq.s32.totalorder %s70, 0
    %s73 = sadd.s32 %s72, 1
    %s74 = scalar_select %p71, %s72, %s73
    %p77 = pneg %p71
    %p78 = scmp.eq.s32.totalorder %s12, 3
    %p79 = por %p77, %p78
    %p80 = scmp.ne.s32.totalorder %s72, %s75
    %p81 = scmp.eq.s32.totalorder %s12, 0
    %p82 = por %p80, %p81
    %p83 = scmp.ne.s32.totalorder %s72, %s75
    %p84 = scmp.eq.s32.totalorder %s17, 3
    %p85 = por %p83, %p84
    %p86 = scmp.ne.s32.totalorder %s75, %s76
    %p87 = scmp.eq.s32.totalorder %s17, 0
    %p88 = por %p86, %p87
    %p89 = scmp.ne.s32.totalorder %s75, %s76
    %p90 = scmp.eq.s32.totalorder %s18, 3
    %p91 = por %p89, %p90
    %p93 = scmp.ne.s32.totalorder %s76, %s92
    %p94 = scmp.eq.s32.totalorder %s18, 0
    %p95 = por %p93, %p94
    %s96 = smul.u32 %s20, 2
    %s97 = sadd.s32 %s96, 2
    %p98 = scmp.lt.s32.totalorder %s97, 3
    %s99 = scalar_select %p98, %s97, 3
    %s100 = smul.u32 %s27, 2
    %s101 = sadd.s32 %s100, 2
    %p102 = scmp.lt.s32.totalorder %s101, 3
    %s103 = scalar_select %p102, %s101, 3
    %s104 = ssub.s32 %s19, %s31
    %s105 = ssub.s32 %s99, %s103
    %s106 = sor.u32 %s104, %s105
    %p107 = scmp.eq.s32.totalorder %s106, 0
    %s109 = sadd.s32 %s108, 1
    %s110 = scalar_select %p107, %s108, %s109
    %p113 = pneg %p107
    %p114 = scmp.eq.s32.totalorder %s12, 3
    %p115 = por %p113, %p114
    %p116 = scmp.ne.s32.totalorder %s108, %s111
    %p117 = scmp.eq.s32.totalorder %s12, 0
    %p118 = por %p116, %p117
    %p119 = scmp.ne.s32.totalorder %s108, %s111
    %p120 = scmp.eq.s32.totalorder %s17, 3
    %p121 = por %p119, %p120
    %p122 = scmp.ne.s32.totalorder %s111, %s112
    %p123 = scmp.eq.s32.totalorder %s17, 0
    %p124 = por %p122, %p123
    %p125 = scmp.ne.s32.totalorder %s111, %s112
    %p126 = scmp.eq.s32.totalorder %s18, 3
    %p127 = por %p125, %p126
    %p129 = scmp.ne.s32.totalorder %s112, %s128
    %p130 = scmp.eq.s32.totalorder %s18, 0
    %p131 = por %p129, %p130
    %s133 = sadd.s32 %s132, 1
    %p136 = scmp.eq.s32.totalorder %s12, 3
    %p137 = scmp.ne.s32.totalorder %s132, %s134
    %p138 = scmp.eq.s32.totalorder %s12, 0
    %p139 = por %p137, %p138
    %p140 = scmp.ne.s32.totalorder %s132, %s134
    %p141 = scmp.eq.s32.totalorder %s17, 3
    %p142 = por %p140, %p141
    %p143 = scmp.ne.s32.totalorder %s134, %s135
    %p144 = scmp.eq.s32.totalorder %s17, 0
    %p145 = por %p143, %p144
    %p146 = scmp.ne.s32.totalorder %s134, %s135
    %p147 = scmp.eq.s32.totalorder %s18, 3
    %p148 = por %p146, %p147
    %p150 = scmp.ne.s32.totalorder %s135, %s149
    %p151 = scmp.eq.s32.totalorder %s18, 0
    %p152 = por %p150, %p151
    %s153 = ssub.s32 %s19, %s31
    %s154 = ssub.s32 %s20, %s27
    %s155 = sor.u32 %s153, %s154
    %p156 = scmp.eq.s32.totalorder %s155, 0
    %s158 = sadd.s32 %s157, 1
    %s159 = scalar_select %p156, %s157, %s158
    %p162 = pneg %p156
    %p163 = scmp.eq.s32.totalorder %s12, 3
    %p164 = por %p162, %p163
    %p165 = scmp.ne.s32.totalorder %s157, %s160
    %p166 = scmp.eq.s32.totalorder %s12, 0
    %p167 = por %p165, %p166
    %p168 = scmp.ne.s32.totalorder %s157, %s160
    %p169 = scmp.eq.s32.totalorder %s17, 3
    %p170 = por %p168, %p169
    %p171 = scmp.ne.s32.totalorder %s160, %s161
    %p172 = scmp.eq.s32.totalorder %s17, 0
    %p173 = por %p171, %p172
    %p174 = scmp.ne.s32.totalorder %s160, %s161
    %p175 = scmp.eq.s32.totalorder %s18, 3
    %p176 = por %p174, %p175
    %p178 = scmp.ne.s32.totalorder %s161, %s177
    %p179 = scmp.eq.s32.totalorder %s18, 0
    %p180 = por %p178, %p179
    %s181 = ssub.s32 %s19, %s31
    %s182 = ssub.s32 %s20, %s27
    %s183 = sor.u32 %s181, %s182
    %p184 = scmp.eq.s32.totalorder %s183, 0
    %s186 = sadd.s32 %s185, 1
    %s187 = scalar_select %p184, %s185, %s186
    %p190 = pneg %p184
    %p191 = scmp.eq.s32.totalorder %s12, 3
    %p192 = por %p190, %p191
    %p193 = scmp.ne.s32.totalorder %s185, %s188
    %p194 = scmp.eq.s32.totalorder %s12, 0
    %p195 = por %p193, %p194
    %p196 = scmp.ne.s32.totalorder %s185, %s188
    %p197 = scmp.eq.s32.totalorder %s17, 3
    %p198 = por %p196, %p197
    %p199 = scmp.ne.s32.totalorder %s188, %s189
    %p200 = scmp.eq.s32.totalorder %s17, 0
    %p201 = por %p199, %p200
    %p202 = scmp.ne.s32.totalorder %s188, %s189
    %p203 = scmp.eq.s32.totalorder %s18, 3
    %p204 = por %p202, %p203
    %p206 = scmp.ne.s32.totalorder %s189, %s205
    %p207 = scmp.eq.s32.totalorder %s18, 0
    %p208 = por %p206, %p207
    %p209 = scmp.le.s32.totalorder 1, %s12
    %p210 = scmp.lt.s32.totalorder %s12, 5
    %p211 = pnand %p209, %p210
    %p212 = pneg %p211
    // Predicated region
    $region9: #{block3d_forward.4} parent=5 // pred_check
      _
    $region10: #{block3d_forward.4} parent=5 // pred_check_branch
      %214 = sbr.rel (%p211) target = $region12
    $region11: #{block3d_forward.4} parent=5 // pred_region
      %s215 = ssub.s32 %s12, 1
      // Predicated region
      $region13: #{block3d_forward.4} parent=11 // pred_check
        %p216 = pneg %p145
      $region14: #{block3d_forward.4} parent=11 // pred_check_branch
        %218 = sbr.rel (%p216) target = $region16
      $region15: #{block3d_forward.4} parent=11 // pred_region
        _
      $region16: #{block3d_forward.4} parent=11 // pred_fallthru
        _
    $region12: #{block3d_forward.4} parent=5 // pred_fallthru
      _
    %p219 = scmp.lt.s32.totalorder %s12, 4
    // Predicated region
    $region17: #{block3d_forward.4} parent=5 // pred_check
      %p220 = pneg %p219
    $region18: #{block3d_forward.4} parent=5 // pred_check_branch
      %222 = sbr.rel (%p220) target = $region20
    $region19: #{block3d_forward.4} parent=5 // pred_region
      // Predicated region
      $region21: #{block3d_forward.4} parent=19 // pred_check
        %p223 = pneg %p46
      $region22: #{block3d_forward.4} parent=19 // pred_check_branch
        %225 = sbr.rel (%p223) target = $region24
      $region23: #{block3d_forward.4} parent=19 // pred_region
        %s226 = smul.u32 2, %s20
        %p227 = scmp.lt.s32.totalorder %s19, 1
        %s228 = scalar_select %p227, %s19, 1
        %p229 = scmp.lt.s32.totalorder %s226, 3
        %s230 = scalar_select %p229, %s226, 3
        %s231 = smul.addr %s230, 4
        %s232 = smul.addr %s228, 16
        %s233 = sadd.s32 %s231, %s232
        %s234 = smul.addr %s233, 8
        %s235 = scalar_lea.vmem %s0, %s234
        %s236 = smul.u32 2, %s20
      $region24: #{block3d_forward.4} parent=19 // pred_fallthru
        _
      // Predicated region
      $region25: #{block3d_forward.4} parent=19 // pred_check
        %p237 = pneg %p82
      $region26: #{block3d_forward.4} parent=19 // pred_check_branch
        %239 = sbr.rel (%p237) target = $region28
      $region27: #{block3d_forward.4} parent=19 // pred_region
        %s240 = smul.u32 %s20, 2
        %s241 = ssub.s32 %s240, 1
        %p242 = scmp.gt.s32.totalorder %s241, 0
        %s243 = scalar_select %p242, %s241, 0
        %p244 = scmp.lt.s32.totalorder %s19, 1
        %s245 = scalar_select %p244, %s19, 1
        %p246 = scmp.lt.s32.totalorder %s243, 3
        %s247 = scalar_select %p246, %s243, 3
        %s248 = smul.addr %s247, 4
        %s249 = smul.addr %s245, 16
        %s250 = sadd.s32 %s248, %s249
        %s251 = smul.addr %s250, 8
        %s252 = scalar_lea.vmem %s1, %s251
        %s253 = smul.u32 %s20, 2
        %s254 = ssub.s32 %s253, 1
        %p255 = scmp.gt.s32.totalorder %s254, 0
        %s256 = scalar_select %p255, %s254, 0
      $region28: #{block3d_forward.4} parent=19 // pred_fallthru
        _
      // Predicated region
      $region29: #{block3d_forward.4} parent=19 // pred_check
        %p257 = pneg %p118
      $region30: #{block3d_forward.4} parent=19 // pred_check_branch
        %259 = sbr.rel (%p257) target = $region32
      $region31: #{block3d_forward.4} parent=19 // pred_region
        %s260 = smul.u32 %s20, 2
        %s261 = sadd.s32 %s260, 2
        %p262 = scmp.lt.s32.totalorder %s261, 3
        %s263 = scalar_select %p262, %s261, 3
        %p264 = scmp.lt.s32.totalorder %s19, 1
        %s265 = scalar_select %p264, %s19, 1
        %p266 = scmp.lt.s32.totalorder %s263, 3
        %s267 = scalar_select %p266, %s263, 3
        %s268 = smul.addr %s267, 4
        %s269 = smul.addr %s265, 16
        %s270 = sadd.s32 %s268, %s269
        %s271 = smul.addr %s270, 8
        %s272 = scalar_lea.vmem %s2, %s271
        %s273 = smul.u32 %s20, 2
        %s274 = sadd.s32 %s273, 2
        %p275 = scmp.lt.s32.totalorder %s274, 3
        %s276 = scalar_select %p275, %s274, 3
      $region32: #{block3d_forward.4} parent=19 // pred_fallthru
        _
    $region20: #{block3d_forward.4} parent=5 // pred_fallthru
      _
    %p277 = scmp.le.s32.totalorder 1, %s12
    %p278 = scmp.lt.s32.totalorder %s12, 5
    %p279 = pnand %p277, %p278
    %p280 = pneg %p279
    // Predicated region
    $region33: #{block3d_forward.4} parent=5 // pred_check
      _
    $region34: #{block3d_forward.4} parent=5 // pred_check_branch
      %282 = sbr.rel (%p279) target = $region36
    $region35: #{block3d_forward.4} parent=5 // pred_region
      %s283 = ssub.s32 %s12, 1
      %s284 = smul.u32 2, %s22
      %p285 = scmp.lt.s32.totalorder %s21, 1
      %s286 = scalar_select %p285, %s21, 1
      %p287 = scmp.lt.s32.totalorder %s284, 3
      %s288 = scalar_select %p287, %s284, 3
      %s289 = smul.addr %s288, 4
      %s290 = smul.addr %s286, 16
      %s291 = sadd.s32 %s289, %s290
      %s292 = smul.addr %s291, 8
      %s293 = scalar_lea.vmem %s0, %s292
      %p294 = pneg %p52
      %p295 = pneg %p49
      %s296 = smul.u32 %s22, 2
      %s297 = ssub.s32 %s296, 1
      %p298 = scmp.gt.s32.totalorder %s297, 0
      %s299 = scalar_select %p298, %s297, 0
      %p300 = scmp.lt.s32.totalorder %s21, 1
      %s301 = scalar_select %p300, %s21, 1
      %p302 = scmp.lt.s32.totalorder %s299, 3
      %s303 = scalar_select %p302, %s299, 3
      %s304 = smul.addr %s303, 4
      %s305 = smul.addr %s301, 16
      %s306 = sadd.s32 %s304, %s305
      %s307 = smul.addr %s306, 8
      %s308 = scalar_lea.vmem %s1, %s307
      %p309 = pneg %p88
      %p310 = pneg %p85
      %s311 = smul.u32 %s22, 2
      %s312 = sadd.s32 %s311, 2
      %p313 = scmp.lt.s32.totalorder %s312, 3
      %s314 = scalar_select %p313, %s312, 3
      %p315 = scmp.lt.s32.totalorder %s21, 1
      %s316 = scalar_select %p315, %s21, 1
      %p317 = scmp.lt.s32.totalorder %s314, 3
      %s318 = scalar_select %p317, %s314, 3
      %s319 = smul.addr %s318, 4
      %s320 = smul.addr %s316, 16
      %s321 = sadd.s32 %s319, %s320
      %s322 = smul.addr %s321, 8
      %s323 = scalar_lea.vmem %s2, %s322
      %p324 = pneg %p124
      %p325 = pneg %p121
      %p326 = pneg %p145
      %p327 = pneg %p142
      %p328 = pneg %p173
      %p329 = pneg %p170
      %s330 = smul.u32 2, %s22
      %p331 = scmp.lt.s32.totalorder %s21, 1
      %s332 = scalar_select %p331, %s21, 1
      %p333 = scmp.lt.s32.totalorder %s330, 3
      %s334 = scalar_select %p333, %s330, 3
      %s335 = smul.addr %s334, 4
      %s336 = smul.addr %s332, 16
      %s337 = sadd.s32 %s335, %s336
      %s338 = smul.addr %s337, 8
      %s339 = scalar_lea.vmem %s4, %s338
      %p340 = pneg %p201
      %p341 = pneg %p198
      %p342 = scmp.lt.s32.totalorder %s21, 1
      %s343 = scalar_select %p342, %s21, 1
      %p344 = scmp.lt.s32.totalorder %s22, 1
      %s345 = scalar_select %p344, %s22, 1
      %s346 = smul.addr %s345, 2
      %s347 = smul.addr %s343, 4
      %s348 = sadd.s32 %s346, %s347
      %s349 = smul.addr %s348, 8
      %s350 = scalar_lea.vmem %s5, %s349
      %s351 = smul.u32 2, %s22
      %p352 = scmp.lt.s32.totalorder %s21, 1
      %s353 = scalar_select %p352, %s21, 1
      %p354 = scmp.lt.s32.totalorder %s351, 3
      %s355 = scalar_select %p354, %s351, 3
      %s356 = smul.addr %s355, 4
      %s357 = smul.addr %s353, 16
      %s358 = sadd.s32 %s356, %s357
      %s359 = smul.addr %s358, 8
      %s360 = scalar_lea.vmem %s0, %s359
      %s361 = smul.u32 2, %s22
      %s362 = smul.u32 %s22, 2
      %s363 = ssub.s32 %s362, 1
      %p364 = scmp.gt.s32.totalorder %s363, 0
      %s365 = scalar_select %p364, %s363, 0
      %p366 = scmp.lt.s32.totalorder %s21, 1
      %s367 = scalar_select %p366, %s21, 1
      %p368 = scmp.lt.s32.totalorder %s365, 3
      %s369 = scalar_select %p368, %s365, 3
      %s370 = smul.addr %s369, 4
      %s371 = smul.addr %s367, 16
      %s372 = sadd.s32 %s370, %s371
      %s373 = smul.addr %s372, 8
      %s374 = scalar_lea.vmem %s1, %s373
      %s375 = smul.u32 %s22, 2
      %s376 = ssub.s32 %s375, 1
      %p377 = scmp.gt.s32.totalorder %s376, 0
      %s378 = scalar_select %p377, %s376, 0
      %s379 = smul.u32 %s22, 2
      %s380 = sadd.s32 %s379, 2
      %p381 = scmp.lt.s32.totalorder %s380, 3
      %s382 = scalar_select %p381, %s380, 3
      %p383 = scmp.lt.s32.totalorder %s21, 1
      %s384 = scalar_select %p383, %s21, 1
      %p385 = scmp.lt.s32.totalorder %s382, 3
      %s386 = scalar_select %p385, %s382, 3
      %s387 = smul.addr %s386, 4
      %s388 = smul.addr %s384, 16
      %s389 = sadd.s32 %s387, %s388
      %s390 = smul.addr %s389, 8
      %s391 = scalar_lea.vmem %s2, %s390
      %s392 = smul.u32 %s22, 2
      %s393 = sadd.s32 %s392, 2
      %p394 = scmp.lt.s32.totalorder %s393, 3
      %s395 = scalar_select %p394, %s393, 3
      %s396 = smul.u32 2, %s22
      %p397 = scmp.lt.s32.totalorder %s21, 1
      %s398 = scalar_select %p397, %s21, 1
      %p399 = scmp.lt.s32.totalorder %s396, 3
      %s400 = scalar_select %p399, %s396, 3
      %s401 = smul.addr %s400, 4
      %s402 = smul.addr %s398, 16
      %s403 = sadd.s32 %s401, %s402
      %s404 = smul.addr %s403, 8
      %s405 = scalar_lea.vmem %s4, %s404
      %s406 = smul.u32 2, %s22
      %p407 = scmp.lt.s32.totalorder %s21, 1
      %s408 = scalar_select %p407, %s21, 1
      %p409 = scmp.lt.s32.totalorder %s22, 1
      %s410 = scalar_select %p409, %s22, 1
      %s411 = smul.addr %s410, 2
      %s412 = smul.addr %s408, 4
      %s413 = sadd.s32 %s411, %s412
      %s414 = smul.addr %s413, 8
      %s415 = scalar_lea.vmem %s5, %s414
      %s416 = smul.u32 %s22, 2
      %417 = vst [vmem:[#allocation2] sm:$0xff] 0.0
      %418 = vst [vmem:[#allocation2 + $0x8] sm:$0xff] 0.0
      %419 = vst [vmem:[#allocation2 + $0x10] sm:$0xff] 0.0
      %420 = vst [vmem:[#allocation2 + $0x18] sm:$0xff] 0.0
      %421 = vst [vmem:[#allocation2 + $0x20] sm:$0x3] 0.0
      %422 = vst [vmem:[#allocation2 + $0x28] sm:$0x3] 0.0
      %423 = vst [vmem:[#allocation2 + $0x30] sm:$0xff] 0.0
      %424 = vst [vmem:[#allocation2 + $0x38] sm:$0xff] 0.0
      %425 = vst [vmem:[#allocation2 + $0x40] sm:$0xff] 0.0
      %426 = vst [vmem:[#allocation2 + $0x48] sm:$0xff] 0.0
      %427 = vst [vmem:[#allocation2 + $0x50] sm:$0x3] 0.0
      %428 = vst [vmem:[#allocation2 + $0x58] sm:$0x3] 0.0
      %429 = vst [vmem:[#allocation2 + $0x60] sm:$0xff] 0.0
      %430 = vst [vmem:[#allocation2 + $0x68] sm:$0xff] 0.0
      %431 = vst [vmem:[#allocation2 + $0x70] sm:$0xff] 0.0
      %432 = vst [vmem:[#allocation2 + $0x78] sm:$0xff] 0.0
      %433 = vst [vmem:[#allocation2 + $0x80] sm:$0x3] 0.0
      %434 = vst [vmem:[#allocation2 + $0x88] sm:$0x3] 0.0
      %435 = vst [vmem:[#allocation2 + $0x90] sm:$0xff] 0.0
      %436 = vst [vmem:[#allocation2 + $0x98] sm:$0xff] 0.0
      %437 = vst [vmem:[#allocation2 + $0xa0] sm:$0xff] 0.0
      %438 = vst [vmem:[#allocation2 + $0xa8] sm:$0xff] 0.0
      %439 = vst [vmem:[#allocation2 + $0xb0] sm:$0x3] 0.0
      %440 = vst [vmem:[#allocation2 + $0xb8] sm:$0x3] 0.0
      %v441 = vld [vmem:[%s360] sm:$0xff]
      %v442 = vld [vmem:[%s360 + $0x8] sm:$0xff]
      %v443 = vld [vmem:[%s360 + $0x10] sm:$0xff]
      %v444 = vld [vmem:[%s360 + $0x18] sm:$0xff]
      %v445 = vld [vmem:[%s360 + $0x20] sm:$0xff]
      %v446 = vld [vmem:[%s360 + $0x28] sm:$0xff]
      %v447 = vld [vmem:[%s360 + $0x30] sm:$0xff]
      %v448 = vld [vmem:[%s360 + $0x38] sm:$0xff]
      %vm457 = vcmask 1040384
      %v458 = vrot.slane %v441, 7
      %v459 = vrot.slane %v442, 7
      %v460 = vrot.slane %v443, 7
      %v461 = vsel %vm457, %v458, %v460
      %v462 = vrot.slane %v444, 7
      %v463 = vsel %vm457, %v459, %v462
      %v464 = vrot.slane %v445, 7
      %v465 = vrot.slane %v446, 7
      %v466 = vrot.slane %v447, 7
      %v467 = vsel %vm457, %v464, %v466
      %v468 = vrot.slane %v448, 7
      %v469 = vsel %vm457, %v465, %v468
      %s482 = scalar_lea.vmem [#allocation2], 48
      %483 = vst [vmem:[%s482] sm:$0xfe] %v458
      %484 = vst [vmem:[%s482 + $0x8] sm:$0xfe] %v459
      %485 = vst [vmem:[%s482 + $0x10] sm:$0xff] %v461
      %486 = vst [vmem:[%s482 + $0x18] sm:$0xff] %v463
      %487 = vst [vmem:[%s482 + $0x20] sm:$0x1] %v460
      %488 = vst [vmem:[%s482 + $0x28] sm:$0x1] %v462
      %489 = vst [vmem:[%s482 + $0x30] sm:$0xfe] %v464
      %490 = vst [vmem:[%s482 + $0x38] sm:$0xfe] %v465
      %491 = vst [vmem:[%s482 + $0x40] sm:$0xff] %v467
      %492 = vst [vmem:[%s482 + $0x48] sm:$0xff] %v469
      %493 = vst [vmem:[%s482 + $0x50] sm:$0x1] %v466
      %494 = vst [vmem:[%s482 + $0x58] sm:$0x1] %v468
      %p495 = scmp.gt.s32.totalorder %s416, 0
      // Predicated region
      $region37: #{block3d_forward.4} parent=35 // pred_check
        %p496 = pneg %p495
      $region38: #{block3d_forward.4} parent=35 // pred_check_branch
        %498 = sbr.rel (%p496) target = $region40
      $region39: #{block3d_forward.4} parent=35 // pred_region
        %v499 = vld [vmem:[%s374] sm:$0xff]
        %v500 = vld [vmem:[%s374 + $0x8] sm:$0xff]
        %v501 = vld [vmem:[%s374 + $0x10] sm:$0xff]
        %v502 = vld [vmem:[%s374 + $0x18] sm:$0xff]
        %v507 = vrot.slane %v499, 7
        %v508 = vrot.slane %v500, 7
        %v509 = vrot.slane %v501, 7
        %v510 = vsel %vm457, %v507, %v509
        %v511 = vrot.slane %v502, 7
        %v512 = vsel %vm457, %v508, %v511
        %519 = vst [vmem:[#allocation2] sm:$0xfe] %v507
        %520 = vst [vmem:[#allocation2 + $0x8] sm:$0xfe] %v508
        %521 = vst [vmem:[#allocation2 + $0x10] sm:$0xff] %v510
        %522 = vst [vmem:[#allocation2 + $0x18] sm:$0xff] %v512
        %523 = vst [vmem:[#allocation2 + $0x20] sm:$0x1] %v509
        %524 = vst [vmem:[#allocation2 + $0x28] sm:$0x1] %v511
      $region40: #{block3d_forward.4} parent=35 // pred_fallthru
        _
      %s525 = sadd.s32 %s416, 2
      %p526 = scmp.lt.s32.totalorder %s525, 4
      // Predicated region
      $region41: #{block3d_forward.4} parent=35 // pred_check
        %p527 = pneg %p526
      $region42: #{block3d_forward.4} parent=35 // pred_check_branch
        %529 = sbr.rel (%p527) target = $region44
      $region43: #{block3d_forward.4} parent=35 // pred_region
        %v530 = vld [vmem:[%s391] sm:$0xff]
        %v531 = vld [vmem:[%s391 + $0x8] sm:$0xff]
        %v532 = vld [vmem:[%s391 + $0x10] sm:$0xff]
        %v533 = vld [vmem:[%s391 + $0x18] sm:$0xff]
        %v538 = vrot.slane %v530, 7
        %v539 = vrot.slane %v531, 7
        %v540 = vrot.slane %v532, 7
        %v541 = vsel %vm457, %v538, %v540
        %v542 = vrot.slane %v533, 7
        %v543 = vsel %vm457, %v539, %v542
        %s550 = scalar_lea.vmem [#allocation2], 144
        %551 = vst [vmem:[%s550] sm:$0xfe] %v538
        %552 = vst [vmem:[%s550 + $0x8] sm:$0xfe] %v539
        %553 = vst [vmem:[%s550 + $0x10] sm:$0xff] %v541
        %554 = vst [vmem:[%s550 + $0x18] sm:$0xff] %v543
        %555 = vst [vmem:[%s550 + $0x20] sm:$0x1] %v540
        %556 = vst [vmem:[%s550 + $0x28] sm:$0x1] %v542
      $region44: #{block3d_forward.4} parent=35 // pred_fallthru
        _
      %v557 = vld [vmem:[#allocation2] sm:$0xff]
      %v558 = vld [vmem:[#allocation2 + $0x8] sm:$0xff]
      %v559 = vld [vmem:[#allocation2 + $0x10] sm:$0xff]
      %v560 = vld [vmem:[#allocation2 + $0x18] sm:$0xff]
      %v561 = vld [vmem:[#allocation2 + $0x30] sm:$0xff]
      %v562 = vld [vmem:[#allocation2 + $0x38] sm:$0xff]
      %v563 = vld [vmem:[#allocation2 + $0x40] sm:$0xff]
      %v564 = vld [vmem:[#allocation2 + $0x48] sm:$0xff]
      %v565 = vld [vmem:[%s3] sm:$0xff]
      %v566 = vld [vmem:[%s3 + $0x8] sm:$0xff]
      %v567 = vld [vmem:[%s3 + $0x10] sm:$0xff]
      %v568 = vld [vmem:[%s3 + $0x18] sm:$0xff]
      %v569 = vld [vmem:[%s3 + $0x20] sm:$0xff]
      %v570 = vld [vmem:[%s3 + $0x28] sm:$0xff]
      %v571 = vld [vmem:[%s3 + $0x30] sm:$0xff]
      %v572 = vld [vmem:[%s3 + $0x38] sm:$0xff]
      %v573 = vld [vmem:[%s3 + $0x40] sm:$0xff]
      %v574 = vld [vmem:[%s3 + $0x48] sm:$0xff]
      %v575 = vld [vmem:[%s3 + $0x50] sm:$0xff]
      %v576 = vld [vmem:[%s3 + $0x58] sm:$0xff]
      %v577 = vld [vmem:[%s3 + $0x60] sm:$0xff]
      %v578 = vld [vmem:[%s3 + $0x68] sm:$0xff]
      %v579 = vld [vmem:[%s3 + $0x70] sm:$0xff]
      %v580 = vld [vmem:[%s3 + $0x78] sm:$0xff]
      %v581 = vld [vmem:[%s3 + $0x80] sm:$0xff]
      %v582 = vld [vmem:[%s3 + $0x88] sm:$0xff]
      %v583 = vld [vmem:[%s3 + $0x90] sm:$0xff]
      %v584 = vld [vmem:[%s3 + $0x98] sm:$0xff]
      %v585 = vld [vmem:[%s3 + $0xa0] sm:$0xff]
      %v586 = vld [vmem:[%s3 + $0xa8] sm:$0xff]
      %v587 = vld [vmem:[%s3 + $0xb0] sm:$0xff]
      %v588 = vld [vmem:[%s3 + $0xb8] sm:$0xff]
      %v589 = vld [vmem:[%s3 + $0xc0] sm:$0xff]
      %v590 = vld [vmem:[%s3 + $0xc8] sm:$0xff]
      %v591 = vld [vmem:[%s3 + $0xd0] sm:$0xff]
      %v592 = vld [vmem:[%s3 + $0xd8] sm:$0xff]
      %v593 = vld [vmem:[%s3 + $0xe0] sm:$0xff]
      %v594 = vld [vmem:[%s3 + $0xe8] sm:$0xff]
      %v595 = vld [vmem:[%s3 + $0xf0] sm:$0xff]
      %v596 = vld [vmem:[%s3 + $0xf8] sm:$0xff]
      %v597 = vld [vmem:[%s3 + $0x100] sm:$0xff]
      %v598 = vld [vmem:[%s3 + $0x108] sm:$0xff]
      %v599 = vld [vmem:[%s3 + $0x110] sm:$0xff]
      %v600 = vld [vmem:[%s3 + $0x118] sm:$0xff]
      %v601 = vld [vmem:[%s3 + $0x120] sm:$0xff]
      %v602 = vld [vmem:[%s3 + $0x128] sm:$0xff]
      %v603 = vld [vmem:[%s3 + $0x130] sm:$0xff]
      %v604 = vld [vmem:[%s3 + $0x138] sm:$0xff]
      %v605 = vld [vmem:[%s3 + $0x140] sm:$0xff]
      %v606 = vld [vmem:[%s3 + $0x148] sm:$0xff]
      %v607 = vld [vmem:[%s3 + $0x150] sm:$0xff]
      %v608 = vld [vmem:[%s3 + $0x158] sm:$0xff]
      %v609 = vld [vmem:[%s3 + $0x160] sm:$0xff]
      %v610 = vld [vmem:[%s3 + $0x168] sm:$0xff]
      %v611 = vld [vmem:[%s3 + $0x170] sm:$0xff]
      %v612 = vld [vmem:[%s3 + $0x178] sm:$0xff]
      %v613 = vld [vmem:[%s3 + $0x180] sm:$0xff]
      %v614 = vld [vmem:[%s3 + $0x188] sm:$0xff]
      %v615 = vld [vmem:[%s3 + $0x190] sm:$0xff]
      %v616 = vld [vmem:[%s3 + $0x198] sm:$0xff]
      %v617 = vld [vmem:[%s3 + $0x1a0] sm:$0xff]
      %v618 = vld [vmem:[%s3 + $0x1a8] sm:$0xff]
      %v619 = vld [vmem:[%s3 + $0x1b0] sm:$0xff]
      %v620 = vld [vmem:[%s3 + $0x1b8] sm:$0xff]
      %v621 = vld [vmem:[%s3 + $0x1c0] sm:$0xff]
      %v622 = vld [vmem:[%s3 + $0x1c8] sm:$0xff]
      %v623 = vld [vmem:[%s3 + $0x1d0] sm:$0xff]
      %v624 = vld [vmem:[%s3 + $0x1d8] sm:$0xff]
      %v625 = vld [vmem:[%s3 + $0x1e0] sm:$0xff]
      %v626 = vld [vmem:[%s3 + $0x1e8] sm:$0xff]
      %v627 = vld [vmem:[%s3 + $0x1f0] sm:$0xff]
      %v628 = vld [vmem:[%s3 + $0x1f8] sm:$0xff]
      %v629 = vld [vmem:[#allocation2] sm:$0xfe]
      %v630 = vld [vmem:[#allocation2 + $0x8] sm:$0xfe]
      %v631 = vld [vmem:[#allocation2 + $0x20] sm:$0x1]
      %v632 = vld [vmem:[#allocation2 + $0x28] sm:$0x1]
      %v633 = vld [vmem:[#allocation2 + $0x30] sm:$0xfe]
      %v634 = vld [vmem:[#allocation2 + $0x38] sm:$0xfe]
      %v635 = vld [vmem:[#allocation2 + $0x50] sm:$0x1]
      %v636 = vld [vmem:[#allocation2 + $0x58] sm:$0x1]
      %vm649 = vcmask 1046528
      %v650 = vrot.slane %v629, 1
      %v651 = vrot.slane %v559, 1
      %v652 = vsel %vm649, %v650, %v651
      %v653 = vrot.slane %v630, 1
      %v654 = vrot.slane %v560, 1
      %v655 = vsel %vm649, %v653, %v654
      %v656 = vrot.slane %v631, 1
      %v657 = vsel %vm649, %v651, %v656
      %v658 = vrot.slane %v632, 1
      %v659 = vsel %vm649, %v654, %v658
      %v660 = vrot.slane %v633, 1
      %v661 = vrot.slane %v563, 1
      %v662 = vsel %vm649, %v660, %v661
      %v663 = vrot.slane %v634, 1
      %v664 = vrot.slane %v564, 1
      %v665 = vsel %vm649, %v663, %v664
      %v666 = vrot.slane %v635, 1
      %v667 = vsel %vm649, %v661, %v666
      %v668 = vrot.slane %v636, 1
      %v669 = vsel %vm649, %v664, %v668
      %v678 = vld [vmem:[%s3 + $0x200] sm:$0xff]
      %v679 = vld [vmem:[%s3 + $0x208] sm:$0xff]
      %v680 = vld [vmem:[%s3 + $0x210] sm:$0xff]
      %v681 = vld [vmem:[%s3 + $0x218] sm:$0xff]
      %v682 = vld [vmem:[%s3 + $0x220] sm:$0xff]
      %v683 = vld [vmem:[%s3 + $0x228] sm:$0xff]
      %v684 = vld [vmem:[%s3 + $0x230] sm:$0xff]
      %v685 = vld [vmem:[%s3 + $0x238] sm:$0xff]
      %v686 = vld [vmem:[%s3 + $0x240] sm:$0xff]
      %v687 = vld [vmem:[%s3 + $0x248] sm:$0xff]
      %v688 = vld [vmem:[%s3 + $0x250] sm:$0xff]
      %v689 = vld [vmem:[%s3 + $0x258] sm:$0xff]
      %v690 = vld [vmem:[%s3 + $0x260] sm:$0xff]
      %v691 = vld [vmem:[%s3 + $0x268] sm:$0xff]
      %v692 = vld [vmem:[%s3 + $0x270] sm:$0xff]
      %v693 = vld [vmem:[%s3 + $0x278] sm:$0xff]
      %v694 = vld [vmem:[%s3 + $0x280] sm:$0xff]
      %v695 = vld [vmem:[%s3 + $0x288] sm:$0xff]
      %v696 = vld [vmem:[%s3 + $0x290] sm:$0xff]
      %v697 = vld [vmem:[%s3 + $0x298] sm:$0xff]
      %v698 = vld [vmem:[%s3 + $0x2a0] sm:$0xff]
      %v699 = vld [vmem:[%s3 + $0x2a8] sm:$0xff]
      %v700 = vld [vmem:[%s3 + $0x2b0] sm:$0xff]
      %v701 = vld [vmem:[%s3 + $0x2b8] sm:$0xff]
      %v702 = vld [vmem:[%s3 + $0x2c0] sm:$0xff]
      %v703 = vld [vmem:[%s3 + $0x2c8] sm:$0xff]
      %v704 = vld [vmem:[%s3 + $0x2d0] sm:$0xff]
      %v705 = vld [vmem:[%s3 + $0x2d8] sm:$0xff]
      %v706 = vld [vmem:[%s3 + $0x2e0] sm:$0xff]
      %v707 = vld [vmem:[%s3 + $0x2e8] sm:$0xff]
      %v708 = vld [vmem:[%s3 + $0x2f0] sm:$0xff]
      %v709 = vld [vmem:[%s3 + $0x2f8] sm:$0xff]
      %v710 = vld [vmem:[%s3 + $0x300] sm:$0xff]
      %v711 = vld [vmem:[%s3 + $0x308] sm:$0xff]
      %v712 = vld [vmem:[%s3 + $0x310] sm:$0xff]
      %v713 = vld [vmem:[%s3 + $0x318] sm:$0xff]
      %v714 = vld [vmem:[%s3 + $0x320] sm:$0xff]
      %v715 = vld [vmem:[%s3 + $0x328] sm:$0xff]
      %v716 = vld [vmem:[%s3 + $0x330] sm:$0xff]
      %v717 = vld [vmem:[%s3 + $0x338] sm:$0xff]
      %v718 = vld [vmem:[%s3 + $0x340] sm:$0xff]
      %v719 = vld [vmem:[%s3 + $0x348] sm:$0xff]
      %v720 = vld [vmem:[%s3 + $0x350] sm:$0xff]
      %v721 = vld [vmem:[%s3 + $0x358] sm:$0xff]
      %v722 = vld [vmem:[%s3 + $0x360] sm:$0xff]
      %v723 = vld [vmem:[%s3 + $0x368] sm:$0xff]
      %v724 = vld [vmem:[%s3 + $0x370] sm:$0xff]
      %v725 = vld [vmem:[%s3 + $0x378] sm:$0xff]
      %v726 = vld [vmem:[%s3 + $0x380] sm:$0xff]
      %v727 = vld [vmem:[%s3 + $0x388] sm:$0xff]
      %v728 = vld [vmem:[%s3 + $0x390] sm:$0xff]
      %v729 = vld [vmem:[%s3 + $0x398] sm:$0xff]
      %v730 = vld [vmem:[%s3 + $0x3a0] sm:$0xff]
      %v731 = vld [vmem:[%s3 + $0x3a8] sm:$0xff]
      %v732 = vld [vmem:[%s3 + $0x3b0] sm:$0xff]
      %v733 = vld [vmem:[%s3 + $0x3b8] sm:$0xff]
      %v734 = vld [vmem:[%s3 + $0x3c0] sm:$0xff]
      %v735 = vld [vmem:[%s3 + $0x3c8] sm:$0xff]
      %v736 = vld [vmem:[%s3 + $0x3d0] sm:$0xff]
      %v737 = vld [vmem:[%s3 + $0x3d8] sm:$0xff]
      %v738 = vld [vmem:[%s3 + $0x3e0] sm:$0xff]
      %v739 = vld [vmem:[%s3 + $0x3e8] sm:$0xff]
      %v740 = vld [vmem:[%s3 + $0x3f0] sm:$0xff]
      %v741 = vld [vmem:[%s3 + $0x3f8] sm:$0xff]
      %742 = vmatprep.subr.mxu0 %v679
      %743 = vmatpush1.msra.mxu0 %v678
      %744 = vmatprep.subr.mxu0 %v681
      %745 = vmatpush1.msra.mxu0 %v680
      %746 = vmatprep.subr.mxu0 %v683
      %747 = vmatpush1.msra.mxu0 %v682
      %748 = vmatprep.subr.mxu0 %v685
      %749 = vmatpush1.msra.mxu0 %v684
      %750 = vmatprep.subr.mxu0 %v687
      %751 = vmatpush1.msra.mxu0 %v686
      %752 = vmatprep.subr.mxu0 %v689
      %753 = vmatpush1.msra.mxu0 %v688
      %754 = vmatprep.subr.mxu0 %v691
      %755 = vmatpush1.msra.mxu0 %v690
      %756 = vmatprep.subr.mxu0 %v693
      %757 = vmatpush1.msra.mxu0 %v692
      %758 = vmatprep.subr.mxu0 %v695
      %759 = vmatpush1.msra.mxu0 %v694
      %760 = vmatprep.subr.mxu0 %v697
      %761 = vmatpush1.msra.mxu0 %v696
      %762 = vmatprep.subr.mxu0 %v699
      %763 = vmatpush1.msra.mxu0 %v698
      %764 = vmatprep.subr.mxu0 %v701
      %765 = vmatpush1.msra.mxu0 %v700
      %766 = vmatprep.subr.mxu0 %v703
      %767 = vmatpush1.msra.mxu0 %v702
      %768 = vmatprep.subr.mxu0 %v705
      %769 = vmatpush1.msra.mxu0 %v704
      %770 = vmatprep.subr.mxu0 %v707
      %771 = vmatpush1.msra.mxu0 %v706
      %772 = vmatprep.subr.mxu0 %v709
      %773 = vmatpush1.msra.mxu0 %v708
      %774 = vmatprep.subr.mxu0 %v711
      %775 = vmatpush1.msra.mxu0 %v710
      %776 = vmatprep.subr.mxu0 %v713
      %777 = vmatpush1.msra.mxu0 %v712
      %778 = vmatprep.subr.mxu0 %v715
      %779 = vmatpush1.msra.mxu0 %v714
      %780 = vmatprep.subr.mxu0 %v717
      %781 = vmatpush1.msra.mxu0 %v716
      %782 = vmatprep.subr.mxu0 %v719
      %783 = vmatpush1.msra.mxu0 %v718
      %784 = vmatprep.subr.mxu0 %v721
      %785 = vmatpush1.msra.mxu0 %v720
      %786 = vmatprep.subr.mxu0 %v723
      %787 = vmatpush1.msra.mxu0 %v722
      %788 = vmatprep.subr.mxu0 %v725
      %789 = vmatpush1.msra.mxu0 %v724
      %790 = vmatprep.subr.mxu0 %v727
      %791 = vmatpush1.msra.mxu0 %v726
      %792 = vmatprep.subr.mxu0 %v729
      %793 = vmatpush1.msra.mxu0 %v728
      %794 = vmatprep.subr.mxu0 %v731
      %795 = vmatpush1.msra.mxu0 %v730
      %796 = vmatprep.subr.mxu0 %v733
      %797 = vmatpush1.msra.mxu0 %v732
      %798 = vmatprep.subr.mxu0 %v735
      %799 = vmatpush1.msra.mxu0 %v734
      %800 = vmatprep.subr.mxu0 %v737
      %801 = vmatpush1.msra.mxu0 %v736
      %802 = vmatprep.subr.mxu0 %v739
      %803 = vmatpush1.msra.mxu0 %v738
      %804 = vmatprep.subr.mxu0 %v741
      %805 = vmatpush1.msra.mxu0 %v740
      %806 = vmatprep.mubr.f32.mxu0 %v655
      %807 = vmatmul.mubr.f32.gmra.mrb[0].mxu0 %v652
      %v808 = vpop.f32.mrb[0].mxu0
      %v809 = vadd.f32 0.0, %v808
      %v810 = vpop.f32.mrb[0].mxu0
      %v811 = vadd.f32 0.0, %v810
      %812 = vmatprep.mubr.f32.mxu0 %v659
      %813 = vmatmul.mubr.f32.gmra.mrb[0].mxu0 %v657
      %v814 = vpop.f32.mrb[0].mxu0
      %v815 = vadd.f32 0.0, %v814
      %v816 = vpop.f32.mrb[0].mxu0
      %v817 = vadd.f32 0.0, %v816
      %818 = vmatprep.mubr.f32.mxu0 %v665
      %819 = vmatmul.mubr.f32.gmra.mrb[0].mxu0 %v662
      %v820 = vpop.f32.mrb[0].mxu0
      %v821 = vadd.f32 0.0, %v820
      %v822 = vpop.f32.mrb[0].mxu0
      %v823 = vadd.f32 0.0, %v822
      %824 = vmatprep.mubr.f32.mxu0 %v669
      %825 = vmatmul.mubr.f32.gmra.mrb[0].mxu0 %v667
      %v826 = vpop.f32.mrb[0].mxu0
      %v827 = vadd.f32 0.0, %v826
      %v828 = vpop.f32.mrb[0].mxu0
      %v829 = vadd.f32 0.0, %v828
      %830 = vdwg.mxu0
      %831 = vmatprep.subr.mxu0 %v566
      %832 = vmatpush1.msra.mxu0 %v565
      %833 = vmatprep.subr.mxu0 %v568
      %834 = vmatpush1.msra.mxu0 %v567
      %835 = vmatprep.subr.mxu0 %v570
      %836 = vmatpush1.msra.mxu0 %v569
      %837 = vmatprep.subr.mxu0 %v572
      %838 = vmatpush1.msra.mxu0 %v571
      %839 = vmatprep.subr.mxu0 %v574
      %840 = vmatpush1.msra.mxu0 %v573
      %841 = vmatprep.subr.mxu0 %v576
      %842 = vmatpush1.msra.mxu0 %v575
      %843 = vmatprep.subr.mxu0 %v578
      %844 = vmatpush1.msra.mxu0 %v577
      %845 = vmatprep.subr.mxu0 %v580
      %846 = vmatpush1.msra.mxu0 %v579
      %847 = vmatprep.subr.mxu0 %v582
      %848 = vmatpush1.msra.mxu0 %v581
      %849 = vmatprep.subr.mxu0 %v584
      %850 = vmatpush1.msra.mxu0 %v583
      %851 = vmatprep.subr.mxu0 %v586
      %852 = vmatpush1.msra.mxu0 %v585
      %853 = vmatprep.subr.mxu0 %v588
      %854 = vmatpush1.msra.mxu0 %v587
      %855 = vmatprep.subr.mxu0 %v590
      %856 = vmatpush1.msra.mxu0 %v589
      %857 = vmatprep.subr.mxu0 %v592
      %858 = vmatpush1.msra.mxu0 %v591
      %859 = vmatprep.subr.mxu0 %v594
      %860 = vmatpush1.msra.mxu0 %v593
      %861 = vmatprep.subr.mxu0 %v596
      %862 = vmatpush1.msra.mxu0 %v595
      %863 = vmatprep.subr.mxu0 %v598
      %864 = vmatpush1.msra.mxu0 %v597
      %865 = vmatprep.subr.mxu0 %v600
      %866 = vmatpush1.msra.mxu0 %v599
      %867 = vmatprep.subr.mxu0 %v602
      %868 = vmatpush1.msra.mxu0 %v601
      %869 = vmatprep.subr.mxu0 %v604
      %870 = vmatpush1.msra.mxu0 %v603
      %871 = vmatprep.subr.mxu0 %v606
      %872 = vmatpush1.msra.mxu0 %v605
      %873 = vmatprep.subr.mxu0 %v608
      %874 = vmatpush1.msra.mxu0 %v607
      %875 = vmatprep.subr.mxu0 %v610
      %876 = vmatpush1.msra.mxu0 %v609
      %877 = vmatprep.subr.mxu0 %v612
      %878 = vmatpush1.msra.mxu0 %v611
      %879 = vmatprep.subr.mxu0 %v614
      %880 = vmatpush1.msra.mxu0 %v613
      %881 = vmatprep.subr.mxu0 %v616
      %882 = vmatpush1.msra.mxu0 %v615
      %883 = vmatprep.subr.mxu0 %v618
      %884 = vmatpush1.msra.mxu0 %v617
      %885 = vmatprep.subr.mxu0 %v620
      %886 = vmatpush1.msra.mxu0 %v619
      %887 = vmatprep.subr.mxu0 %v622
      %888 = vmatpush1.msra.mxu0 %v621
      %889 = vmatprep.subr.mxu0 %v624
      %890 = vmatpush1.msra.mxu0 %v623
      %891 = vmatprep.subr.mxu0 %v626
      %892 = vmatpush1.msra.mxu0 %v625
      %893 = vmatprep.subr.mxu0 %v628
      %894 = vmatpush1.msra.mxu0 %v627
      %895 = vmatprep.mubr.f32.mxu0 %v558
      %896 = vmatmul.mubr.f32.gmra.mrb[0].mxu0 %v557
      %v897 = vpop.f32.mrb[0].mxu0
      %v898 = vadd.f32 %v809, %v897
      %v899 = vpop.f32.mrb[0].mxu0
      %v900 = vadd.f32 %v811, %v899
      %901 = vmatprep.mubr.f32.mxu0 %v560
      %902 = vmatmul.mubr.f32.gmra.mrb[0].mxu0 %v559
      %v903 = vpop.f32.mrb[0].mxu0
      %v904 = vadd.f32 %v815, %v903
      %v905 = vpop.f32.mrb[0].mxu0
      %v906 = vadd.f32 %v817, %v905
      %907 = vmatprep.mubr.f32.mxu0 %v562
      %908 = vmatmul.mubr.f32.gmra.mrb[0].mxu0 %v561
      %v909 = vpop.f32.mrb[0].mxu0
      %v910 = vadd.f32 %v821, %v909
      %v911 = vpop.f32.mrb[0].mxu0
      %v912 = vadd.f32 %v823, %v911
      %913 = vmatprep.mubr.f32.mxu0 %v564
      %914 = vmatmul.mubr.f32.gmra.mrb[0].mxu0 %v563
      %v915 = vpop.f32.mrb[0].mxu0
      %v916 = vadd.f32 %v827, %v915
      %v917 = vpop.f32.mrb[0].mxu0
      %v918 = vadd.f32 %v829, %v917
      %919 = vdwg.mxu0
      %v920 = vld [vmem:[#allocation2] sm:$0xfc]
      %v921 = vld [vmem:[#allocation2 + $0x8] sm:$0xfc]
      %v922 = vld [vmem:[#allocation2 + $0x20] sm:$0x3]
      %v923 = vld [vmem:[#allocation2 + $0x28] sm:$0x3]
      %v924 = vld [vmem:[#allocation2 + $0x30] sm:$0xfc]
      %v925 = vld [vmem:[#allocation2 + $0x38] sm:$0xfc]
      %v926 = vld [vmem:[#allocation2 + $0x50] sm:$0x3]
      %v927 = vld [vmem:[#allocation2 + $0x58] sm:$0x3]
      %vm936 = vcmask 1045504
      %v937 = vrot.slane %v920, 2
      %v938 = vrot.slane %v559, 2
      %v939 = vsel %vm936, %v937, %v938
      %v940 = vrot.slane %v921, 2
      %v941 = vrot.slane %v560, 2
      %v942 = vsel %vm936, %v940, %v941
      %v943 = vrot.slane %v922, 2
      %v944 = vsel %vm936, %v938, %v943
      %v945 = vrot.slane %v923, 2
      %v946 = vsel %vm936, %v941, %v945
      %v947 = vrot.slane %v924, 2
      %v948 = vrot.slane %v563, 2
      %v949 = vsel %vm936, %v947, %v948
      %v950 = vrot.slane %v925, 2
      %v951 = vrot.slane %v564, 2
      %v952 = vsel %vm936, %v950, %v951
      %v953 = vrot.slane %v926, 2
      %v954 = vsel %vm936, %v948, %v953
      %v955 = vrot.slane %v927, 2
      %v956 = vsel %vm936, %v951, %v955
      %v965 = vld [vmem:[%s3 + $0x400] sm:$0xff]
      %v966 = vld [vmem:[%s3 + $0x408] sm:$0xff]
      %v967 = vld [vmem:[%s3 + $0x410] sm:$0xff]
      %v968 = vld [vmem:[%s3 + $0x418] sm:$0xff]
      %v969 = vld [vmem:[%s3 + $0x420] sm:$0xff]
      %v970 = vld [vmem:[%s3 + $0x428] sm:$0xff]
      %v971 = vld [vmem:[%s3 + $0x430] sm:$0xff]
      %v972 = vld [vmem:[%s3 + $0x438] sm:$0xff]
      %v973 = vld [vmem:[%s3 + $0x440] sm:$0xff]
      %v974 = vld [vmem:[%s3 + $0x448] sm:$0xff]
      %v975 = vld [vmem:[%s3 + $0x450] sm:$0xff]
      %v976 = vld [vmem:[%s3 + $0x458] sm:$0xff]
      %v977 = vld [vmem:[%s3 + $0x460] sm:$0xff]
      %v978 = vld [vmem:[%s3 + $0x468] sm:$0xff]
      %v979 = vld [vmem:[%s3 + $0x470] sm:$0xff]
      %v980 = vld [vmem:[%s3 + $0x478] sm:$0xff]
      %v981 = vld [vmem:[%s3 + $0x480] sm:$0xff]
      %v982 = vld [vmem:[%s3 + $0x488] sm:$0xff]
      %v983 = vld [vmem:[%s3 + $0x490] sm:$0xff]
      %v984 = vld [vmem:[%s3 + $0x498] sm:$0xff]
      %v985 = vld [vmem:[%s3 + $0x4a0] sm:$0xff]
      %v986 = vld [vmem:[%s3 + $0x4a8] sm:$0xff]
      %v987 = vld [vmem:[%s3 + $0x4b0] sm:$0xff]
      %v988 = vld [vmem:[%s3 + $0x4b8] sm:$0xff]
      %v989 = vld [vmem:[%s3 + $0x4c0] sm:$0xff]
      %v990 = vld [vmem:[%s3 + $0x4c8] sm:$0xff]
      %v991 = vld [vmem:[%s3 + $0x4d0] sm:$0xff]
      %v992 = vld [vmem:[%s3 + $0x4d8] sm:$0xff]
      %v993 = vld [vmem:[%s3 + $0x4e0] sm:$0xff]
      %v994 = vld [vmem:[%s3 + $0x4e8] sm:$0xff]
      %v995 = vld [vmem:[%s3 + $0x4f0] sm:$0xff]
      %v996 = vld [vmem:[%s3 + $0x4f8] sm:$0xff]
      %v997 = vld [vmem:[%s3 + $0x500] sm:$0xff]
      %v998 = vld [vmem:[%s3 + $0x508] sm:$0xff]
      %v999 = vld [vmem:[%s3 + $0x510] sm:$0xff]
      %v1000 = vld [vmem:[%s3 + $0x518] sm:$0xff]
      %v1001 = vld [vmem:[%s3 + $0x520] sm:$0xff]
      %v1002 = vld [vmem:[%s3 + $0x528] sm:$0xff]
      %v1003 = vld [vmem:[%s3 + $0x530] sm:$0xff]
      %v1004 = vld [vmem:[%s3 + $0x538] sm:$0xff]
      %v1005 = vld [vmem:[%s3 + $0x540] sm:$0xff]
      %v1006 = vld [vmem:[%s3 + $0x548] sm:$0xff]
      %v1007 = vld [vmem:[%s3 + $0x550] sm:$0xff]
      %v1008 = vld [vmem:[%s3 + $0x558] sm:$0xff]
      %v1009 = vld [vmem:[%s3 + $0x560] sm:$0xff]
      %v1010 = vld [vmem:[%s3 + $0x568] sm:$0xff]
      %v1011 = vld [vmem:[%s3 + $0x570] sm:$0xff]
      %v1012 = vld [vmem:[%s3 + $0x578] sm:$0xff]
      %v1013 = vld [vmem:[%s3 + $0x580] sm:$0xff]
      %v1014 = vld [vmem:[%s3 + $0x588] sm:$0xff]
      %v1015 = vld [vmem:[%s3 + $0x590] sm:$0xff]
      %v1016 = vld [vmem:[%s3 + $0x598] sm:$0xff]
      %v1017 = vld [vmem:[%s3 + $0x5a0] sm:$0xff]
      %v1018 = vld [vmem:[%s3 + $0x5a8] sm:$0xff]
      %v1019 = vld [vmem:[%s3 + $0x5b0] sm:$0xff]
      %v1020 = vld [vmem:[%s3 + $0x5b8] sm:$0xff]
      %v1021 = vld [vmem:[%s3 + $0x5c0] sm:$0xff]
      %v1022 = vld [vmem:[%s3 + $0x5c8] sm:$0xff]
      %v1023 = vld [vmem:[%s3 + $0x5d0] sm:$0xff]
      %v1024 = vld [vmem:[%s3 + $0x5d8] sm:$0xff]
      %v1025 = vld [vmem:[%s3 + $0x5e0] sm:$0xff]
      %v1026 = vld [vmem:[%s3 + $0x5e8] sm:$0xff]
      %v1027 = vld [vmem:[%s3 + $0x5f0] sm:$0xff]
      %v1028 = vld [vmem:[%s3 + $0x5f8] sm:$0xff]
      %1029 = vmatprep.subr.mxu0 %v966
      %1030 = vmatpush1.msra.mxu0 %v965
      %1031 = vmatprep.subr.mxu0 %v968
      %1032 = vmatpush1.msra.mxu0 %v967
      %1033 = vmatprep.subr.mxu0 %v970
      %1034 = vmatpush1.msra.mxu0 %v969
      %1035 = vmatprep.subr.mxu0 %v972
      %1036 = vmatpush1.msra.mxu0 %v971
      %1037 = vmatprep.subr.mxu0 %v974
      %1038 = vmatpush1.msra.mxu0 %v973
      %1039 = vmatprep.subr.mxu0 %v976
      %1040 = vmatpush1.msra.mxu0 %v975
      %1041 = vmatprep.subr.mxu0 %v978
      %1042 = vmatpush1.msra.mxu0 %v977
      %1043 = vmatprep.subr.mxu0 %v980
      %1044 = vmatpush1.msra.mxu0 %v979
      %1045 = vmatprep.subr.mxu0 %v982
      %1046 = vmatpush1.msra.mxu0 %v981
      %1047 = vmatprep.subr.mxu0 %v984
      %1048 = vmatpush1.msra.mxu0 %v983
      %1049 = vmatprep.subr.mxu0 %v986
      %1050 = vmatpush1.msra.mxu0 %v985
      %1051 = vmatprep.subr.mxu0 %v988
      %1052 = vmatpush1.msra.mxu0 %v987
      %1053 = vmatprep.subr.mxu0 %v990
      %1054 = vmatpush1.msra.mxu0 %v989
      %1055 = vmatprep.subr.mxu0 %v992
      %1056 = vmatpush1.msra.mxu0 %v991
      %1057 = vmatprep.subr.mxu0 %v994
      %1058 = vmatpush1.msra.mxu0 %v993
      %1059 = vmatprep.subr.mxu0 %v996
      %1060 = vmatpush1.msra.mxu0 %v995
      %1061 = vmatprep.subr.mxu0 %v998
      %1062 = vmatpush1.msra.mxu0 %v997
      %1063 = vmatprep.subr.mxu0 %v1000
      %1064 = vmatpush1.msra.mxu0 %v999
      %1065 = vmatprep.subr.mxu0 %v1002
      %1066 = vmatpush1.msra.mxu0 %v1001
      %1067 = vmatprep.subr.mxu0 %v1004
      %1068 = vmatpush1.msra.mxu0 %v1003
      %1069 = vmatprep.subr.mxu0 %v1006
      %1070 = vmatpush1.msra.mxu0 %v1005
      %1071 = vmatprep.subr.mxu0 %v1008
      %1072 = vmatpush1.msra.mxu0 %v1007
      %1073 = vmatprep.subr.mxu0 %v1010
      %1074 = vmatpush1.msra.mxu0 %v1009
      %1075 = vmatprep.subr.mxu0 %v1012
      %1076 = vmatpush1.msra.mxu0 %v1011
      %1077 = vmatprep.subr.mxu0 %v1014
      %1078 = vmatpush1.msra.mxu0 %v1013
      %1079 = vmatprep.subr.mxu0 %v1016
      %1080 = vmatpush1.msra.mxu0 %v1015
      %1081 = vmatprep.subr.mxu0 %v1018
      %1082 = vmatpush1.msra.mxu0 %v1017
      %1083 = vmatprep.subr.mxu0 %v1020
      %1084 = vmatpush1.msra.mxu0 %v1019
      %1085 = vmatprep.subr.mxu0 %v1022
      %1086 = vmatpush1.msra.mxu0 %v1021
      %1087 = vmatprep.subr.mxu0 %v1024
      %1088 = vmatpush1.msra.mxu0 %v1023
      %1089 = vmatprep.subr.mxu0 %v1026
      %1090 = vmatpush1.msra.mxu0 %v1025
      %1091 = vmatprep.subr.mxu0 %v1028
      %1092 = vmatpush1.msra.mxu0 %v1027
      %1093 = vmatprep.mubr.f32.mxu0 %v942
      %1094 = vmatmul.mubr.f32.gmra.mrb[0].mxu0 %v939
      %v1095 = vpop.f32.mrb[0].mxu0
      %v1096 = vadd.f32 0.0, %v1095
      %v1097 = vpop.f32.mrb[0].mxu0
      %v1098 = vadd.f32 0.0, %v1097
      %1099 = vmatprep.mubr.f32.mxu0 %v946
      %1100 = vmatmul.mubr.f32.gmra.mrb[0].mxu0 %v944
      %v1101 = vpop.f32.mrb[0].mxu0
      %v1102 = vadd.f32 0.0, %v1101
      %v1103 = vpop.f32.mrb[0].mxu0
      %v1104 = vadd.f32 0.0, %v1103
      %1105 = vmatprep.mubr.f32.mxu0 %v952
      %1106 = vmatmul.mubr.f32.gmra.mrb[0].mxu0 %v949
      %v1107 = vpop.f32.mrb[0].mxu0
      %v1108 = vadd.f32 0.0, %v1107
      %v1109 = vpop.f32.mrb[0].mxu0
      %v1110 = vadd.f32 0.0, %v1109
      %1111 = vmatprep.mubr.f32.mxu0 %v956
      %1112 = vmatmul.mubr.f32.gmra.mrb[0].mxu0 %v954
      %v1113 = vpop.f32.mrb[0].mxu0
      %v1114 = vadd.f32 0.0, %v1113
      %v1115 = vpop.f32.mrb[0].mxu0
      %v1116 = vadd.f32 0.0, %v1115
      %1117 = vdwg.mxu0
      %v1118 = vadd.f32 %v898, %v1096
      %v1119 = vadd.f32 %v900, %v1098
      %v1120 = vadd.f32 %v904, %v1102
      %v1121 = vadd.f32 %v906, %v1104
      %v1122 = vadd.f32 %v910, %v1108
      %v1123 = vadd.f32 %v912, %v1110
      %v1124 = vadd.f32 %v916, %v1114
      %v1125 = vadd.f32 %v918, %v1116
      %v1126 = vld [vmem:[%s482] sm:$0xff]
      %v1127 = vld [vmem:[%s482 + $0x8] sm:$0xff]
      %v1128 = vld [vmem:[%s482 + $0x10] sm:$0xff]
      %v1129 = vld [vmem:[%s482 + $0x18] sm:$0xff]
      %v1130 = vld [vmem:[%s482 + $0x30] sm:$0xff]
      %v1131 = vld [vmem:[%s482 + $0x38] sm:$0xff]
      %v1132 = vld [vmem:[%s482 + $0x40] sm:$0xff]
      %v1133 = vld [vmem:[%s482 + $0x48] sm:$0xff]
      %v1134 = vld [vmem:[%s3 + $0x600] sm:$0xff]
      %v1135 = vld [vmem:[%s3 + $0x608] sm:$0xff]
      %v1136 = vld [vmem:[%s3 + $0x610] sm:$0xff]
      %v1137 = vld [vmem:[%s3 + $0x618] sm:$0xff]
      %v1138 = vld [vmem:[%s3 + $0x620] sm:$0xff]
      %v1139 = vld [vmem:[%s3 + $0x628] sm:$0xff]
      %v1140 = vld [vmem:[%s3 + $0x630] sm:$0xff]
      %v1141 = vld [vmem:[%s3 + $0x638] sm:$0xff]
      %v1142 = vld [vmem:[%s3 + $0x640] sm:$0xff]
      %v1143 = vld [vmem:[%s3 + $0x648] sm:$0xff]
      %v1144 = vld [vmem:[%s3 + $0x650] sm:$0xff]
      %v1145 = vld [vmem:[%s3 + $0x658] sm:$0xff]
      %v1146 = vld [vmem:[%s3 + $0x660] sm:$0xff]
      %v1147 = vld [vmem:[%s3 + $0x668] sm:$0xff]
      %v1148 = vld [vmem:[%s3 + $0x670] sm:$0xff]
      %v1149 = vld [vmem:[%s3 + $0x678] sm:$0xff]
      %v1150 = vld [vmem:[%s3 + $0x680] sm:$0xff]
      %v1151 = vld [vmem:[%s3 + $0x688] sm:$0xff]
      %v1152 = vld [vmem:[%s3 + $0x690] sm:$0xff]
      %v1153 = vld [vmem:[%s3 + $0x698] sm:$0xff]
      %v1154 = vld [vmem:[%s3 + $0x6a0] sm:$0xff]
      %v1155 = vld [vmem:[%s3 + $0x6a8] sm:$0xff]
      %v1156 = vld [vmem:[%s3 + $0x6b0] sm:$0xff]
      %v1157 = vld [vmem:[%s3 + $0x6b8] sm:$0xff]
      %v1158 = vld [vmem:[%s3 + $0x6c0] sm:$0xff]
      %v1159 = vld [vmem:[%s3 + $0x6c8] sm:$0xff]
      %v1160 = vld [vmem:[%s3 + $0x6d0] sm:$0xff]
      %v1161 = vld [vmem:[%s3 + $0x6d8] sm:$0xff]
      %v1162 = vld [vmem:[%s3 + $0x6e0] sm:$0xff]
      %v1163 = vld [vmem:[%s3 + $0x6e8] sm:$0xff]
      %v1164 = vld [vmem:[%s3 + $0x6f0] sm:$0xff]
      %v1165 = vld [vmem:[%s3 + $0x6f8] sm:$0xff]
      %v1166 = vld [vmem:[%s3 + $0x700] sm:$0xff]
      %v1167 = vld [vmem:[%s3 + $0x708] sm:$0xff]
      %v1168 = vld [vmem:[%s3 + $0x710] sm:$0xff]
      %v1169 = vld [vmem:[%s3 + $0x718] sm:$0xff]
      %v1170 = vld [vmem:[%s3 + $0x720] sm:$0xff]
      %v1171 = vld [vmem:[%s3 + $0x728] sm:$0xff]
      %v1172 = vld [vmem:[%s3 + $0x730] sm:$0xff]
      %v1173 = vld [vmem:[%s3 + $0x738] sm:$0xff]
      %v1174 = vld [vmem:[%s3 + $0x740] sm:$0xff]
      %v1175 = vld [vmem:[%s3 + $0x748] sm:$0xff]
      %v1176 = vld [vmem:[%s3 + $0x750] sm:$0xff]
      %v1177 = vld [vmem:[%s3 + $0x758] sm:$0xff]
      %v1178 = vld [vmem:[%s3 + $0x760] sm:$0xff]
      %v1179 = vld [vmem:[%s3 + $0x768] sm:$0xff]
      %v1180 = vld [vmem:[%s3 + $0x770] sm:$0xff]
      %v1181 = vld [vmem:[%s3 + $0x778] sm:$0xff]
      %v1182 = vld [vmem:[%s3 + $0x780] sm:$0xff]
      %v1183 = vld [vmem:[%s3 + $0x788] sm:$0xff]
      %v1184 = vld [vmem:[%s3 + $0x790] sm:$0xff]
      %v1185 = vld [vmem:[%s3 + $0x798] sm:$0xff]
      %v1186 = vld [vmem:[%s3 + $0x7a0] sm:$0xff]
      %v1187 = vld [vmem:[%s3 + $0x7a8] sm:$0xff]
      %v1188 = vld [vmem:[%s3 + $0x7b0] sm:$0xff]
      %v1189 = vld [vmem:[%s3 + $0x7b8] sm:$0xff]
      %v1190 = vld [vmem:[%s3 + $0x7c0] sm:$0xff]
      %v1191 = vld [vmem:[%s3 + $0x7c8] sm:$0xff]
      %v1192 = vld [vmem:[%s3 + $0x7d0] sm:$0xff]
      %v1193 = vld [vmem:[%s3 + $0x7d8] sm:$0xff]
      %v1194 = vld [vmem:[%s3 + $0x7e0] sm:$0xff]
      %v1195 = vld [vmem:[%s3 + $0x7e8] sm:$0xff]
      %v1196 = vld [vmem:[%s3 + $0x7f0] sm:$0xff]
      %v1197 = vld [vmem:[%s3 + $0x7f8] sm:$0xff]
      %1198 = vmatprep.subr.mxu0 %v1135
      %1199 = vmatpush1.msra.mxu0 %v1134
      %1200 = vmatprep.subr.mxu0 %v1137
      %1201 = vmatpush1.msra.mxu0 %v1136
      %1202 = vmatprep.subr.mxu0 %v1139
      %1203 = vmatpush1.msra.mxu0 %v1138
      %1204 = vmatprep.subr.mxu0 %v1141
      %1205 = vmatpush1.msra.mxu0 %v1140
      %1206 = vmatprep.subr.mxu0 %v1143
      %1207 = vmatpush1.msra.mxu0 %v1142
      %1208 = vmatprep.subr.mxu0 %v1145
      %1209 = vmatpush1.msra.mxu0 %v1144
      %1210 = vmatprep.subr.mxu0 %v1147
      %1211 = vmatpush1.msra.mxu0 %v1146
      %1212 = vmatprep.subr.mxu0 %v1149
      %1213 = vmatpush1.msra.mxu0 %v1148
      %1214 = vmatprep.subr.mxu0 %v1151
      %1215 = vmatpush1.msra.mxu0 %v1150
      %1216 = vmatprep.subr.mxu0 %v1153
      %1217 = vmatpush1.msra.mxu0 %v1152
      %1218 = vmatprep.subr.mxu0 %v1155
      %1219 = vmatpush1.msra.mxu0 %v1154
      %1220 = vmatprep.subr.mxu0 %v1157
      %1221 = vmatpush1.msra.mxu0 %v1156
      %1222 = vmatprep.subr.mxu0 %v1159
      %1223 = vmatpush1.msra.mxu0 %v1158
      %1224 = vmatprep.subr.mxu0 %v1161
      %1225 = vmatpush1.msra.mxu0 %v1160
      %1226 = vmatprep.subr.mxu0 %v1163
      %1227 = vmatpush1.msra.mxu0 %v1162
      %1228 = vmatprep.subr.mxu0 %v1165
      %1229 = vmatpush1.msra.mxu0 %v1164
      %1230 = vmatprep.subr.mxu0 %v1167
      %1231 = vmatpush1.msra.mxu0 %v1166
      %1232 = vmatprep.subr.mxu0 %v1169
      %1233 = vmatpush1.msra.mxu0 %v1168
      %1234 = vmatprep.subr.mxu0 %v1171
      %1235 = vmatpush1.msra.mxu0 %v1170
      %1236 = vmatprep.subr.mxu0 %v1173
      %1237 = vmatpush1.msra.mxu0 %v1172
      %1238 = vmatprep.subr.mxu0 %v1175
      %1239 = vmatpush1.msra.mxu0 %v1174
      %1240 = vmatprep.subr.mxu0 %v1177
      %1241 = vmatpush1.msra.mxu0 %v1176
      %1242 = vmatprep.subr.mxu0 %v1179
      %1243 = vmatpush1.msra.mxu0 %v1178
      %1244 = vmatprep.subr.mxu0 %v1181
      %1245 = vmatpush1.msra.mxu0 %v1180
      %1246 = vmatprep.subr.mxu0 %v1183
      %1247 = vmatpush1.msra.mxu0 %v1182
      %1248 = vmatprep.subr.mxu0 %v1185
      %1249 = vmatpush1.msra.mxu0 %v1184
      %1250 = vmatprep.subr.mxu0 %v1187
      %1251 = vmatpush1.msra.mxu0 %v1186
      %1252 = vmatprep.subr.mxu0 %v1189
      %1253 = vmatpush1.msra.mxu0 %v1188
      %1254 = vmatprep.subr.mxu0 %v1191
      %1255 = vmatpush1.msra.mxu0 %v1190
      %1256 = vmatprep.subr.mxu0 %v1193
      %1257 = vmatpush1.msra.mxu0 %v1192
      %1258 = vmatprep.subr.mxu0 %v1195
      %1259 = vmatpush1.msra.mxu0 %v1194
      %1260 = vmatprep.subr.mxu0 %v1197
      %1261 = vmatpush1.msra.mxu0 %v1196
      %1262 = vmatprep.mubr.f32.mxu0 %v1127
      %1263 = vmatmul.mubr.f32.gmra.mrb[0].mxu0 %v1126
      %v1264 = vpop.f32.mrb[0].mxu0
      %v1265 = vadd.f32 0.0, %v1264
      %v1266 = vpop.f32.mrb[0].mxu0
      %v1267 = vadd.f32 0.0, %v1266
      %1268 = vmatprep.mubr.f32.mxu0 %v1129
      %1269 = vmatmul.mubr.f32.gmra.mrb[0].mxu0 %v1128
      %v1270 = vpop.f32.mrb[0].mxu0
      %v1271 = vadd.f32 0.0, %v1270
      %v1272 = vpop.f32.mrb[0].mxu0
      %v1273 = vadd.f32 0.0, %v1272
      %1274 = vmatprep.mubr.f32.mxu0 %v1131
      %1275 = vmatmul.mubr.f32.gmra.mrb[0].mxu0 %v1130
      %v1276 = vpop.f32.mrb[0].mxu0
      %v1277 = vadd.f32 0.0, %v1276
      %v1278 = vpop.f32.mrb[0].mxu0
      %v1279 = vadd.f32 0.0, %v1278
      %1280 = vmatprep.mubr.f32.mxu0 %v1133
      %1281 = vmatmul.mubr.f32.gmra.mrb[0].mxu0 %v1132
      %v1282 = vpop.f32.mrb[0].mxu0
      %v1283 = vadd.f32 0.0, %v1282
      %v1284 = vpop.f32.mrb[0].mxu0
      %v1285 = vadd.f32 0.0, %v1284
      %1286 = vdwg.mxu0
      %v1287 = vadd.f32 %v1118, %v1265
      %v1288 = vadd.f32 %v1119, %v1267
      %v1289 = vadd.f32 %v1120, %v1271
      %v1290 = vadd.f32 %v1121, %v1273
      %v1291 = vadd.f32 %v1122, %v1277
      %v1292 = vadd.f32 %v1123, %v1279
      %v1293 = vadd.f32 %v1124, %v1283
      %v1294 = vadd.f32 %v1125, %v1285
      %v1295 = vld [vmem:[%s482] sm:$0xfe]
      %v1296 = vld [vmem:[%s482 + $0x8] sm:$0xfe]
      %v1297 = vld [vmem:[%s482 + $0x10] sm:$0xff]
      %v1298 = vld [vmem:[%s482 + $0x18] sm:$0xff]
      %v1299 = vld [vmem:[%s482 + $0x20] sm:$0x1]
      %v1300 = vld [vmem:[%s482 + $0x28] sm:$0x1]
      %v1301 = vld [vmem:[%s482 + $0x30] sm:$0xfe]
      %v1302 = vld [vmem:[%s482 + $0x38] sm:$0xfe]
      %v1303 = vld [vmem:[%s482 + $0x40] sm:$0xff]
      %v1304 = vld [vmem:[%s482 + $0x48] sm:$0xff]
      %v1305 = vld [vmem:[%s482 + $0x50] sm:$0x1]
      %v1306 = vld [vmem:[%s482 + $0x58] sm:$0x1]
      %v1319 = vrot.slane %v1295, 1
      %v1320 = vrot.slane %v1297, 1
      %v1321 = vsel %vm649, %v1319, %v1320
      %v1322 = vrot.slane %v1296, 1
      %v1323 = vrot.slane %v1298, 1
      %v1324 = vsel %vm649, %v1322, %v1323
      %v1325 = vrot.slane %v1299, 1
      %v1326 = vsel %vm649, %v1320, %v1325
      %v1327 = vrot.slane %v1300, 1
      %v1328 = vsel %vm649, %v1323, %v1327
      %v1329 = vrot.slane %v1301, 1
      %v1330 = vrot.slane %v1303, 1
      %v1331 = vsel %vm649, %v1329, %v1330
      %v1332 = vrot.slane %v1302, 1
      %v1333 = vrot.slane %v1304, 1
      %v1334 = vsel %vm649, %v1332, %v1333
      %v1335 = vrot.slane %v1305, 1
      %v1336 = vsel %vm649, %v1330, %v1335
      %v1337 = vrot.slane %v1306, 1
      %v1338 = vsel %vm649, %v1333, %v1337
      %v1347 = vld [vmem:[%s3 + $0x800] sm:$0xff]
      %v1348 = vld [vmem:[%s3 + $0x808] sm:$0xff]
      %v1349 = vld [vmem:[%s3 + $0x810] sm:$0xff]
      %v1350 = vld [vmem:[%s3 + $0x818] sm:$0xff]
      %v1351 = vld [vmem:[%s3 + $0x820] sm:$0xff]
      %v1352 = vld [vmem:[%s3 + $0x828] sm:$0xff]
      %v1353 = vld [vmem:[%s3 + $0x830] sm:$0xff]
      %v1354 = vld [vmem:[%s3 + $0x838] sm:$0xff]
      %v1355 = vld [vmem:[%s3 + $0x840] sm:$0xff]
      %v1356 = vld [vmem:[%s3 + $0x848] sm:$0xff]
      %v1357 = vld [vmem:[%s3 + $0x850] sm:$0xff]
      %v1358 = vld [vmem:[%s3 + $0x858] sm:$0xff]
      %v1359 = vld [vmem:[%s3 + $0x860] sm:$0xff]
      %v1360 = vld [vmem:[%s3 + $0x868] sm:$0xff]
      %v1361 = vld [vmem:[%s3 + $0x870] sm:$0xff]
      %v1362 = vld [vmem:[%s3 + $0x878] sm:$0xff]
      %v1363 = vld [vmem:[%s3 + $0x880] sm:$0xff]
      %v1364 = vld [vmem:[%s3 + $0x888] sm:$0xff]
      %v1365 = vld [vmem:[%s3 + $0x890] sm:$0xff]
      %v1366 = vld [vmem:[%s3 + $0x898] sm:$0xff]
      %v1367 = vld [vmem:[%s3 + $0x8a0] sm:$0xff]
      %v1368 = vld [vmem:[%s3 + $0x8a8] sm:$0xff]
      %v1369 = vld [vmem:[%s3 + $0x8b0] sm:$0xff]
      %v1370 = vld [vmem:[%s3 + $0x8b8] sm:$0xff]
      %v1371 = vld [vmem:[%s3 + $0x8c0] sm:$0xff]
      %v1372 = vld [vmem:[%s3 + $0x8c8] sm:$0xff]
      %v1373 = vld [vmem:[%s3 + $0x8d0] sm:$0xff]
      %v1374 = vld [vmem:[%s3 + $0x8d8] sm:$0xff]
      %v1375 = vld [vmem:[%s3 + $0x8e0] sm:$0xff]
      %v1376 = vld [vmem:[%s3 + $0x8e8] sm:$0xff]
      %v1377 = vld [vmem:[%s3 + $0x8f0] sm:$0xff]
      %v1378 = vld [vmem:[%s3 + $0x8f8] sm:$0xff]
      %v1379 = vld [vmem:[%s3 + $0x900] sm:$0xff]
      %v1380 = vld [vmem:[%s3 + $0x908] sm:$0xff]
      %v1381 = vld [vmem:[%s3 + $0x910] sm:$0xff]
      %v1382 = vld [vmem:[%s3 + $0x918] sm:$0xff]
      %v1383 = vld [vmem:[%s3 + $0x920] sm:$0xff]
      %v1384 = vld [vmem:[%s3 + $0x928] sm:$0xff]
      %v1385 = vld [vmem:[%s3 + $0x930] sm:$0xff]
      %v1386 = vld [vmem:[%s3 + $0x938] sm:$0xff]
      %v1387 = vld [vmem:[%s3 + $0x940] sm:$0xff]
      %v1388 = vld [vmem:[%s3 + $0x948] sm:$0xff]
      %v1389 = vld [vmem:[%s3 + $0x950] sm:$0xff]
      %v1390 = vld [vmem:[%s3 + $0x958] sm:$0xff]
      %v1391 = vld [vmem:[%s3 + $0x960] sm:$0xff]
      %v1392 = vld [vmem:[%s3 + $0x968] sm:$0xff]
      %v1393 = vld [vmem:[%s3 + $0x970] sm:$0xff]
      %v1394 = vld [vmem:[%s3 + $0x978] sm:$0xff]
      %v1395 = vld [vmem:[%s3 + $0x980] sm:$0xff]
      %v1396 = vld [vmem:[%s3 + $0x988] sm:$0xff]
      %v1397 = vld [vmem:[%s3 + $0x990] sm:$0xff]
      %v1398 = vld [vmem:[%s3 + $0x998] sm:$0xff]
      %v1399 = vld [vmem:[%s3 + $0x9a0] sm:$0xff]
      %v1400 = vld [vmem:[%s3 + $0x9a8] sm:$0xff]
      %v1401 = vld [vmem:[%s3 + $0x9b0] sm:$0xff]
      %v1402 = vld [vmem:[%s3 + $0x9b8] sm:$0xff]
      %v1403 = vld [vmem:[%s3 + $0x9c0] sm:$0xff]
      %v1404 = vld [vmem:[%s3 + $0x9c8] sm:$0xff]
      %v1405 = vld [vmem:[%s3 + $0x9d0] sm:$0xff]
      %v1406 = vld [vmem:[%s3 + $0x9d8] sm:$0xff]
      %v1407 = vld [vmem:[%s3 + $0x9e0] sm:$0xff]
      %v1408 = vld [vmem:[%s3 + $0x9e8] sm:$0xff]
      %v1409 = vld [vmem:[%s3 + $0x9f0] sm:$0xff]
      %v1410 = vld [vmem:[%s3 + $0x9f8] sm:$0xff]
      %1411 = vmatprep.subr.mxu0 %v1348
      %1412 = vmatpush1.msra.mxu0 %v1347
      %1413 = vmatprep.subr.mxu0 %v1350
      %1414 = vmatpush1.msra.mxu0 %v1349
      %1415 = vmatprep.subr.mxu0 %v1352
      %1416 = vmatpush1.msra.mxu0 %v1351
      %1417 = vmatprep.subr.mxu0 %v1354
      %1418 = vmatpush1.msra.mxu0 %v1353
      %1419 = vmatprep.subr.mxu0 %v1356
      %1420 = vmatpush1.msra.mxu0 %v1355
      %1421 = vmatprep.subr.mxu0 %v1358
      %1422 = vmatpush1.msra.mxu0 %v1357
      %1423 = vmatprep.subr.mxu0 %v1360
      %1424 = vmatpush1.msra.mxu0 %v1359
      %1425 = vmatprep.subr.mxu0 %v1362
      %1426 = vmatpush1.msra.mxu0 %v1361
      %1427 = vmatprep.subr.mxu0 %v1364
      %1428 = vmatpush1.msra.mxu0 %v1363
      %1429 = vmatprep.subr.mxu0 %v1366
      %1430 = vmatpush1.msra.mxu0 %v1365
      %1431 = vmatprep.subr.mxu0 %v1368
      %1432 = vmatpush1.msra.mxu0 %v1367
      %1433 = vmatprep.subr.mxu0 %v1370
      %1434 = vmatpush1.msra.mxu0 %v1369
      %1435 = vmatprep.subr.mxu0 %v1372
      %1436 = vmatpush1.msra.mxu0 %v1371
      %1437 = vmatprep.subr.mxu0 %v1374
      %1438 = vmatpush1.msra.mxu0 %v1373
      %1439 = vmatprep.subr.mxu0 %v1376
      %1440 = vmatpush1.msra.mxu0 %v1375
      %1441 = vmatprep.subr.mxu0 %v1378
      %1442 = vmatpush1.msra.mxu0 %v1377
      %1443 = vmatprep.subr.mxu0 %v1380
      %1444 = vmatpush1.msra.mxu0 %v1379
      %1445 = vmatprep.subr.mxu0 %v1382
      %1446 = vmatpush1.msra.mxu0 %v1381
      %1447 = vmatprep.subr.mxu0 %v1384
      %1448 = vmatpush1.msra.mxu0 %v1383
      %1449 = vmatprep.subr.mxu0 %v1386
      %1450 = vmatpush1.msra.mxu0 %v1385
      %1451 = vmatprep.subr.mxu0 %v1388
      %1452 = vmatpush1.msra.mxu0 %v1387
      %1453 = vmatprep.subr.mxu0 %v1390
      %1454 = vmatpush1.msra.mxu0 %v1389
      %1455 = vmatprep.subr.mxu0 %v1392
      %1456 = vmatpush1.msra.mxu0 %v1391
      %1457 = vmatprep.subr.mxu0 %v1394
      %1458 = vmatpush1.msra.mxu0 %v1393
      %1459 = vmatprep.subr.mxu0 %v1396
      %1460 = vmatpush1.msra.mxu0 %v1395
      %1461 = vmatprep.subr.mxu0 %v1398
      %1462 = vmatpush1.msra.mxu0 %v1397
      %1463 = vmatprep.subr.mxu0 %v1400
      %1464 = vmatpush1.msra.mxu0 %v1399
      %1465 = vmatprep.subr.mxu0 %v1402
      %1466 = vmatpush1.msra.mxu0 %v1401
      %1467 = vmatprep.subr.mxu0 %v1404
      %1468 = vmatpush1.msra.mxu0 %v1403
      %1469 = vmatprep.subr.mxu0 %v1406
      %1470 = vmatpush1.msra.mxu0 %v1405
      %1471 = vmatprep.subr.mxu0 %v1408
      %1472 = vmatpush1.msra.mxu0 %v1407
      %1473 = vmatprep.subr.mxu0 %v1410
      %1474 = vmatpush1.msra.mxu0 %v1409
      %1475 = vmatprep.mubr.f32.mxu0 %v1324
      %1476 = vmatmul.mubr.f32.gmra.mrb[0].mxu0 %v1321
      %v1477 = vpop.f32.mrb[0].mxu0
      %v1478 = vadd.f32 0.0, %v1477
      %v1479 = vpop.f32.mrb[0].mxu0
      %v1480 = vadd.f32 0.0, %v1479
      %1481 = vmatprep.mubr.f32.mxu0 %v1328
      %1482 = vmatmul.mubr.f32.gmra.mrb[0].mxu0 %v1326
      %v1483 = vpop.f32.mrb[0].mxu0
      %v1484 = vadd.f32 0.0, %v1483
      %v1485 = vpop.f32.mrb[0].mxu0
      %v1486 = vadd.f32 0.0, %v1485
      %1487 = vmatprep.mubr.f32.mxu0 %v1334
      %1488 = vmatmul.mubr.f32.gmra.mrb[0].mxu0 %v1331
      %v1489 = vpop.f32.mrb[0].mxu0
      %v1490 = vadd.f32 0.0, %v1489
      %v1491 = vpop.f32.mrb[0].mxu0
      %v1492 = vadd.f32 0.0, %v1491
      %1493 = vmatprep.mubr.f32.mxu0 %v1338
      %1494 = vmatmul.mubr.f32.gmra.mrb[0].mxu0 %v1336
      %v1495 = vpop.f32.mrb[0].mxu0
      %v1496 = vadd.f32 0.0, %v1495
      %v1497 = vpop.f32.mrb[0].mxu0
      %v1498 = vadd.f32 0.0, %v1497
      %1499 = vdwg.mxu0
      %v1500 = vadd.f32 %v1287, %v1478
      %v1501 = vadd.f32 %v1288, %v1480
      %v1502 = vadd.f32 %v1289, %v1484
      %v1503 = vadd.f32 %v1290, %v1486
      %v1504 = vadd.f32 %v1291, %v1490
      %v1505 = vadd.f32 %v1292, %v1492
      %v1506 = vadd.f32 %v1293, %v1496
      %v1507 = vadd.f32 %v1294, %v1498
      %v1508 = vld [vmem:[%s482] sm:$0xfc]
      %v1509 = vld [vmem:[%s482 + $0x8] sm:$0xfc]
      %v1510 = vld [vmem:[%s482 + $0x20] sm:$0x3]
      %v1511 = vld [vmem:[%s482 + $0x28] sm:$0x3]
      %v1512 = vld [vmem:[%s482 + $0x30] sm:$0xfc]
      %v1513 = vld [vmem:[%s482 + $0x38] sm:$0xfc]
      %v1514 = vld [vmem:[%s482 + $0x50] sm:$0x3]
      %v1515 = vld [vmem:[%s482 + $0x58] sm:$0x3]
      %v1524 = vrot.slane %v1508, 2
      %v1525 = vrot.slane %v1297, 2
      %v1526 = vsel %vm936, %v1524, %v1525
      %v1527 = vrot.slane %v1509, 2
      %v1528 = vrot.slane %v1298, 2
      %v1529 = vsel %vm936, %v1527, %v1528
      %v1530 = vrot.slane %v1510, 2
      %v1531 = vsel %vm936, %v1525, %v1530
      %v1532 = vrot.slane %v1511, 2
      %v1533 = vsel %vm936, %v1528, %v1532
      %v1534 = vrot.slane %v1512, 2
      %v1535 = vrot.slane %v1303, 2
      %v1536 = vsel %vm936, %v1534, %v1535
      %v1537 = vrot.slane %v1513, 2
      %v1538 = vrot.slane %v1304, 2
      %v1539 = vsel %vm936, %v1537, %v1538
      %v1540 = vrot.slane %v1514, 2
      %v1541 = vsel %vm936, %v1535, %v1540
      %v1542 = vrot.slane %v1515, 2
      %v1543 = vsel %vm936, %v1538, %v1542
      %v1552 = vld [vmem:[%s3 + $0xa00] sm:$0xff]
      %v1553 = vld [vmem:[%s3 + $0xa08] sm:$0xff]
      %v1554 = vld [vmem:[%s3 + $0xa10] sm:$0xff]
      %v1555 = vld [vmem:[%s3 + $0xa18] sm:$0xff]
      %v1556 = vld [vmem:[%s3 + $0xa20] sm:$0xff]
      %v1557 = vld [vmem:[%s3 + $0xa28] sm:$0xff]
      %v1558 = vld [vmem:[%s3 + $0xa30] sm:$0xff]
      %v1559 = vld [vmem:[%s3 + $0xa38] sm:$0xff]
      %v1560 = vld [vmem:[%s3 + $0xa40] sm:$0xff]
      %v1561 = vld [vmem:[%s3 + $0xa48] sm:$0xff]
      %v1562 = vld [vmem:[%s3 + $0xa50] sm:$0xff]
      %v1563 = vld [vmem:[%s3 + $0xa58] sm:$0xff]
      %v1564 = vld [vmem:[%s3 + $0xa60] sm:$0xff]
      %v1565 = vld [vmem:[%s3 + $0xa68] sm:$0xff]
      %v1566 = vld [vmem:[%s3 + $0xa70] sm:$0xff]
      %v1567 = vld [vmem:[%s3 + $0xa78] sm:$0xff]
      %v1568 = vld [vmem:[%s3 + $0xa80] sm:$0xff]
      %v1569 = vld [vmem:[%s3 + $0xa88] sm:$0xff]
      %v1570 = vld [vmem:[%s3 + $0xa90] sm:$0xff]
      %v1571 = vld [vmem:[%s3 + $0xa98] sm:$0xff]
      %v1572 = vld [vmem:[%s3 + $0xaa0] sm:$0xff]
      %v1573 = vld [vmem:[%s3 + $0xaa8] sm:$0xff]
      %v1574 = vld [vmem:[%s3 + $0xab0] sm:$0xff]
      %v1575 = vld [vmem:[%s3 + $0xab8] sm:$0xff]
      %v1576 = vld [vmem:[%s3 + $0xac0] sm:$0xff]
      %v1577 = vld [vmem:[%s3 + $0xac8] sm:$0xff]
      %v1578 = vld [vmem:[%s3 + $0xad0] sm:$0xff]
      %v1579 = vld [vmem:[%s3 + $0xad8] sm:$0xff]
      %v1580 = vld [vmem:[%s3 + $0xae0] sm:$0xff]
      %v1581 = vld [vmem:[%s3 + $0xae8] sm:$0xff]
      %v1582 = vld [vmem:[%s3 + $0xaf0] sm:$0xff]
      %v1583 = vld [vmem:[%s3 + $0xaf8] sm:$0xff]
      %v1584 = vld [vmem:[%s3 + $0xb00] sm:$0xff]
      %v1585 = vld [vmem:[%s3 + $0xb08] sm:$0xff]
      %v1586 = vld [vmem:[%s3 + $0xb10] sm:$0xff]
      %v1587 = vld [vmem:[%s3 + $0xb18] sm:$0xff]
      %v1588 = vld [vmem:[%s3 + $0xb20] sm:$0xff]
      %v1589 = vld [vmem:[%s3 + $0xb28] sm:$0xff]
      %v1590 = vld [vmem:[%s3 + $0xb30] sm:$0xff]
      %v1591 = vld [vmem:[%s3 + $0xb38] sm:$0xff]
      %v1592 = vld [vmem:[%s3 + $0xb40] sm:$0xff]
      %v1593 = vld [vmem:[%s3 + $0xb48] sm:$0xff]
      %v1594 = vld [vmem:[%s3 + $0xb50] sm:$0xff]
      %v1595 = vld [vmem:[%s3 + $0xb58] sm:$0xff]
      %v1596 = vld [vmem:[%s3 + $0xb60] sm:$0xff]
      %v1597 = vld [vmem:[%s3 + $0xb68] sm:$0xff]
      %v1598 = vld [vmem:[%s3 + $0xb70] sm:$0xff]
      %v1599 = vld [vmem:[%s3 + $0xb78] sm:$0xff]
      %v1600 = vld [vmem:[%s3 + $0xb80] sm:$0xff]
      %v1601 = vld [vmem:[%s3 + $0xb88] sm:$0xff]
      %v1602 = vld [vmem:[%s3 + $0xb90] sm:$0xff]
      %v1603 = vld [vmem:[%s3 + $0xb98] sm:$0xff]
      %v1604 = vld [vmem:[%s3 + $0xba0] sm:$0xff]
      %v1605 = vld [vmem:[%s3 + $0xba8] sm:$0xff]
      %v1606 = vld [vmem:[%s3 + $0xbb0] sm:$0xff]
      %v1607 = vld [vmem:[%s3 + $0xbb8] sm:$0xff]
      %v1608 = vld [vmem:[%s3 + $0xbc0] sm:$0xff]
      %v1609 = vld [vmem:[%s3 + $0xbc8] sm:$0xff]
      %v1610 = vld [vmem:[%s3 + $0xbd0] sm:$0xff]
      %v1611 = vld [vmem:[%s3 + $0xbd8] sm:$0xff]
      %v1612 = vld [vmem:[%s3 + $0xbe0] sm:$0xff]
      %v1613 = vld [vmem:[%s3 + $0xbe8] sm:$0xff]
      %v1614 = vld [vmem:[%s3 + $0xbf0] sm:$0xff]
      %v1615 = vld [vmem:[%s3 + $0xbf8] sm:$0xff]
      %1616 = vmatprep.subr.mxu0 %v1553
      %1617 = vmatpush1.msra.mxu0 %v1552
      %1618 = vmatprep.subr.mxu0 %v1555
      %1619 = vmatpush1.msra.mxu0 %v1554
      %1620 = vmatprep.subr.mxu0 %v1557
      %1621 = vmatpush1.msra.mxu0 %v1556
      %1622 = vmatprep.subr.mxu0 %v1559
      %1623 = vmatpush1.msra.mxu0 %v1558
      %1624 = vmatprep.subr.mxu0 %v1561
      %1625 = vmatpush1.msra.mxu0 %v1560
      %1626 = vmatprep.subr.mxu0 %v1563
      %1627 = vmatpush1.msra.mxu0 %v1562
      %1628 = vmatprep.subr.mxu0 %v1565
      %1629 = vmatpush1.msra.mxu0 %v1564
      %1630 = vmatprep.subr.mxu0 %v1567
      %1631 = vmatpush1.msra.mxu0 %v1566
      %1632 = vmatprep.subr.mxu0 %v1569
      %1633 = vmatpush1.msra.mxu0 %v1568
      %1634 = vmatprep.subr.mxu0 %v1571
      %1635 = vmatpush1.msra.mxu0 %v1570
      %1636 = vmatprep.subr.mxu0 %v1573
      %1637 = vmatpush1.msra.mxu0 %v1572
      %1638 = vmatprep.subr.mxu0 %v1575
      %1639 = vmatpush1.msra.mxu0 %v1574
      %1640 = vmatprep.subr.mxu0 %v1577
      %1641 = vmatpush1.msra.mxu0 %v1576
      %1642 = vmatprep.subr.mxu0 %v1579
      %1643 = vmatpush1.msra.mxu0 %v1578
      %1644 = vmatprep.subr.mxu0 %v1581
      %1645 = vmatpush1.msra.mxu0 %v1580
      %1646 = vmatprep.subr.mxu0 %v1583
      %1647 = vmatpush1.msra.mxu0 %v1582
      %1648 = vmatprep.subr.mxu0 %v1585
      %1649 = vmatpush1.msra.mxu0 %v1584
      %1650 = vmatprep.subr.mxu0 %v1587
      %1651 = vmatpush1.msra.mxu0 %v1586
      %1652 = vmatprep.subr.mxu0 %v1589
      %1653 = vmatpush1.msra.mxu0 %v1588
      %1654 = vmatprep.subr.mxu0 %v1591
      %1655 = vmatpush1.msra.mxu0 %v1590
      %1656 = vmatprep.subr.mxu0 %v1593
      %1657 = vmatpush1.msra.mxu0 %v1592
      %1658 = vmatprep.subr.mxu0 %v1595
      %1659 = vmatpush1.msra.mxu0 %v1594
      %1660 = vmatprep.subr.mxu0 %v1597
      %1661 = vmatpush1.msra.mxu0 %v1596
      %1662 = vmatprep.subr.mxu0 %v1599
      %1663 = vmatpush1.msra.mxu0 %v1598
      %1664 = vmatprep.subr.mxu0 %v1601
      %1665 = vmatpush1.msra.mxu0 %v1600
      %1666 = vmatprep.subr.mxu0 %v1603
      %1667 = vmatpush1.msra.mxu0 %v1602
      %1668 = vmatprep.subr.mxu0 %v1605
      %1669 = vmatpush1.msra.mxu0 %v1604
      %1670 = vmatprep.subr.mxu0 %v1607
      %1671 = vmatpush1.msra.mxu0 %v1606
      %1672 = vmatprep.subr.mxu0 %v1609
      %1673 = vmatpush1.msra.mxu0 %v1608
      %1674 = vmatprep.subr.mxu0 %v1611
      %1675 = vmatpush1.msra.mxu0 %v1610
      %1676 = vmatprep.subr.mxu0 %v1613
      %1677 = vmatpush1.msra.mxu0 %v1612
      %1678 = vmatprep.subr.mxu0 %v1615
      %1679 = vmatpush1.msra.mxu0 %v1614
      %1680 = vmatprep.mubr.f32.mxu0 %v1529
      %1681 = vmatmul.mubr.f32.gmra.mrb[0].mxu0 %v1526
      %v1682 = vpop.f32.mrb[0].mxu0
      %v1683 = vadd.f32 0.0, %v1682
      %v1684 = vpop.f32.mrb[0].mxu0
      %v1685 = vadd.f32 0.0, %v1684
      %1686 = vmatprep.mubr.f32.mxu0 %v1533
      %1687 = vmatmul.mubr.f32.gmra.mrb[0].mxu0 %v1531
      %v1688 = vpop.f32.mrb[0].mxu0
      %v1689 = vadd.f32 0.0, %v1688
      %v1690 = vpop.f32.mrb[0].mxu0
      %v1691 = vadd.f32 0.0, %v1690
      %1692 = vmatprep.mubr.f32.mxu0 %v1539
      %1693 = vmatmul.mubr.f32.gmra.mrb[0].mxu0 %v1536
      %v1694 = vpop.f32.mrb[0].mxu0
      %v1695 = vadd.f32 0.0, %v1694
      %v1696 = vpop.f32.mrb[0].mxu0
      %v1697 = vadd.f32 0.0, %v1696
      %1698 = vmatprep.mubr.f32.mxu0 %v1543
      %1699 = vmatmul.mubr.f32.gmra.mrb[0].mxu0 %v1541
      %v1700 = vpop.f32.mrb[0].mxu0
      %v1701 = vadd.f32 0.0, %v1700
      %v1702 = vpop.f32.mrb[0].mxu0
      %v1703 = vadd.f32 0.0, %v1702
      %1704 = vdwg.mxu0
      %v1705 = vadd.f32 %v1500, %v1683
      %v1706 = vadd.f32 %v1501, %v1685
      %v1707 = vadd.f32 %v1502, %v1689
      %v1708 = vadd.f32 %v1503, %v1691
      %v1709 = vadd.f32 %v1504, %v1695
      %v1710 = vadd.f32 %v1505, %v1697
      %v1711 = vadd.f32 %v1506, %v1701
      %v1712 = vadd.f32 %v1507, %v1703
      %s1713 = scalar_lea.vmem [#allocation2], 96
      %v1714 = vld [vmem:[%s1713] sm:$0xff]
      %v1715 = vld [vmem:[%s1713 + $0x8] sm:$0xff]
      %v1716 = vld [vmem:[%s1713 + $0x10] sm:$0xff]
      %v1717 = vld [vmem:[%s1713 + $0x18] sm:$0xff]
      %v1718 = vld [vmem:[%s1713 + $0x30] sm:$0xff]
      %v1719 = vld [vmem:[%s1713 + $0x38] sm:$0xff]
      %v1720 = vld [vmem:[%s1713 + $0x40] sm:$0xff]
      %v1721 = vld [vmem:[%s1713 + $0x48] sm:$0xff]
      %v1722 = vld [vmem:[%s3 + $0xc00] sm:$0xff]
      %v1723 = vld [vmem:[%s3 + $0xc08] sm:$0xff]
      %v1724 = vld [vmem:[%s3 + $0xc10] sm:$0xff]
      %v1725 = vld [vmem:[%s3 + $0xc18] sm:$0xff]
      %v1726 = vld [vmem:[%s3 + $0xc20] sm:$0xff]
      %v1727 = vld [vmem:[%s3 + $0xc28] sm:$0xff]
      %v1728 = vld [vmem:[%s3 + $0xc30] sm:$0xff]
      %v1729 = vld [vmem:[%s3 + $0xc38] sm:$0xff]
      %v1730 = vld [vmem:[%s3 + $0xc40] sm:$0xff]
      %v1731 = vld [vmem:[%s3 + $0xc48] sm:$0xff]
      %v1732 = vld [vmem:[%s3 + $0xc50] sm:$0xff]
      %v1733 = vld [vmem:[%s3 + $0xc58] sm:$0xff]
      %v1734 = vld [vmem:[%s3 + $0xc60] sm:$0xff]
      %v1735 = vld [vmem:[%s3 + $0xc68] sm:$0xff]
      %v1736 = vld [vmem:[%s3 + $0xc70] sm:$0xff]
      %v1737 = vld [vmem:[%s3 + $0xc78] sm:$0xff]
      %v1738 = vld [vmem:[%s3 + $0xc80] sm:$0xff]
      %v1739 = vld [vmem:[%s3 + $0xc88] sm:$0xff]
      %v1740 = vld [vmem:[%s3 + $0xc90] sm:$0xff]
      %v1741 = vld [vmem:[%s3 + $0xc98] sm:$0xff]
      %v1742 = vld [vmem:[%s3 + $0xca0] sm:$0xff]
      %v1743 = vld [vmem:[%s3 + $0xca8] sm:$0xff]
      %v1744 = vld [vmem:[%s3 + $0xcb0] sm:$0xff]
      %v1745 = vld [vmem:[%s3 + $0xcb8] sm:$0xff]
      %v1746 = vld [vmem:[%s3 + $0xcc0] sm:$0xff]
      %v1747 = vld [vmem:[%s3 + $0xcc8] sm:$0xff]
      %v1748 = vld [vmem:[%s3 + $0xcd0] sm:$0xff]
      %v1749 = vld [vmem:[%s3 + $0xcd8] sm:$0xff]
      %v1750 = vld [vmem:[%s3 + $0xce0] sm:$0xff]
      %v1751 = vld [vmem:[%s3 + $0xce8] sm:$0xff]
      %v1752 = vld [vmem:[%s3 + $0xcf0] sm:$0xff]
      %v1753 = vld [vmem:[%s3 + $0xcf8] sm:$0xff]
      %v1754 = vld [vmem:[%s3 + $0xd00] sm:$0xff]
      %v1755 = vld [vmem:[%s3 + $0xd08] sm:$0xff]
      %v1756 = vld [vmem:[%s3 + $0xd10] sm:$0xff]
      %v1757 = vld [vmem:[%s3 + $0xd18] sm:$0xff]
      %v1758 = vld [vmem:[%s3 + $0xd20] sm:$0xff]
      %v1759 = vld [vmem:[%s3 + $0xd28] sm:$0xff]
      %v1760 = vld [vmem:[%s3 + $0xd30] sm:$0xff]
      %v1761 = vld [vmem:[%s3 + $0xd38] sm:$0xff]
      %v1762 = vld [vmem:[%s3 + $0xd40] sm:$0xff]
      %v1763 = vld [vmem:[%s3 + $0xd48] sm:$0xff]
      %v1764 = vld [vmem:[%s3 + $0xd50] sm:$0xff]
      %v1765 = vld [vmem:[%s3 + $0xd58] sm:$0xff]
      %v1766 = vld [vmem:[%s3 + $0xd60] sm:$0xff]
      %v1767 = vld [vmem:[%s3 + $0xd68] sm:$0xff]
      %v1768 = vld [vmem:[%s3 + $0xd70] sm:$0xff]
      %v1769 = vld [vmem:[%s3 + $0xd78] sm:$0xff]
      %v1770 = vld [vmem:[%s3 + $0xd80] sm:$0xff]
      %v1771 = vld [vmem:[%s3 + $0xd88] sm:$0xff]
      %v1772 = vld [vmem:[%s3 + $0xd90] sm:$0xff]
      %v1773 = vld [vmem:[%s3 + $0xd98] sm:$0xff]
      %v1774 = vld [vmem:[%s3 + $0xda0] sm:$0xff]
      %v1775 = vld [vmem:[%s3 + $0xda8] sm:$0xff]
      %v1776 = vld [vmem:[%s3 + $0xdb0] sm:$0xff]
      %v1777 = vld [vmem:[%s3 + $0xdb8] sm:$0xff]
      %v1778 = vld [vmem:[%s3 + $0xdc0] sm:$0xff]
      %v1779 = vld [vmem:[%s3 + $0xdc8] sm:$0xff]
      %v1780 = vld [vmem:[%s3 + $0xdd0] sm:$0xff]
      %v1781 = vld [vmem:[%s3 + $0xdd8] sm:$0xff]
      %v1782 = vld [vmem:[%s3 + $0xde0] sm:$0xff]
      %v1783 = vld [vmem:[%s3 + $0xde8] sm:$0xff]
      %v1784 = vld [vmem:[%s3 + $0xdf0] sm:$0xff]
      %v1785 = vld [vmem:[%s3 + $0xdf8] sm:$0xff]
      %1786 = vmatprep.subr.mxu0 %v1723
      %1787 = vmatpush1.msra.mxu0 %v1722
      %1788 = vmatprep.subr.mxu0 %v1725
      %1789 = vmatpush1.msra.mxu0 %v1724
      %1790 = vmatprep.subr.mxu0 %v1727
      %1791 = vmatpush1.msra.mxu0 %v1726
      %1792 = vmatprep.subr.mxu0 %v1729
      %1793 = vmatpush1.msra.mxu0 %v1728
      %1794 = vmatprep.subr.mxu0 %v1731
      %1795 = vmatpush1.msra.mxu0 %v1730
      %1796 = vmatprep.subr.mxu0 %v1733
      %1797 = vmatpush1.msra.mxu0 %v1732
      %1798 = vmatprep.subr.mxu0 %v1735
      %1799 = vmatpush1.msra.mxu0 %v1734
      %1800 = vmatprep.subr.mxu0 %v1737
      %1801 = vmatpush1.msra.mxu0 %v1736
      %1802 = vmatprep.subr.mxu0 %v1739
      %1803 = vmatpush1.msra.mxu0 %v1738
      %1804 = vmatprep.subr.mxu0 %v1741
      %1805 = vmatpush1.msra.mxu0 %v1740
      %1806 = vmatprep.subr.mxu0 %v1743
      %1807 = vmatpush1.msra.mxu0 %v1742
      %1808 = vmatprep.subr.mxu0 %v1745
      %1809 = vmatpush1.msra.mxu0 %v1744
      %1810 = vmatprep.subr.mxu0 %v1747
      %1811 = vmatpush1.msra.mxu0 %v1746
      %1812 = vmatprep.subr.mxu0 %v1749
      %1813 = vmatpush1.msra.mxu0 %v1748
      %1814 = vmatprep.subr.mxu0 %v1751
      %1815 = vmatpush1.msra.mxu0 %v1750
      %1816 = vmatprep.subr.mxu0 %v1753
      %1817 = vmatpush1.msra.mxu0 %v1752
      %1818 = vmatprep.subr.mxu0 %v1755
      %1819 = vmatpush1.msra.mxu0 %v1754
      %1820 = vmatprep.subr.mxu0 %v1757
      %1821 = vmatpush1.msra.mxu0 %v1756
      %1822 = vmatprep.subr.mxu0 %v1759
      %1823 = vmatpush1.msra.mxu0 %v1758
      %1824 = vmatprep.subr.mxu0 %v1761
      %1825 = vmatpush1.msra.mxu0 %v1760
      %1826 = vmatprep.subr.mxu0 %v1763
      %1827 = vmatpush1.msra.mxu0 %v1762
      %1828 = vmatprep.subr.mxu0 %v1765
      %1829 = vmatpush1.msra.mxu0 %v1764
      %1830 = vmatprep.subr.mxu0 %v1767
      %1831 = vmatpush1.msra.mxu0 %v1766
      %1832 = vmatprep.subr.mxu0 %v1769
      %1833 = vmatpush1.msra.mxu0 %v1768
      %1834 = vmatprep.subr.mxu0 %v1771
      %1835 = vmatpush1.msra.mxu0 %v1770
      %1836 = vmatprep.subr.mxu0 %v1773
      %1837 = vmatpush1.msra.mxu0 %v1772
      %1838 = vmatprep.subr.mxu0 %v1775
      %1839 = vmatpush1.msra.mxu0 %v1774
      %1840 = vmatprep.subr.mxu0 %v1777
      %1841 = vmatpush1.msra.mxu0 %v1776
      %1842 = vmatprep.subr.mxu0 %v1779
      %1843 = vmatpush1.msra.mxu0 %v1778
      %1844 = vmatprep.subr.mxu0 %v1781
      %1845 = vmatpush1.msra.mxu0 %v1780
      %1846 = vmatprep.subr.mxu0 %v1783
      %1847 = vmatpush1.msra.mxu0 %v1782
      %1848 = vmatprep.subr.mxu0 %v1785
      %1849 = vmatpush1.msra.mxu0 %v1784
      %1850 = vmatprep.mubr.f32.mxu0 %v1715
      %1851 = vmatmul.mubr.f32.gmra.mrb[0].mxu0 %v1714
      %v1852 = vpop.f32.mrb[0].mxu0
      %v1853 = vadd.f32 0.0, %v1852
      %v1854 = vpop.f32.mrb[0].mxu0
      %v1855 = vadd.f32 0.0, %v1854
      %1856 = vmatprep.mubr.f32.mxu0 %v1717
      %1857 = vmatmul.mubr.f32.gmra.mrb[0].mxu0 %v1716
      %v1858 = vpop.f32.mrb[0].mxu0
      %v1859 = vadd.f32 0.0, %v1858
      %v1860 = vpop.f32.mrb[0].mxu0
      %v1861 = vadd.f32 0.0, %v1860
      %1862 = vmatprep.mubr.f32.mxu0 %v1719
      %1863 = vmatmul.mubr.f32.gmra.mrb[0].mxu0 %v1718
      %v1864 = vpop.f32.mrb[0].mxu0
      %v1865 = vadd.f32 0.0, %v1864
      %v1866 = vpop.f32.mrb[0].mxu0
      %v1867 = vadd.f32 0.0, %v1866
      %1868 = vmatprep.mubr.f32.mxu0 %v1721
      %1869 = vmatmul.mubr.f32.gmra.mrb[0].mxu0 %v1720
      %v1870 = vpop.f32.mrb[0].mxu0
      %v1871 = vadd.f32 0.0, %v1870
      %v1872 = vpop.f32.mrb[0].mxu0
      %v1873 = vadd.f32 0.0, %v1872
      %1874 = vdwg.mxu0
      %v1875 = vadd.f32 %v1705, %v1853
      %v1876 = vadd.f32 %v1706, %v1855
      %v1877 = vadd.f32 %v1707, %v1859
      %v1878 = vadd.f32 %v1708, %v1861
      %v1879 = vadd.f32 %v1709, %v1865
      %v1880 = vadd.f32 %v1710, %v1867
      %v1881 = vadd.f32 %v1711, %v1871
      %v1882 = vadd.f32 %v1712, %v1873
      %v1883 = vld [vmem:[%s1713] sm:$0xfe]
      %v1884 = vld [vmem:[%s1713 + $0x8] sm:$0xfe]
      %v1885 = vld [vmem:[%s1713 + $0x10] sm:$0xff]
      %v1886 = vld [vmem:[%s1713 + $0x18] sm:$0xff]
      %v1887 = vld [vmem:[%s1713 + $0x20] sm:$0x1]
      %v1888 = vld [vmem:[%s1713 + $0x28] sm:$0x1]
      %v1889 = vld [vmem:[%s1713 + $0x30] sm:$0xfe]
      %v1890 = vld [vmem:[%s1713 + $0x38] sm:$0xfe]
      %v1891 = vld [vmem:[%s1713 + $0x40] sm:$0xff]
      %v1892 = vld [vmem:[%s1713 + $0x48] sm:$0xff]
      %v1893 = vld [vmem:[%s1713 + $0x50] sm:$0x1]
      %v1894 = vld [vmem:[%s1713 + $0x58] sm:$0x1]
      %v1907 = vrot.slane %v1883, 1
      %v1908 = vrot.slane %v1885, 1
      %v1909 = vsel %vm649, %v1907, %v1908
      %v1910 = vrot.slane %v1884, 1
      %v1911 = vrot.slane %v1886, 1
      %v1912 = vsel %vm649, %v1910, %v1911
      %v1913 = vrot.slane %v1887, 1
      %v1914 = vsel %vm649, %v1908, %v1913
      %v1915 = vrot.slane %v1888, 1
      %v1916 = vsel %vm649, %v1911, %v1915
      %v1917 = vrot.slane %v1889, 1
      %v1918 = vrot.slane %v1891, 1
      %v1919 = vsel %vm649, %v1917, %v1918
      %v1920 = vrot.slane %v1890, 1
      %v1921 = vrot.slane %v1892, 1
      %v1922 = vsel %vm649, %v1920, %v1921
      %v1923 = vrot.slane %v1893, 1
      %v1924 = vsel %vm649, %v1918, %v1923
      %v1925 = vrot.slane %v1894, 1
      %v1926 = vsel %vm649, %v1921, %v1925
      %v1935 = vld [vmem:[%s3 + $0xe00] sm:$0xff]
      %v1936 = vld [vmem:[%s3 + $0xe08] sm:$0xff]
      %v1937 = vld [vmem:[%s3 + $0xe10] sm:$0xff]
      %v1938 = vld [vmem:[%s3 + $0xe18] sm:$0xff]
      %v1939 = vld [vmem:[%s3 + $0xe20] sm:$0xff]
      %v1940 = vld [vmem:[%s3 + $0xe28] sm:$0xff]
      %v1941 = vld [vmem:[%s3 + $0xe30] sm:$0xff]
      %v1942 = vld [vmem:[%s3 + $0xe38] sm:$0xff]
      %v1943 = vld [vmem:[%s3 + $0xe40] sm:$0xff]
      %v1944 = vld [vmem:[%s3 + $0xe48] sm:$0xff]
      %v1945 = vld [vmem:[%s3 + $0xe50] sm:$0xff]
      %v1946 = vld [vmem:[%s3 + $0xe58] sm:$0xff]
      %v1947 = vld [vmem:[%s3 + $0xe60] sm:$0xff]
      %v1948 = vld [vmem:[%s3 + $0xe68] sm:$0xff]
      %v1949 = vld [vmem:[%s3 + $0xe70] sm:$0xff]
      %v1950 = vld [vmem:[%s3 + $0xe78] sm:$0xff]
      %v1951 = vld [vmem:[%s3 + $0xe80] sm:$0xff]
      %v1952 = vld [vmem:[%s3 + $0xe88] sm:$0xff]
      %v1953 = vld [vmem:[%s3 + $0xe90] sm:$0xff]
      %v1954 = vld [vmem:[%s3 + $0xe98] sm:$0xff]
      %v1955 = vld [vmem:[%s3 + $0xea0] sm:$0xff]
      %v1956 = vld [vmem:[%s3 + $0xea8] sm:$0xff]
      %v1957 = vld [vmem:[%s3 + $0xeb0] sm:$0xff]
      %v1958 = vld [vmem:[%s3 + $0xeb8] sm:$0xff]
      %v1959 = vld [vmem:[%s3 + $0xec0] sm:$0xff]
      %v1960 = vld [vmem:[%s3 + $0xec8] sm:$0xff]
      %v1961 = vld [vmem:[%s3 + $0xed0] sm:$0xff]
      %v1962 = vld [vmem:[%s3 + $0xed8] sm:$0xff]
      %v1963 = vld [vmem:[%s3 + $0xee0] sm:$0xff]
      %v1964 = vld [vmem:[%s3 + $0xee8] sm:$0xff]
      %v1965 = vld [vmem:[%s3 + $0xef0] sm:$0xff]
      %v1966 = vld [vmem:[%s3 + $0xef8] sm:$0xff]
      %v1967 = vld [vmem:[%s3 + $0xf00] sm:$0xff]
      %v1968 = vld [vmem:[%s3 + $0xf08] sm:$0xff]
      %v1969 = vld [vmem:[%s3 + $0xf10] sm:$0xff]
      %v1970 = vld [vmem:[%s3 + $0xf18] sm:$0xff]
      %v1971 = vld [vmem:[%s3 + $0xf20] sm:$0xff]
      %v1972 = vld [vmem:[%s3 + $0xf28] sm:$0xff]
      %v1973 = vld [vmem:[%s3 + $0xf30] sm:$0xff]
      %v1974 = vld [vmem:[%s3 + $0xf38] sm:$0xff]
      %v1975 = vld [vmem:[%s3 + $0xf40] sm:$0xff]
      %v1976 = vld [vmem:[%s3 + $0xf48] sm:$0xff]
      %v1977 = vld [vmem:[%s3 + $0xf50] sm:$0xff]
      %v1978 = vld [vmem:[%s3 + $0xf58] sm:$0xff]
      %v1979 = vld [vmem:[%s3 + $0xf60] sm:$0xff]
      %v1980 = vld [vmem:[%s3 + $0xf68] sm:$0xff]
      %v1981 = vld [vmem:[%s3 + $0xf70] sm:$0xff]
      %v1982 = vld [vmem:[%s3 + $0xf78] sm:$0xff]
      %v1983 = vld [vmem:[%s3 + $0xf80] sm:$0xff]
      %v1984 = vld [vmem:[%s3 + $0xf88] sm:$0xff]
      %v1985 = vld [vmem:[%s3 + $0xf90] sm:$0xff]
      %v1986 = vld [vmem:[%s3 + $0xf98] sm:$0xff]
      %v1987 = vld [vmem:[%s3 + $0xfa0] sm:$0xff]
      %v1988 = vld [vmem:[%s3 + $0xfa8] sm:$0xff]
      %v1989 = vld [vmem:[%s3 + $0xfb0] sm:$0xff]
      %v1990 = vld [vmem:[%s3 + $0xfb8] sm:$0xff]
      %v1991 = vld [vmem:[%s3 + $0xfc0] sm:$0xff]
      %v1992 = vld [vmem:[%s3 + $0xfc8] sm:$0xff]
      %v1993 = vld [vmem:[%s3 + $0xfd0] sm:$0xff]
      %v1994 = vld [vmem:[%s3 + $0xfd8] sm:$0xff]
      %v1995 = vld [vmem:[%s3 + $0xfe0] sm:$0xff]
      %v1996 = vld [vmem:[%s3 + $0xfe8] sm:$0xff]
      %v1997 = vld [vmem:[%s3 + $0xff0] sm:$0xff]
      %v1998 = vld [vmem:[%s3 + $0xff8] sm:$0xff]
      %1999 = vmatprep.subr.mxu0 %v1936
      %2000 = vmatpush1.msra.mxu0 %v1935
      %2001 = vmatprep.subr.mxu0 %v1938
      %2002 = vmatpush1.msra.mxu0 %v1937
      %2003 = vmatprep.subr.mxu0 %v1940
      %2004 = vmatpush1.msra.mxu0 %v1939
      %2005 = vmatprep.subr.mxu0 %v1942
      %2006 = vmatpush1.msra.mxu0 %v1941
      %2007 = vmatprep.subr.mxu0 %v1944
      %2008 = vmatpush1.msra.mxu0 %v1943
      %2009 = vmatprep.subr.mxu0 %v1946
      %2010 = vmatpush1.msra.mxu0 %v1945
      %2011 = vmatprep.subr.mxu0 %v1948
      %2012 = vmatpush1.msra.mxu0 %v1947
      %2013 = vmatprep.subr.mxu0 %v1950
      %2014 = vmatpush1.msra.mxu0 %v1949
      %2015 = vmatprep.subr.mxu0 %v1952
      %2016 = vmatpush1.msra.mxu0 %v1951
      %2017 = vmatprep.subr.mxu0 %v1954
      %2018 = vmatpush1.msra.mxu0 %v1953
      %2019 = vmatprep.subr.mxu0 %v1956
      %2020 = vmatpush1.msra.mxu0 %v1955
      %2021 = vmatprep.subr.mxu0 %v1958
      %2022 = vmatpush1.msra.mxu0 %v1957
      %2023 = vmatprep.subr.mxu0 %v1960
      %2024 = vmatpush1.msra.mxu0 %v1959
      %2025 = vmatprep.subr.mxu0 %v1962
      %2026 = vmatpush1.msra.mxu0 %v1961
      %2027 = vmatprep.subr.mxu0 %v1964
      %2028 = vmatpush1.msra.mxu0 %v1963
      %2029 = vmatprep.subr.mxu0 %v1966
      %2030 = vmatpush1.msra.mxu0 %v1965
      %2031 = vmatprep.subr.mxu0 %v1968
      %2032 = vmatpush1.msra.mxu0 %v1967
      %2033 = vmatprep.subr.mxu0 %v1970
      %2034 = vmatpush1.msra.mxu0 %v1969
      %2035 = vmatprep.subr.mxu0 %v1972
      %2036 = vmatpush1.msra.mxu0 %v1971
      %2037 = vmatprep.subr.mxu0 %v1974
      %2038 = vmatpush1.msra.mxu0 %v1973
      %2039 = vmatprep.subr.mxu0 %v1976
      %2040 = vmatpush1.msra.mxu0 %v1975
      %2041 = vmatprep.subr.mxu0 %v1978
      %2042 = vmatpush1.msra.mxu0 %v1977
      %2043 = vmatprep.subr.mxu0 %v1980
      %2044 = vmatpush1.msra.mxu0 %v1979
      %2045 = vmatprep.subr.mxu0 %v1982
      %2046 = vmatpush1.msra.mxu0 %v1981
      %2047 = vmatprep.subr.mxu0 %v1984
      %2048 = vmatpush1.msra.mxu0 %v1983
      %2049 = vmatprep.subr.mxu0 %v1986
      %2050 = vmatpush1.msra.mxu0 %v1985
      %2051 = vmatprep.subr.mxu0 %v1988
      %2052 = vmatpush1.msra.mxu0 %v1987
      %2053 = vmatprep.subr.mxu0 %v1990
      %2054 = vmatpush1.msra.mxu0 %v1989
      %2055 = vmatprep.subr.mxu0 %v1992
      %2056 = vmatpush1.msra.mxu0 %v1991
      %2057 = vmatprep.subr.mxu0 %v1994
      %2058 = vmatpush1.msra.mxu0 %v1993
      %2059 = vmatprep.subr.mxu0 %v1996
      %2060 = vmatpush1.msra.mxu0 %v1995
      %2061 = vmatprep.subr.mxu0 %v1998
      %2062 = vmatpush1.msra.mxu0 %v1997
      %2063 = vmatprep.mubr.f32.mxu0 %v1912
      %2064 = vmatmul.mubr.f32.gmra.mrb[0].mxu0 %v1909
      %v2065 = vpop.f32.mrb[0].mxu0
      %v2066 = vadd.f32 0.0, %v2065
      %v2067 = vpop.f32.mrb[0].mxu0
      %v2068 = vadd.f32 0.0, %v2067
      %2069 = vmatprep.mubr.f32.mxu0 %v1916
      %2070 = vmatmul.mubr.f32.gmra.mrb[0].mxu0 %v1914
      %v2071 = vpop.f32.mrb[0].mxu0
      %v2072 = vadd.f32 0.0, %v2071
      %v2073 = vpop.f32.mrb[0].mxu0
      %v2074 = vadd.f32 0.0, %v2073
      %2075 = vmatprep.mubr.f32.mxu0 %v1922
      %2076 = vmatmul.mubr.f32.gmra.mrb[0].mxu0 %v1919
      %v2077 = vpop.f32.mrb[0].mxu0
      %v2078 = vadd.f32 0.0, %v2077
      %v2079 = vpop.f32.mrb[0].mxu0
      %v2080 = vadd.f32 0.0, %v2079
      %2081 = vmatprep.mubr.f32.mxu0 %v1926
      %2082 = vmatmul.mubr.f32.gmra.mrb[0].mxu0 %v1924
      %v2083 = vpop.f32.mrb[0].mxu0
      %v2084 = vadd.f32 0.0, %v2083
      %v2085 = vpop.f32.mrb[0].mxu0
      %v2086 = vadd.f32 0.0, %v2085
      %2087 = vdwg.mxu0
      %v2088 = vadd.f32 %v1875, %v2066
      %v2089 = vadd.f32 %v1876, %v2068
      %v2090 = vadd.f32 %v1877, %v2072
      %v2091 = vadd.f32 %v1878, %v2074
      %v2092 = vadd.f32 %v1879, %v2078
      %v2093 = vadd.f32 %v1880, %v2080
      %v2094 = vadd.f32 %v1881, %v2084
      %v2095 = vadd.f32 %v1882, %v2086
      %v2096 = vld [vmem:[%s1713] sm:$0xfc]
      %v2097 = vld [vmem:[%s1713 + $0x8] sm:$0xfc]
      %v2098 = vld [vmem:[%s1713 + $0x20] sm:$0x3]
      %v2099 = vld [vmem:[%s1713 + $0x28] sm:$0x3]
      %v2100 = vld [vmem:[%s1713 + $0x30] sm:$0xfc]
      %v2101 = vld [vmem:[%s1713 + $0x38] sm:$0xfc]
      %v2102 = vld [vmem:[%s1713 + $0x50] sm:$0x3]
      %v2103 = vld [vmem:[%s1713 + $0x58] sm:$0x3]
      %v2112 = vrot.slane %v2096, 2
      %v2113 = vrot.slane %v1885, 2
      %v2114 = vsel %vm936, %v2112, %v2113
      %v2115 = vrot.slane %v2097, 2
      %v2116 = vrot.slane %v1886, 2
      %v2117 = vsel %vm936, %v2115, %v2116
      %v2118 = vrot.slane %v2098, 2
      %v2119 = vsel %vm936, %v2113, %v2118
      %v2120 = vrot.slane %v2099, 2
      %v2121 = vsel %vm936, %v2116, %v2120
      %v2122 = vrot.slane %v2100, 2
      %v2123 = vrot.slane %v1891, 2
      %v2124 = vsel %vm936, %v2122, %v2123
      %v2125 = vrot.slane %v2101, 2
      %v2126 = vrot.slane %v1892, 2
      %v2127 = vsel %vm936, %v2125, %v2126
      %v2128 = vrot.slane %v2102, 2
      %v2129 = vsel %vm936, %v2123, %v2128
      %v2130 = vrot.slane %v2103, 2
      %v2131 = vsel %vm936, %v2126, %v2130
      %v2140 = vld [vmem:[%s3 + $0x1000] sm:$0xff]
      %v2141 = vld [vmem:[%s3 + $0x1008] sm:$0xff]
      %v2142 = vld [vmem:[%s3 + $0x1010] sm:$0xff]
      %v2143 = vld [vmem:[%s3 + $0x1018] sm:$0xff]
      %v2144 = vld [vmem:[%s3 + $0x1020] sm:$0xff]
      %v2145 = vld [vmem:[%s3 + $0x1028] sm:$0xff]
      %v2146 = vld [vmem:[%s3 + $0x1030] sm:$0xff]
      %v2147 = vld [vmem:[%s3 + $0x1038] sm:$0xff]
      %v2148 = vld [vmem:[%s3 + $0x1040] sm:$0xff]
      %v2149 = vld [vmem:[%s3 + $0x1048] sm:$0xff]
      %v2150 = vld [vmem:[%s3 + $0x1050] sm:$0xff]
      %v2151 = vld [vmem:[%s3 + $0x1058] sm:$0xff]
      %v2152 = vld [vmem:[%s3 + $0x1060] sm:$0xff]
      %v2153 = vld [vmem:[%s3 + $0x1068] sm:$0xff]
      %v2154 = vld [vmem:[%s3 + $0x1070] sm:$0xff]
      %v2155 = vld [vmem:[%s3 + $0x1078] sm:$0xff]
      %v2156 = vld [vmem:[%s3 + $0x1080] sm:$0xff]
      %v2157 = vld [vmem:[%s3 + $0x1088] sm:$0xff]
      %v2158 = vld [vmem:[%s3 + $0x1090] sm:$0xff]
      %v2159 = vld [vmem:[%s3 + $0x1098] sm:$0xff]
      %v2160 = vld [vmem:[%s3 + $0x10a0] sm:$0xff]
      %v2161 = vld [vmem:[%s3 + $0x10a8] sm:$0xff]
      %v2162 = vld [vmem:[%s3 + $0x10b0] sm:$0xff]
      %v2163 = vld [vmem:[%s3 + $0x10b8] sm:$0xff]
      %v2164 = vld [vmem:[%s3 + $0x10c0] sm:$0xff]
      %v2165 = vld [vmem:[%s3 + $0x10c8] sm:$0xff]
      %v2166 = vld [vmem:[%s3 + $0x10d0] sm:$0xff]
      %v2167 = vld [vmem:[%s3 + $0x10d8] sm:$0xff]
      %v2168 = vld [vmem:[%s3 + $0x10e0] sm:$0xff]
      %v2169 = vld [vmem:[%s3 + $0x10e8] sm:$0xff]
      %v2170 = vld [vmem:[%s3 + $0x10f0] sm:$0xff]
      %v2171 = vld [vmem:[%s3 + $0x10f8] sm:$0xff]
      %v2172 = vld [vmem:[%s3 + $0x1100] sm:$0xff]
      %v2173 = vld [vmem:[%s3 + $0x1108] sm:$0xff]
      %v2174 = vld [vmem:[%s3 + $0x1110] sm:$0xff]
      %v2175 = vld [vmem:[%s3 + $0x1118] sm:$0xff]
      %v2176 = vld [vmem:[%s3 + $0x1120] sm:$0xff]
      %v2177 = vld [vmem:[%s3 + $0x1128] sm:$0xff]
      %v2178 = vld [vmem:[%s3 + $0x1130] sm:$0xff]
      %v2179 = vld [vmem:[%s3 + $0x1138] sm:$0xff]
      %v2180 = vld [vmem:[%s3 + $0x1140] sm:$0xff]
      %v2181 = vld [vmem:[%s3 + $0x1148] sm:$0xff]
      %v2182 = vld [vmem:[%s3 + $0x1150] sm:$0xff]
      %v2183 = vld [vmem:[%s3 + $0x1158] sm:$0xff]
      %v2184 = vld [vmem:[%s3 + $0x1160] sm:$0xff]
      %v2185 = vld [vmem:[%s3 + $0x1168] sm:$0xff]
      %v2186 = vld [vmem:[%s3 + $0x1170] sm:$0xff]
      %v2187 = vld [vmem:[%s3 + $0x1178] sm:$0xff]
      %v2188 = vld [vmem:[%s3 + $0x1180] sm:$0xff]
      %v2189 = vld [vmem:[%s3 + $0x1188] sm:$0xff]
      %v2190 = vld [vmem:[%s3 + $0x1190] sm:$0xff]
      %v2191 = vld [vmem:[%s3 + $0x1198] sm:$0xff]
      %v2192 = vld [vmem:[%s3 + $0x11a0] sm:$0xff]
      %v2193 = vld [vmem:[%s3 + $0x11a8] sm:$0xff]
      %v2194 = vld [vmem:[%s3 + $0x11b0] sm:$0xff]
      %v2195 = vld [vmem:[%s3 + $0x11b8] sm:$0xff]
      %v2196 = vld [vmem:[%s3 + $0x11c0] sm:$0xff]
      %v2197 = vld [vmem:[%s3 + $0x11c8] sm:$0xff]
      %v2198 = vld [vmem:[%s3 + $0x11d0] sm:$0xff]
      %v2199 = vld [vmem:[%s3 + $0x11d8] sm:$0xff]
      %v2200 = vld [vmem:[%s3 + $0x11e0] sm:$0xff]
      %v2201 = vld [vmem:[%s3 + $0x11e8] sm:$0xff]
      %v2202 = vld [vmem:[%s3 + $0x11f0] sm:$0xff]
      %v2203 = vld [vmem:[%s3 + $0x11f8] sm:$0xff]
      %2204 = vmatprep.subr.mxu0 %v2141
      %2205 = vmatpush1.msra.mxu0 %v2140
      %2206 = vmatprep.subr.mxu0 %v2143
      %2207 = vmatpush1.msra.mxu0 %v2142
      %2208 = vmatprep.subr.mxu0 %v2145
      %2209 = vmatpush1.msra.mxu0 %v2144
      %2210 = vmatprep.subr.mxu0 %v2147
      %2211 = vmatpush1.msra.mxu0 %v2146
      %2212 = vmatprep.subr.mxu0 %v2149
      %2213 = vmatpush1.msra.mxu0 %v2148
      %2214 = vmatprep.subr.mxu0 %v2151
      %2215 = vmatpush1.msra.mxu0 %v2150
      %2216 = vmatprep.subr.mxu0 %v2153
      %2217 = vmatpush1.msra.mxu0 %v2152
      %2218 = vmatprep.subr.mxu0 %v2155
      %2219 = vmatpush1.msra.mxu0 %v2154
      %2220 = vmatprep.subr.mxu0 %v2157
      %2221 = vmatpush1.msra.mxu0 %v2156
      %2222 = vmatprep.subr.mxu0 %v2159
      %2223 = vmatpush1.msra.mxu0 %v2158
      %2224 = vmatprep.subr.mxu0 %v2161
      %2225 = vmatpush1.msra.mxu0 %v2160
      %2226 = vmatprep.subr.mxu0 %v2163
      %2227 = vmatpush1.msra.mxu0 %v2162
      %2228 = vmatprep.subr.mxu0 %v2165
      %2229 = vmatpush1.msra.mxu0 %v2164
      %2230 = vmatprep.subr.mxu0 %v2167
      %2231 = vmatpush1.msra.mxu0 %v2166
      %2232 = vmatprep.subr.mxu0 %v2169
      %2233 = vmatpush1.msra.mxu0 %v2168
      %2234 = vmatprep.subr.mxu0 %v2171
      %2235 = vmatpush1.msra.mxu0 %v2170
      %2236 = vmatprep.subr.mxu0 %v2173
      %2237 = vmatpush1.msra.mxu0 %v2172
      %2238 = vmatprep.subr.mxu0 %v2175
      %2239 = vmatpush1.msra.mxu0 %v2174
      %2240 = vmatprep.subr.mxu0 %v2177
      %2241 = vmatpush1.msra.mxu0 %v2176
      %2242 = vmatprep.subr.mxu0 %v2179
      %2243 = vmatpush1.msra.mxu0 %v2178
      %2244 = vmatprep.subr.mxu0 %v2181
      %2245 = vmatpush1.msra.mxu0 %v2180
      %2246 = vmatprep.subr.mxu0 %v2183
      %2247 = vmatpush1.msra.mxu0 %v2182
      %2248 = vmatprep.subr.mxu0 %v2185
      %2249 = vmatpush1.msra.mxu0 %v2184
      %2250 = vmatprep.subr.mxu0 %v2187
      %2251 = vmatpush1.msra.mxu0 %v2186
      %2252 = vmatprep.subr.mxu0 %v2189
      %2253 = vmatpush1.msra.mxu0 %v2188
      %2254 = vmatprep.subr.mxu0 %v2191
      %2255 = vmatpush1.msra.mxu0 %v2190
      %2256 = vmatprep.subr.mxu0 %v2193
      %2257 = vmatpush1.msra.mxu0 %v2192
      %2258 = vmatprep.subr.mxu0 %v2195
      %2259 = vmatpush1.msra.mxu0 %v2194
      %2260 = vmatprep.subr.mxu0 %v2197
      %2261 = vmatpush1.msra.mxu0 %v2196
      %2262 = vmatprep.subr.mxu0 %v2199
      %2263 = vmatpush1.msra.mxu0 %v2198
      %2264 = vmatprep.subr.mxu0 %v2201
      %2265 = vmatpush1.msra.mxu0 %v2200
      %2266 = vmatprep.subr.mxu0 %v2203
      %2267 = vmatpush1.msra.mxu0 %v2202
      %2268 = vmatprep.mubr.f32.mxu0 %v2117
      %2269 = vmatmul.mubr.f32.gmra.mrb[0].mxu0 %v2114
      %v2270 = vpop.f32.mrb[0].mxu0
      %v2271 = vadd.f32 0.0, %v2270
      %v2272 = vpop.f32.mrb[0].mxu0
      %v2273 = vadd.f32 0.0, %v2272
      %2274 = vmatprep.mubr.f32.mxu0 %v2121
      %2275 = vmatmul.mubr.f32.gmra.mrb[0].mxu0 %v2119
      %v2276 = vpop.f32.mrb[0].mxu0
      %v2277 = vadd.f32 0.0, %v2276
      %v2278 = vpop.f32.mrb[0].mxu0
      %v2279 = vadd.f32 0.0, %v2278
      %2280 = vmatprep.mubr.f32.mxu0 %v2127
      %2281 = vmatmul.mubr.f32.gmra.mrb[0].mxu0 %v2124
      %v2282 = vpop.f32.mrb[0].mxu0
      %v2283 = vadd.f32 0.0, %v2282
      %v2284 = vpop.f32.mrb[0].mxu0
      %v2285 = vadd.f32 0.0, %v2284
      %2286 = vmatprep.mubr.f32.mxu0 %v2131
      %2287 = vmatmul.mubr.f32.gmra.mrb[0].mxu0 %v2129
      %v2288 = vpop.f32.mrb[0].mxu0
      %v2289 = vadd.f32 0.0, %v2288
      %v2290 = vpop.f32.mrb[0].mxu0
      %v2291 = vadd.f32 0.0, %v2290
      %2292 = vdwg.mxu0
      %v2293 = vadd.f32 %v2088, %v2271
      %v2294 = vadd.f32 %v2089, %v2273
      %v2295 = vadd.f32 %v2090, %v2277
      %v2296 = vadd.f32 %v2091, %v2279
      %v2297 = vadd.f32 %v2092, %v2283
      %v2298 = vadd.f32 %v2093, %v2285
      %v2299 = vadd.f32 %v2094, %v2289
      %v2300 = vadd.f32 %v2095, %v2291
      %2301 = vst [vmem:[%s405] sm:$0xff] %v2293
      %2302 = vst [vmem:[%s405 + $0x8] sm:$0xff] %v2294
      %2303 = vst [vmem:[%s405 + $0x10] sm:$0xff] %v2295
      %2304 = vst [vmem:[%s405 + $0x18] sm:$0xff] %v2296
      %2305 = vst [vmem:[%s405 + $0x20] sm:$0xff] %v2297
      %2306 = vst [vmem:[%s405 + $0x28] sm:$0xff] %v2298
      %2307 = vst [vmem:[%s405 + $0x30] sm:$0xff] %v2299
      %2308 = vst [vmem:[%s405 + $0x38] sm:$0xff] %v2300
      %v2309 = vadd.f32 %v2293, %v2295
      %v2310 = vadd.f32 %v2309, %v2297
      %v2311 = vadd.f32 %v2310, %v2299
      %v2312 = vrot.slane %v2311, 4
      %v2313 = vadd.f32 %v2311, %v2312
      %v2314 = vrot.slane %v2313, 2
      %v2315 = vadd.f32 %v2313, %v2314
      %v2316 = vrot.slane %v2315, 1
      %v2317 = vadd.f32 %v2315, %v2316
      %v2318 = vadd.f32 %v2294, %v2296
      %v2319 = vadd.f32 %v2318, %v2298
      %v2320 = vadd.f32 %v2319, %v2300
      %v2321 = vrot.slane %v2320, 4
      %v2322 = vadd.f32 %v2320, %v2321
      %v2323 = vrot.slane %v2322, 2
      %v2324 = vadd.f32 %v2322, %v2323
      %v2325 = vrot.slane %v2324, 1
      %v2326 = vadd.f32 %v2324, %v2325
      %v2327 = vrcp.pop 32.0
      %v2328 = vmul.f32 %v2317, %v2327
      %v2329 = vmul.f32 %v2326, %v2327
      %v2330 = vsub.f32 %v2293, %v2328
      %v2331 = vsub.f32 %v2294, %v2329
      %v2332 = vsub.f32 %v2295, %v2328
      %v2333 = vsub.f32 %v2296, %v2329
      %v2334 = vsub.f32 %v2297, %v2328
      %v2335 = vsub.f32 %v2298, %v2329
      %v2336 = vsub.f32 %v2299, %v2328
      %v2337 = vsub.f32 %v2300, %v2329
      %v2338 = vmul.f32 %v2330, %v2330
      %v2339 = vmul.f32 %v2331, %v2331
      %v2340 = vmul.f32 %v2332, %v2332
      %v2341 = vmul.f32 %v2333, %v2333
      %v2342 = vmul.f32 %v2334, %v2334
      %v2343 = vmul.f32 %v2335, %v2335
      %v2344 = vmul.f32 %v2336, %v2336
      %v2345 = vmul.f32 %v2337, %v2337
      %v2346 = vadd.f32 %v2338, %v2340
      %v2347 = vadd.f32 %v2346, %v2342
      %v2348 = vadd.f32 %v2347, %v2344
      %v2349 = vrot.slane %v2348, 4
      %v2350 = vadd.f32 %v2348, %v2349
      %v2351 = vrot.slane %v2350, 2
      %v2352 = vadd.f32 %v2350, %v2351
      %v2353 = vrot.slane %v2352, 1
      %v2354 = vadd.f32 %v2352, %v2353
      %v2355 = vadd.f32 %v2339, %v2341
      %v2356 = vadd.f32 %v2355, %v2343
      %v2357 = vadd.f32 %v2356, %v2345
      %v2358 = vrot.slane %v2357, 4
      %v2359 = vadd.f32 %v2357, %v2358
      %v2360 = vrot.slane %v2359, 2
      %v2361 = vadd.f32 %v2359, %v2360
      %v2362 = vrot.slane %v2361, 1
      %v2363 = vadd.f32 %v2361, %v2362
      %v2364 = vsel %vm457, %v2328, %v2354
      %v2365 = vsel %vm457, %v2329, %v2363
      %vm2366 = vcmask 1041408
      %v2367 = vsel %vm2366, %v2364, 0.0
      %v2368 = vsel %vm2366, %v2365, 0.0
      %2369 = vst [vmem:[%s415] sm:$0xff] %v2367
      %2370 = vst [vmem:[%s415 + $0x8] sm:$0xff] %v2368
      %s2371 = smul.u32 2, %s22
      %p2372 = scmp.lt.s32.totalorder %s21, 1
      %s2373 = scalar_select %p2372, %s21, 1
      %p2374 = scmp.lt.s32.totalorder %s2371, 3
      %s2375 = scalar_select %p2374, %s2371, 3
      %s2376 = smul.addr %s2375, 4
      %s2377 = smul.addr %s2373, 16
      %s2378 = sadd.s32 %s2376, %s2377
      %s2379 = smul.addr %s2378, 8
      %s2380 = scalar_lea.vmem %s4, %s2379
      %p2381 = scmp.lt.s32.totalorder %s21, 1
      %s2382 = scalar_select %p2381, %s21, 1
      %p2383 = scmp.lt.s32.totalorder %s22, 1
      %s2384 = scalar_select %p2383, %s22, 1
      %s2385 = smul.addr %s2384, 2
      %s2386 = smul.addr %s2382, 4
      %s2387 = sadd.s32 %s2385, %s2386
      %s2388 = smul.addr %s2387, 8
      %s2389 = scalar_lea.vmem %s5, %s2388
      // Predicated region
      $region45: #{block3d_forward.4} parent=35 // pred_check
        %p2390 = pneg %p170
      $region46: #{block3d_forward.4} parent=35 // pred_check_branch
        %2392 = sbr.rel (%p2390) target = $region48
      $region47: #{block3d_forward.4} parent=35 // pred_region
        %s2393 = smul.u32 2, %s22
      $region48: #{block3d_forward.4} parent=35 // pred_fallthru
        _
      // Predicated region
      $region49: #{block3d_forward.4} parent=35 // pred_check
        %p2394 = pneg %p198
      $region50: #{block3d_forward.4} parent=35 // pred_check_branch
        %2396 = sbr.rel (%p2394) target = $region52
      $region51: #{block3d_forward.4} parent=35 // pred_region
        _
      $region52: #{block3d_forward.4} parent=35 // pred_fallthru
        _
    $region36: #{block3d_forward.4} parent=5 // pred_fallthru
      _
    %p2397 = scmp.le.s32.totalorder 2, %s12
    // Predicated region
    $region53: #{block3d_forward.4} parent=5 // pred_check
      %p2398 = pneg %p2397
    $region54: #{block3d_forward.4} parent=5 // pred_check_branch
      %2400 = sbr.rel (%p2398) target = $region56
    $region55: #{block3d_forward.4} parent=5 // pred_region
      %s2401 = ssub.s32 %s12, 2
      // Predicated region
      $region57: #{block3d_forward.4} parent=55 // pred_check
        %p2402 = pneg %p176
      $region58: #{block3d_forward.4} parent=55 // pred_check_branch
        %2404 = sbr.rel (%p2402) target = $region60
      $region59: #{block3d_forward.4} parent=55 // pred_region
        %s2405 = smul.u32 2, %s24
        %p2406 = scmp.lt.s32.totalorder %s23, 1
        %s2407 = scalar_select %p2406, %s23, 1
        %p2408 = scmp.lt.s32.totalorder %s2405, 3
        %s2409 = scalar_select %p2408, %s2405, 3
        %s2410 = smul.addr %s2409, 4
        %s2411 = smul.addr %s2407, 16
        %s2412 = sadd.s32 %s2410, %s2411
        %s2413 = smul.addr %s2412, 8
        %s2414 = scalar_lea.vmem %s4, %s2413
      $region60: #{block3d_forward.4} parent=55 // pred_fallthru
        _
      // Predicated region
      $region61: #{block3d_forward.4} parent=55 // pred_check
        %p2415 = pneg %p204
      $region62: #{block3d_forward.4} parent=55 // pred_check_branch
        %2417 = sbr.rel (%p2415) target = $region64
      $region63: #{block3d_forward.4} parent=55 // pred_region
        %p2418 = scmp.lt.s32.totalorder %s23, 1
        %s2419 = scalar_select %p2418, %s23, 1
        %p2420 = scmp.lt.s32.totalorder %s24, 1
        %s2421 = scalar_select %p2420, %s24, 1
        %s2422 = smul.addr %s2421, 2
        %s2423 = smul.addr %s2419, 4
        %s2424 = sadd.s32 %s2422, %s2423
        %s2425 = smul.addr %s2424, 8
        %s2426 = scalar_lea.vmem %s5, %s2425
      $region64: #{block3d_forward.4} parent=55 // pred_fallthru
        _
    $region56: #{block3d_forward.4} parent=5 // pred_fallthru
      _
  $region6: #{block3d_forward.4} parent=0 // loop_footer
    %s16 = sadd.s32 1, %s12
  $region7: #{block3d_forward.4} parent=0 // loop_footer_branch
    %11 = sbr.rel target = $region3
  $region8: #{block3d_forward.4} parent=0 // loop_exit
    _

</llo_original>
